<compile_context>
chip_gen: v7x
topology: tpu7x:2x2x1
jax: 0.10.0
libtpu: 0.0.40
codegen_flags: <defaults>
</compile_context>

<pallas_src>
import functools

import numpy as np
import jax
import jax.numpy as jnp
from jax import lax
from jax.experimental import pallas as pl
from jax.experimental.pallas import tpu as pltpu

LEAKY_SLOPE = 0.1
BN_EPS = 1e-5


# ----------------------------- Pallas kernel --------------------------------

def _make_fused_conv_kernel(s, Hs, Ws, HP, WP, Cin, Cout, has_residual):
    """Builds: o = conv3x3(LeakyReLU(x * scale + shift), w)[stride=s] (+ residual).

    Refs per grid step (= one batch element):
      x_ref    : (s*s, Hs, Ws, Cin)  space-to-depth phases of the unpadded input
      scale_ref: (1, Cin)            folded BatchNorm scale
      shift_ref: (1, Cin)            folded BatchNorm shift
      w_ref    : (9, Cin, Cout)      conv taps, tap index t = dy*3 + dx
      res_ref  : (Ho, Wo, Cout)      optional fused shortcut (only if has_residual)
      o_ref    : (Ho, Wo, Cout)
      pad_ref  : (s*s, HP, WP, Cin)  VMEM scratch: zero-padded phase buffers
    """
    Ho, Wo = Hs, Ws  # pad=1, k=3, H % s == 0  =>  output dims == phase dims

    # Where each input phase lands inside its padded phase buffer:
    # padded-phase (p, q) holds input-phase ((p-1) % s, (q-1) % s) at offset
    # (1 if p == 0 else 0, 1 if q == 0 else 0); the rest stays zero (= padding).
    phase_writes = []
    for p in range(s):
        for q in range(s):
            src = ((p - 1) % s) * s + ((q - 1) % s)
            phase_writes.append(
                (p * s + q, src, 1 if p == 0 else 0, 1 if q == 0 else 0))

    # Which (padded phase, static offset) window each of the 9 taps reads:
    # out[i, j] += P[s*i + dy, s*j + dx] @ w[dy, dx]
    #            = P_phase[dy % s, dx % s][i + dy//s, j + dx//s] @ w[dy, dx].
    taps = []
    for dy in range(3):
        for dx in range(3):
            taps.append((dy * 3 + dx, (dy % s) * s + (dx % s), dy // s, dx // s))

    def kernel(*refs):
        if has_residual:
            x_ref, scale_ref, shift_ref, w_ref, res_ref, o_ref, pad_ref = refs
        else:
            x_ref, scale_ref, shift_ref, w_ref, o_ref, pad_ref = refs
            res_ref = None

        # Scratch persists across grid steps -> re-zero every step.
        pad_ref[...] = jnp.zeros(pad_ref.shape, pad_ref.dtype)

        scale = scale_ref[...]          # (1, Cin) broadcasts over (Hs, Ws, Cin)
        shift = shift_ref[...]

        # Fused BN(affine) + LeakyReLU prologue, written into padded phase buffers.
        for dst, src, oh, ow in phase_writes:
            a = x_ref[src]                                   # (Hs, Ws, Cin)
            a = a * scale + shift                            # folded BatchNorm
            a = jnp.where(a >= 0, a, LEAKY_SLOPE * a)        # LeakyReLU(0.1)
            pad_ref[dst, oh:oh + Hs, ow:ow + Ws, :] = a

        # conv3x3 as 9 shifted (Ho*Wo, Cin) @ (Cin, Cout) MXU dots accumulated
        # in f32 -- no im2col materialization in HBM.
        acc = jnp.zeros((Ho * Wo, Cout), jnp.float32)
        for t, ph, oh, ow in taps:
            patch = pad_ref[ph, oh:oh + Ho, ow:ow + Wo, :]   # (Ho, Wo, Cin)
            acc = acc + jnp.dot(patch.reshape(Ho * Wo, Cin), w_ref[t],
                                preferred_element_type=jnp.float32)

        if has_residual:
            acc = acc + res_ref[...].reshape(Ho * Wo, Cout)  # fused shortcut add

        o_ref[...] = acc.reshape(Ho, Wo, Cout)

    return kernel


# ------------------------------ Pallas wrapper -------------------------------

def fused_bn_lrelu_conv3x3(x_nhwc, scale, shift, w_hwio, stride, residual=None):
    """LeakyReLU(BN(x)) -> 3x3 conv (pad=1, given stride) [+ residual], one kernel."""
    N, H, W, Cin = x_nhwc.shape
    Cout = w_hwio.shape[-1]
    s = int(stride)
    assert H % s == 0 and W % s == 0, "spatial dims must be divisible by stride"
    Hs, Ws = H // s, W // s                 # phase (= output) spatial dims
    Ho, Wo = Hs, Ws
    HP = -(-(H + 2) // s)                   # padded phase-buffer extents
    WP = -(-(W + 2) // s)

    # Space-to-depth phase split (plain reshape/transpose, 1x HBM traffic;
    # identity when stride == 1).  Flattened so the kernel sees rank-4 refs.
    x_ph = (x_nhwc.astype(jnp.float32)
            .reshape(N, Hs, s, Ws, s, Cin)
            .transpose(0, 2, 4, 1, 3, 5)
            .reshape(N * s * s, Hs, Ws, Cin))
    w9 = w_hwio.reshape(9, Cin, Cout).astype(jnp.float32)
    scale2d = scale.reshape(1, Cin).astype(jnp.float32)
    shift2d = shift.reshape(1, Cin).astype(jnp.float32)

    has_res = residual is not None
    kernel = _make_fused_conv_kernel(s, Hs, Ws, HP, WP, Cin, Cout, has_res)

    in_specs = [
        pl.BlockSpec((s * s, Hs, Ws, Cin), lambda n: (n, 0, 0, 0)),
        pl.BlockSpec((1, Cin), lambda n: (0, 0)),
        pl.BlockSpec((1, Cin), lambda n: (0, 0)),
        pl.BlockSpec((9, Cin, Cout), lambda n: (0, 0, 0)),
    ]
    args = [x_ph, scale2d, shift2d, w9]
    res3 = None
    if has_res:
        res3 = residual.reshape(N * Ho, Wo, Cout).astype(jnp.float32)
        in_specs.append(pl.BlockSpec((Ho, Wo, Cout), lambda n: (n, 0, 0)))
        args.append(res3)

    flops = 2 * N * Ho * Wo * 9 * Cin * Cout
    bytes_accessed = 4 * (x_ph.size + w9.size + scale2d.size + shift2d.size
                          + N * Ho * Wo * Cout
                          + (res3.size if has_res else 0))

    out3 = pl.pallas_call(
        kernel,
        out_shape=jax.ShapeDtypeStruct((N * Ho, Wo, Cout), jnp.float32),
        grid_spec=pltpu.PrefetchScalarGridSpec(
            num_scalar_prefetch=0,
            grid=(N,),                       # one whole image per step; >=2 steps
            in_specs=in_specs,
            out_specs=pl.BlockSpec((Ho, Wo, Cout), lambda n: (n, 0, 0)),
            scratch_shapes=[pltpu.VMEM((s * s, HP, WP, Cin), jnp.float32)],
        ),
        compiler_params=pltpu.CompilerParams(
            dimension_semantics=("parallel",),
            vmem_limit_bytes=32 * 1024 * 1024,
        ),
        cost_estimate=pl.CostEstimate(
            flops=flops, transcendentals=0, bytes_accessed=bytes_accessed),
    )(*args)
    return out3.reshape(N, Ho, Wo, Cout)


# ------------------------------- JAX glue ------------------------------------

def _bn_fold(v_nhwc, gamma, beta):
    """Training-mode BatchNorm (batch statistics, biased variance) -> scale/shift."""
    mean = jnp.mean(v_nhwc, axis=(0, 1, 2))
    var = jnp.mean((v_nhwc - mean) ** 2, axis=(0, 1, 2))
    scale = gamma / jnp.sqrt(var + BN_EPS)
    shift = beta - mean * scale
    return scale, shift


def w_residual_forward(x_nchw, params, in_planes, out_planes, stride,
                       activate_before_residual=False):
    # NOTE: in the PyTorch module `identity = x` in both branches, so
    # activate_before_residual does not change the computed output.
    del activate_before_residual
    x = jnp.transpose(x_nchw, (0, 2, 3, 1)).astype(jnp.float32)   # NCHW -> NHWC
    N, H, W, _ = x.shape
    identity = x

    # bn1 + lrelu + conv1(stride), fused in one Pallas kernel.
    scale1, shift1 = _bn_fold(x, params["gamma1"], params["beta1"])
    y1 = fused_bn_lrelu_conv3x3(x, scale1, shift1, params["w1"], stride)

    # bn2 folded from batch statistics of y1 (training-mode BatchNorm).
    scale2, shift2 = _bn_fold(y1, params["gamma2"], params["beta2"])

    # Shortcut branch (cheap plain-JAX glue).
    if in_planes != out_planes:
        assert (out_planes - in_planes) % 2 == 0, "channel pad must be symmetric"
        assert H % stride == 0 and W % stride == 0
        ident = identity.reshape(N, H // stride, stride, W // stride, stride,
                                 in_planes).mean(axis=(2, 4))      # AvgPool2d(stride)
        pc = (out_planes - in_planes) // 2
        ident = jnp.pad(ident, ((0, 0), (0, 0), (0, 0), (pc, pc)))  # channel pad
    else:
        # The PyTorch module adds the *unpooled* identity when in == out,
        # which only shape-checks when stride == 1.
        assert stride == 1, "in_planes == out_planes requires stride == 1"
        ident = identity

    # bn2 + lrelu + conv2(stride=1) + residual add, fused in one Pallas kernel.
    out = fused_bn_lrelu_conv3x3(y1, scale2, shift2, params["w2"], 1,
                                 residual=ident)
    return jnp.transpose(out, (0, 3, 1, 2))                        # NHWC -> NCHW


# ----------------------------- pure-JAX reference ----------------------------

def reference_forward(x_nchw, params, in_planes, out_planes, stride):
    x = x_nchw.astype(jnp.float32)

    def bn(v, gamma, beta):
        mean = jnp.mean(v, axis=(0, 2, 3), keepdims=True)
        var = jnp.mean((v - mean) ** 2, axis=(0, 2, 3), keepdims=True)
        return (v - mean) / jnp.sqrt(var + BN_EPS) * gamma.reshape(1, -1, 1, 1) \
            + beta.reshape(1, -1, 1, 1)

    def lrelu(v):
        return jnp.where(v >= 0, v, LEAKY_SLOPE * v)

    def conv(v, w_hwio, s):
        w_oihw = jnp.transpose(w_hwio, (3, 2, 0, 1))
        return lax.conv_general_dilated(
            v, w_oihw, window_strides=(s, s), padding=((1, 1), (1, 1)),
            dimension_numbers=("NCHW", "OIHW", "NCHW"))

    identity = x
    out = lrelu(bn(x, params["gamma1"], params["beta1"]))
    out = conv(out, params["w1"], stride)
    out = lrelu(bn(out, params["gamma2"], params["beta2"]))
    out = conv(out, params["w2"], 1)
    if in_planes != out_planes:
        identity = lax.reduce_window(
            identity, 0.0, lax.add,
            (1, 1, stride, stride), (1, 1, stride, stride), "VALID") / float(stride * stride)
        p = (out_planes - in_planes) // 2
        identity = jnp.pad(identity, ((0, 0), (p, p), (0, 0), (0, 0)))
    return out + identity


# ---------------------------------- main -------------------------------------

if __name__ == "__main__":
    key = jax.random.PRNGKey(0)
    # (in_planes, out_planes, stride): exercise both the projection shortcut
    # (avg_pool + channel pad, strided conv1) and the identity shortcut.
    configs = [(4, 8, 2), (8, 8, 1)]
    top_keys = jax.random.split(key, len(configs))

    for cfg_idx, (cin, cout, stride) in enumerate(configs):
        N, H, W = 2, 16, 16
        k = jax.random.split(top_keys[cfg_idx], 7)
        params = {
            "w1": 0.1 * jax.random.normal(k[0], (3, 3, cin, cout), jnp.float32),   # HWIO
            "w2": 0.1 * jax.random.normal(k[1], (3, 3, cout, cout), jnp.float32),  # HWIO
            "gamma1": 1.0 + 0.1 * jax.random.normal(k[2], (cin,), jnp.float32),
            "beta1": 0.1 * jax.random.normal(k[3], (cin,), jnp.float32),
            "gamma2": 1.0 + 0.1 * jax.random.normal(k[4], (cout,), jnp.float32),
            "beta2": 0.1 * jax.random.normal(k[5], (cout,), jnp.float32),
        }
        x = jax.random.normal(k[6], (N, cin, H, W), jnp.float32)   # NCHW like PyTorch

        fwd = jax.jit(functools.partial(
            w_residual_forward, in_planes=cin, out_planes=cout, stride=stride))
        out = jax.block_until_ready(fwd(x, params))

        ref = reference_forward(x, params, cin, cout, stride)
        np.testing.assert_allclose(np.asarray(out), np.asarray(ref),
                                   rtol=1e-4, atol=1e-4)

    print("KERNEL_OK")
</pallas_src>

<mosaic_0001>
module attributes {stable_mosaic.version = 11 : i64} {
  func.func @kernel(%arg0: i32, %arg1: memref<4x8x8x4xf32, #tpu.memory_space<vmem>>, %arg2: memref<1x4xf32, #tpu.memory_space<vmem>>, %arg3: memref<1x4xf32, #tpu.memory_space<vmem>>, %arg4: memref<9x4x8xf32, #tpu.memory_space<vmem>>, %arg5: memref<8x8x8xf32, #tpu.memory_space<vmem>>, %arg6: memref<4x9x9x4xf32, #tpu.memory_space<vmem>>) attributes {dimension_semantics = [#tpu.dimension_semantics<parallel>], iteration_bounds = array<i64: 2>, scalar_prefetch = 0 : i64, scratch_operands = 1 : i64, tpu.core_type = #tpu.core_type<tc>, window_params = [{transform_indices = @transform_0, window_bounds = array<i64: 4, 8, 8, 4>}, {pipeline_mode = #tpu.pipeline_mode<synchronous>, transform_indices = @transform_1, window_bounds = array<i64: 1, 4>}, {pipeline_mode = #tpu.pipeline_mode<synchronous>, transform_indices = @transform_2, window_bounds = array<i64: 1, 4>}, {pipeline_mode = #tpu.pipeline_mode<synchronous>, transform_indices = @transform_3, window_bounds = array<i64: 9, 4, 8>}, {transform_indices = @transform_4, window_bounds = array<i64: 8, 8, 8>}]} {
    %cst = arith.constant 0.000000e+00 : f32
    %0 = vector.broadcast %cst : f32 to vector<4x9x9x4xf32>
    %c0 = arith.constant 0 : index
    %c0_0 = arith.constant 0 : index
    %c0_1 = arith.constant 0 : index
    %c0_2 = arith.constant 0 : index
    %1 = vector.load %arg6[%c0, %c0_0, %c0_1, %c0_2] : memref<4x9x9x4xf32, #tpu.memory_space<vmem>>, vector<4x9x9x4xf32>
    tpu.vector_store %arg6[%c0, %c0_0, %c0_1, %c0_2], %0 {strides = array<i32>} : memref<4x9x9x4xf32, #tpu.memory_space<vmem>>, vector<4x9x9x4xf32>,
    %c0_3 = arith.constant 0 : index
    %c0_4 = arith.constant 0 : index
    %2 = vector.load %arg2[%c0_3, %c0_4] : memref<1x4xf32, #tpu.memory_space<vmem>>, vector<1x4xf32>
    %c0_5 = arith.constant 0 : index
    %c0_6 = arith.constant 0 : index
    %3 = vector.load %arg3[%c0_5, %c0_6] : memref<1x4xf32, #tpu.memory_space<vmem>>, vector<1x4xf32>
    %c3 = arith.constant 3 : index
    %c0_7 = arith.constant 0 : index
    %c0_8 = arith.constant 0 : index
    %c0_9 = arith.constant 0 : index
    %4 = vector.load %arg1[%c3, %c0_7, %c0_8, %c0_9] : memref<4x8x8x4xf32, #tpu.memory_space<vmem>>, vector<1x8x8x4xf32>
    %5 = vector.shape_cast %4 : vector<1x8x8x4xf32> to vector<8x8x4xf32>
    %6 = vector.shape_cast %2 : vector<1x4xf32> to vector<1x1x4xf32>
    %7 = vector.broadcast %6 : vector<1x1x4xf32> to vector<8x8x4xf32>
    %8 = arith.mulf %5, %7 : vector<8x8x4xf32>
    %9 = vector.shape_cast %3 : vector<1x4xf32> to vector<1x1x4xf32>
    %10 = vector.broadcast %9 : vector<1x1x4xf32> to vector<8x8x4xf32>
    %11 = arith.addf %8, %10 : vector<8x8x4xf32>
    %cst_10 = arith.constant 0.000000e+00 : f32
    %12 = vector.broadcast %cst_10 : f32 to vector<8x8x4xf32>
    %13 = arith.cmpf oge, %11, %12 : vector<8x8x4xf32>
    %cst_11 = arith.constant 1.000000e-01 : f32
    %14 = vector.broadcast %cst_11 : f32 to vector<8x8x4xf32>
    %15 = arith.mulf %14, %11 : vector<8x8x4xf32>
    %16 = arith.select %13, %11, %15 : vector<8x8x4xi1>, vector<8x8x4xf32>
    %c0_12 = arith.constant 0 : index
    %c1 = arith.constant 1 : index
    %c1_13 = arith.constant 1 : index
    %c0_14 = arith.constant 0 : index
    %17 = vector.load %arg6[%c0_12, %c1, %c1_13, %c0_14] : memref<4x9x9x4xf32, #tpu.memory_space<vmem>>, vector<1x8x8x4xf32>
    %18 = vector.shape_cast %17 : vector<1x8x8x4xf32> to vector<8x8x4xf32>
    %19 = vector.shape_cast %16 : vector<8x8x4xf32> to vector<1x8x8x4xf32>
    tpu.vector_store %arg6[%c0_12, %c1, %c1_13, %c0_14], %19 {strides = array<i32>} : memref<4x9x9x4xf32, #tpu.memory_space<vmem>>, vector<1x8x8x4xf32>,
    %c2 = arith.constant 2 : index
    %c0_15 = arith.constant 0 : index
    %c0_16 = arith.constant 0 : index
    %c0_17 = arith.constant 0 : index
    %20 = vector.load %arg1[%c2, %c0_15, %c0_16, %c0_17] : memref<4x8x8x4xf32, #tpu.memory_space<vmem>>, vector<1x8x8x4xf32>
    %21 = vector.shape_cast %20 : vector<1x8x8x4xf32> to vector<8x8x4xf32>
    %22 = vector.shape_cast %2 : vector<1x4xf32> to vector<1x1x4xf32>
    %23 = vector.broadcast %22 : vector<1x1x4xf32> to vector<8x8x4xf32>
    %24 = arith.mulf %21, %23 : vector<8x8x4xf32>
    %25 = vector.shape_cast %3 : vector<1x4xf32> to vector<1x1x4xf32>
    %26 = vector.broadcast %25 : vector<1x1x4xf32> to vector<8x8x4xf32>
    %27 = arith.addf %24, %26 : vector<8x8x4xf32>
    %cst_18 = arith.constant 0.000000e+00 : f32
    %28 = vector.broadcast %cst_18 : f32 to vector<8x8x4xf32>
    %29 = arith.cmpf oge, %27, %28 : vector<8x8x4xf32>
    %cst_19 = arith.constant 1.000000e-01 : f32
    %30 = vector.broadcast %cst_19 : f32 to vector<8x8x4xf32>
    %31 = arith.mulf %30, %27 : vector<8x8x4xf32>
    %32 = arith.select %29, %27, %31 : vector<8x8x4xi1>, vector<8x8x4xf32>
    %c1_20 = arith.constant 1 : index
    %c1_21 = arith.constant 1 : index
    %c0_22 = arith.constant 0 : index
    %c0_23 = arith.constant 0 : index
    %33 = vector.load %arg6[%c1_20, %c1_21, %c0_22, %c0_23] : memref<4x9x9x4xf32, #tpu.memory_space<vmem>>, vector<1x8x8x4xf32>
    %34 = vector.shape_cast %33 : vector<1x8x8x4xf32> to vector<8x8x4xf32>
    %35 = vector.shape_cast %32 : vector<8x8x4xf32> to vector<1x8x8x4xf32>
    tpu.vector_store %arg6[%c1_20, %c1_21, %c0_22, %c0_23], %35 {strides = array<i32>} : memref<4x9x9x4xf32, #tpu.memory_space<vmem>>, vector<1x8x8x4xf32>,
    %c1_24 = arith.constant 1 : index
    %c0_25 = arith.constant 0 : index
    %c0_26 = arith.constant 0 : index
    %c0_27 = arith.constant 0 : index
    %36 = vector.load %arg1[%c1_24, %c0_25, %c0_26, %c0_27] : memref<4x8x8x4xf32, #tpu.memory_space<vmem>>, vector<1x8x8x4xf32>
    %37 = vector.shape_cast %36 : vector<1x8x8x4xf32> to vector<8x8x4xf32>
    %38 = vector.shape_cast %2 : vector<1x4xf32> to vector<1x1x4xf32>
    %39 = vector.broadcast %38 : vector<1x1x4xf32> to vector<8x8x4xf32>
    %40 = arith.mulf %37, %39 : vector<8x8x4xf32>
    %41 = vector.shape_cast %3 : vector<1x4xf32> to vector<1x1x4xf32>
    %42 = vector.broadcast %41 : vector<1x1x4xf32> to vector<8x8x4xf32>
    %43 = arith.addf %40, %42 : vector<8x8x4xf32>
    %cst_28 = arith.constant 0.000000e+00 : f32
    %44 = vector.broadcast %cst_28 : f32 to vector<8x8x4xf32>
    %45 = arith.cmpf oge, %43, %44 : vector<8x8x4xf32>
    %cst_29 = arith.constant 1.000000e-01 : f32
    %46 = vector.broadcast %cst_29 : f32 to vector<8x8x4xf32>
    %47 = arith.mulf %46, %43 : vector<8x8x4xf32>
    %48 = arith.select %45, %43, %47 : vector<8x8x4xi1>, vector<8x8x4xf32>
    %c2_30 = arith.constant 2 : index
    %c0_31 = arith.constant 0 : index
    %c1_32 = arith.constant 1 : index
    %c0_33 = arith.constant 0 : index
    %49 = vector.load %arg6[%c2_30, %c0_31, %c1_32, %c0_33] : memref<4x9x9x4xf32, #tpu.memory_space<vmem>>, vector<1x8x8x4xf32>
    %50 = vector.shape_cast %49 : vector<1x8x8x4xf32> to vector<8x8x4xf32>
    %51 = vector.shape_cast %48 : vector<8x8x4xf32> to vector<1x8x8x4xf32>
    tpu.vector_store %arg6[%c2_30, %c0_31, %c1_32, %c0_33], %51 {strides = array<i32>} : memref<4x9x9x4xf32, #tpu.memory_space<vmem>>, vector<1x8x8x4xf32>,
    %c0_34 = arith.constant 0 : index
    %c0_35 = arith.constant 0 : index
    %c0_36 = arith.constant 0 : index
    %c0_37 = arith.constant 0 : index
    %52 = vector.load %arg1[%c0_34, %c0_35, %c0_36, %c0_37] : memref<4x8x8x4xf32, #tpu.memory_space<vmem>>, vector<1x8x8x4xf32>
    %53 = vector.shape_cast %52 : vector<1x8x8x4xf32> to vector<8x8x4xf32>
    %54 = vector.shape_cast %2 : vector<1x4xf32> to vector<1x1x4xf32>
    %55 = vector.broadcast %54 : vector<1x1x4xf32> to vector<8x8x4xf32>
    %56 = arith.mulf %53, %55 : vector<8x8x4xf32>
    %57 = vector.shape_cast %3 : vector<1x4xf32> to vector<1x1x4xf32>
    %58 = vector.broadcast %57 : vector<1x1x4xf32> to vector<8x8x4xf32>
    %59 = arith.addf %56, %58 : vector<8x8x4xf32>
    %cst_38 = arith.constant 0.000000e+00 : f32
    %60 = vector.broadcast %cst_38 : f32 to vector<8x8x4xf32>
    %61 = arith.cmpf oge, %59, %60 : vector<8x8x4xf32>
    %cst_39 = arith.constant 1.000000e-01 : f32
    %62 = vector.broadcast %cst_39 : f32 to vector<8x8x4xf32>
    %63 = arith.mulf %62, %59 : vector<8x8x4xf32>
    %64 = arith.select %61, %59, %63 : vector<8x8x4xi1>, vector<8x8x4xf32>
    %c3_40 = arith.constant 3 : index
    %c0_41 = arith.constant 0 : index
    %c0_42 = arith.constant 0 : index
    %c0_43 = arith.constant 0 : index
    %65 = vector.load %arg6[%c3_40, %c0_41, %c0_42, %c0_43] : memref<4x9x9x4xf32, #tpu.memory_space<vmem>>, vector<1x8x8x4xf32>
    %66 = vector.shape_cast %65 : vector<1x8x8x4xf32> to vector<8x8x4xf32>
    %67 = vector.shape_cast %64 : vector<8x8x4xf32> to vector<1x8x8x4xf32>
    tpu.vector_store %arg6[%c3_40, %c0_41, %c0_42, %c0_43], %67 {strides = array<i32>} : memref<4x9x9x4xf32, #tpu.memory_space<vmem>>, vector<1x8x8x4xf32>,
    %cst_44 = arith.constant 0.000000e+00 : f32
    %68 = vector.broadcast %cst_44 : f32 to vector<64x8xf32>
    %c0_45 = arith.constant 0 : index
    %c0_46 = arith.constant 0 : index
    %c0_47 = arith.constant 0 : index
    %c0_48 = arith.constant 0 : index
    %69 = vector.load %arg6[%c0_45, %c0_46, %c0_47, %c0_48] : memref<4x9x9x4xf32, #tpu.memory_space<vmem>>, vector<1x8x8x4xf32>
    %70 = vector.shape_cast %69 : vector<1x8x8x4xf32> to vector<8x8x4xf32>
    %71 = vector.shape_cast %70 : vector<8x8x4xf32> to vector<64x4xf32>
    %c0_49 = arith.constant 0 : index
    %c0_50 = arith.constant 0 : index
    %c0_51 = arith.constant 0 : index
    %72 = vector.load %arg4[%c0_49, %c0_50, %c0_51] : memref<9x4x8xf32, #tpu.memory_space<vmem>>, vector<1x4x8xf32>
    %73 = vector.shape_cast %72 : vector<1x4x8xf32> to vector<4x8xf32>
    %cst_52 = arith.constant dense<0.000000e+00> : vector<64x8xf32>
    %74 = tpu.matmul %71, %73, %cst_52 {dimension_numbers = #tpu.dot_dimension_numbers<[1], [0], [0], [1], [0, 0, 1, 1], [], []>} : vector<64x4xf32>, vector<4x8xf32>, vector<64x8xf32> -> vector<64x8xf32>
    %75 = arith.addf %68, %74 : vector<64x8xf32>
    %c1_53 = arith.constant 1 : index
    %c0_54 = arith.constant 0 : index
    %c0_55 = arith.constant 0 : index
    %c0_56 = arith.constant 0 : index
    %76 = vector.load %arg6[%c1_53, %c0_54, %c0_55, %c0_56] : memref<4x9x9x4xf32, #tpu.memory_space<vmem>>, vector<1x8x8x4xf32>
    %77 = vector.shape_cast %76 : vector<1x8x8x4xf32> to vector<8x8x4xf32>
    %78 = vector.shape_cast %77 : vector<8x8x4xf32> to vector<64x4xf32>
    %c1_57 = arith.constant 1 : index
    %c0_58 = arith.constant 0 : index
    %c0_59 = arith.constant 0 : index
    %79 = vector.load %arg4[%c1_57, %c0_58, %c0_59] : memref<9x4x8xf32, #tpu.memory_space<vmem>>, vector<1x4x8xf32>
    %80 = vector.shape_cast %79 : vector<1x4x8xf32> to vector<4x8xf32>
    %cst_60 = arith.constant dense<0.000000e+00> : vector<64x8xf32>
    %81 = tpu.matmul %78, %80, %cst_60 {dimension_numbers = #tpu.dot_dimension_numbers<[1], [0], [0], [1], [0, 0, 1, 1], [], []>} : vector<64x4xf32>, vector<4x8xf32>, vector<64x8xf32> -> vector<64x8xf32>
    %82 = arith.addf %75, %81 : vector<64x8xf32>
    %c0_61 = arith.constant 0 : index
    %c0_62 = arith.constant 0 : index
    %c1_63 = arith.constant 1 : index
    %c0_64 = arith.constant 0 : index
    %83 = vector.load %arg6[%c0_61, %c0_62, %c1_63, %c0_64] : memref<4x9x9x4xf32, #tpu.memory_space<vmem>>, vector<1x8x8x4xf32>
    %84 = vector.shape_cast %83 : vector<1x8x8x4xf32> to vector<8x8x4xf32>
    %85 = vector.shape_cast %84 : vector<8x8x4xf32> to vector<64x4xf32>
    %c2_65 = arith.constant 2 : index
    %c0_66 = arith.constant 0 : index
    %c0_67 = arith.constant 0 : index
    %86 = vector.load %arg4[%c2_65, %c0_66, %c0_67] : memref<9x4x8xf32, #tpu.memory_space<vmem>>, vector<1x4x8xf32>
    %87 = vector.shape_cast %86 : vector<1x4x8xf32> to vector<4x8xf32>
    %cst_68 = arith.constant dense<0.000000e+00> : vector<64x8xf32>
    %88 = tpu.matmul %85, %87, %cst_68 {dimension_numbers = #tpu.dot_dimension_numbers<[1], [0], [0], [1], [0, 0, 1, 1], [], []>} : vector<64x4xf32>, vector<4x8xf32>, vector<64x8xf32> -> vector<64x8xf32>
    %89 = arith.addf %82, %88 : vector<64x8xf32>
    %c2_69 = arith.constant 2 : index
    %c0_70 = arith.constant 0 : index
    %c0_71 = arith.constant 0 : index
    %c0_72 = arith.constant 0 : index
    %90 = vector.load %arg6[%c2_69, %c0_70, %c0_71, %c0_72] : memref<4x9x9x4xf32, #tpu.memory_space<vmem>>, vector<1x8x8x4xf32>
    %91 = vector.shape_cast %90 : vector<1x8x8x4xf32> to vector<8x8x4xf32>
    %92 = vector.shape_cast %91 : vector<8x8x4xf32> to vector<64x4xf32>
    %c3_73 = arith.constant 3 : index
    %c0_74 = arith.constant 0 : index
    %c0_75 = arith.constant 0 : index
    %93 = vector.load %arg4[%c3_73, %c0_74, %c0_75] : memref<9x4x8xf32, #tpu.memory_space<vmem>>, vector<1x4x8xf32>
    %94 = vector.shape_cast %93 : vector<1x4x8xf32> to vector<4x8xf32>
    %cst_76 = arith.constant dense<0.000000e+00> : vector<64x8xf32>
    %95 = tpu.matmul %92, %94, %cst_76 {dimension_numbers = #tpu.dot_dimension_numbers<[1], [0], [0], [1], [0, 0, 1, 1], [], []>} : vector<64x4xf32>, vector<4x8xf32>, vector<64x8xf32> -> vector<64x8xf32>
    %96 = arith.addf %89, %95 : vector<64x8xf32>
    %c3_77 = arith.constant 3 : index
    %c0_78 = arith.constant 0 : index
    %c0_79 = arith.constant 0 : index
    %c0_80 = arith.constant 0 : index
    %97 = vector.load %arg6[%c3_77, %c0_78, %c0_79, %c0_80] : memref<4x9x9x4xf32, #tpu.memory_space<vmem>>, vector<1x8x8x4xf32>
    %98 = vector.shape_cast %97 : vector<1x8x8x4xf32> to vector<8x8x4xf32>
    %99 = vector.shape_cast %98 : vector<8x8x4xf32> to vector<64x4xf32>
    %c4 = arith.constant 4 : index
    %c0_81 = arith.constant 0 : index
    %c0_82 = arith.constant 0 : index
    %100 = vector.load %arg4[%c4, %c0_81, %c0_82] : memref<9x4x8xf32, #tpu.memory_space<vmem>>, vector<1x4x8xf32>
    %101 = vector.shape_cast %100 : vector<1x4x8xf32> to vector<4x8xf32>
    %cst_83 = arith.constant dense<0.000000e+00> : vector<64x8xf32>
    %102 = tpu.matmul %99, %101, %cst_83 {dimension_numbers = #tpu.dot_dimension_numbers<[1], [0], [0], [1], [0, 0, 1, 1], [], []>} : vector<64x4xf32>, vector<4x8xf32>, vector<64x8xf32> -> vector<64x8xf32>
    %103 = arith.addf %96, %102 : vector<64x8xf32>
    %c2_84 = arith.constant 2 : index
    %c0_85 = arith.constant 0 : index
    %c1_86 = arith.constant 1 : index
    %c0_87 = arith.constant 0 : index
    %104 = vector.load %arg6[%c2_84, %c0_85, %c1_86, %c0_87] : memref<4x9x9x4xf32, #tpu.memory_space<vmem>>, vector<1x8x8x4xf32>
    %105 = vector.shape_cast %104 : vector<1x8x8x4xf32> to vector<8x8x4xf32>
    %106 = vector.shape_cast %105 : vector<8x8x4xf32> to vector<64x4xf32>
    %c5 = arith.constant 5 : index
    %c0_88 = arith.constant 0 : index
    %c0_89 = arith.constant 0 : index
    %107 = vector.load %arg4[%c5, %c0_88, %c0_89] : memref<9x4x8xf32, #tpu.memory_space<vmem>>, vector<1x4x8xf32>
    %108 = vector.shape_cast %107 : vector<1x4x8xf32> to vector<4x8xf32>
    %cst_90 = arith.constant dense<0.000000e+00> : vector<64x8xf32>
    %109 = tpu.matmul %106, %108, %cst_90 {dimension_numbers = #tpu.dot_dimension_numbers<[1], [0], [0], [1], [0, 0, 1, 1], [], []>} : vector<64x4xf32>, vector<4x8xf32>, vector<64x8xf32> -> vector<64x8xf32>
    %110 = arith.addf %103, %109 : vector<64x8xf32>
    %c0_91 = arith.constant 0 : index
    %c1_92 = arith.constant 1 : index
    %c0_93 = arith.constant 0 : index
    %c0_94 = arith.constant 0 : index
    %111 = vector.load %arg6[%c0_91, %c1_92, %c0_93, %c0_94] : memref<4x9x9x4xf32, #tpu.memory_space<vmem>>, vector<1x8x8x4xf32>
    %112 = vector.shape_cast %111 : vector<1x8x8x4xf32> to vector<8x8x4xf32>
    %113 = vector.shape_cast %112 : vector<8x8x4xf32> to vector<64x4xf32>
    %c6 = arith.constant 6 : index
    %c0_95 = arith.constant 0 : index
    %c0_96 = arith.constant 0 : index
    %114 = vector.load %arg4[%c6, %c0_95, %c0_96] : memref<9x4x8xf32, #tpu.memory_space<vmem>>, vector<1x4x8xf32>
    %115 = vector.shape_cast %114 : vector<1x4x8xf32> to vector<4x8xf32>
    %cst_97 = arith.constant dense<0.000000e+00> : vector<64x8xf32>
    %116 = tpu.matmul %113, %115, %cst_97 {dimension_numbers = #tpu.dot_dimension_numbers<[1], [0], [0], [1], [0, 0, 1, 1], [], []>} : vector<64x4xf32>, vector<4x8xf32>, vector<64x8xf32> -> vector<64x8xf32>
    %117 = arith.addf %110, %116 : vector<64x8xf32>
    %c1_98 = arith.constant 1 : index
    %c1_99 = arith.constant 1 : index
    %c0_100 = arith.constant 0 : index
    %c0_101 = arith.constant 0 : index
    %118 = vector.load %arg6[%c1_98, %c1_99, %c0_100, %c0_101] : memref<4x9x9x4xf32, #tpu.memory_space<vmem>>, vector<1x8x8x4xf32>
    %119 = vector.shape_cast %118 : vector<1x8x8x4xf32> to vector<8x8x4xf32>
    %120 = vector.shape_cast %119 : vector<8x8x4xf32> to vector<64x4xf32>
    %c7 = arith.constant 7 : index
    %c0_102 = arith.constant 0 : index
    %c0_103 = arith.constant 0 : index
    %121 = vector.load %arg4[%c7, %c0_102, %c0_103] : memref<9x4x8xf32, #tpu.memory_space<vmem>>, vector<1x4x8xf32>
    %122 = vector.shape_cast %121 : vector<1x4x8xf32> to vector<4x8xf32>
    %cst_104 = arith.constant dense<0.000000e+00> : vector<64x8xf32>
    %123 = tpu.matmul %120, %122, %cst_104 {dimension_numbers = #tpu.dot_dimension_numbers<[1], [0], [0], [1], [0, 0, 1, 1], [], []>} : vector<64x4xf32>, vector<4x8xf32>, vector<64x8xf32> -> vector<64x8xf32>
    %124 = arith.addf %117, %123 : vector<64x8xf32>
    %c0_105 = arith.constant 0 : index
    %c1_106 = arith.constant 1 : index
    %c1_107 = arith.constant 1 : index
    %c0_108 = arith.constant 0 : index
    %125 = vector.load %arg6[%c0_105, %c1_106, %c1_107, %c0_108] : memref<4x9x9x4xf32, #tpu.memory_space<vmem>>, vector<1x8x8x4xf32>
    %126 = vector.shape_cast %125 : vector<1x8x8x4xf32> to vector<8x8x4xf32>
    %127 = vector.shape_cast %126 : vector<8x8x4xf32> to vector<64x4xf32>
    %c8 = arith.constant 8 : index
    %c0_109 = arith.constant 0 : index
    %c0_110 = arith.constant 0 : index
    %128 = vector.load %arg4[%c8, %c0_109, %c0_110] : memref<9x4x8xf32, #tpu.memory_space<vmem>>, vector<1x4x8xf32>
    %129 = vector.shape_cast %128 : vector<1x4x8xf32> to vector<4x8xf32>
    %cst_111 = arith.constant dense<0.000000e+00> : vector<64x8xf32>
    %130 = tpu.matmul %127, %129, %cst_111 {dimension_numbers = #tpu.dot_dimension_numbers<[1], [0], [0], [1], [0, 0, 1, 1], [], []>} : vector<64x4xf32>, vector<4x8xf32>, vector<64x8xf32> -> vector<64x8xf32>
    %131 = arith.addf %124, %130 : vector<64x8xf32>
    %132 = vector.shape_cast %131 : vector<64x8xf32> to vector<8x8x8xf32>
    %c0_112 = arith.constant 0 : index
    %c0_113 = arith.constant 0 : index
    %c0_114 = arith.constant 0 : index
    %133 = vector.load %arg5[%c0_112, %c0_113, %c0_114] : memref<8x8x8xf32, #tpu.memory_space<vmem>>, vector<8x8x8xf32>
    tpu.vector_store %arg5[%c0_112, %c0_113, %c0_114], %132 {strides = array<i32>} : memref<8x8x8xf32, #tpu.memory_space<vmem>>, vector<8x8x8xf32>,
    return
  }
  func.func @transform_0(%arg0: i32) -> (i32, i32, i32, i32) {
    %c0_i32 = arith.constant 0 : i32
    %c0_i32_0 = arith.constant 0 : i32
    %c0_i32_1 = arith.constant 0 : i32
    %c0_i32_2 = arith.constant 0 : i32
    return %arg0, %c0_i32, %c0_i32_0, %c0_i32_1 : i32, i32, i32, i32
  }
  func.func @transform_1(%arg0: i32) -> (i32, i32) {
    %c0_i32 = arith.constant 0 : i32
    %c0_i32_0 = arith.constant 0 : i32
    %c0_i32_1 = arith.constant 0 : i32
    return %c0_i32, %c0_i32_0 : i32, i32
  }
  func.func @transform_2(%arg0: i32) -> (i32, i32) {
    %c0_i32 = arith.constant 0 : i32
    %c0_i32_0 = arith.constant 0 : i32
    %c0_i32_1 = arith.constant 0 : i32
    return %c0_i32, %c0_i32_0 : i32, i32
  }
  func.func @transform_3(%arg0: i32) -> (i32, i32, i32) {
    %c0_i32 = arith.constant 0 : i32
    %c0_i32_0 = arith.constant 0 : i32
    %c0_i32_1 = arith.constant 0 : i32
    %c0_i32_2 = arith.constant 0 : i32
    return %c0_i32, %c0_i32_0, %c0_i32_1 : i32, i32, i32
  }
  func.func @transform_4(%arg0: i32) -> (i32, i32, i32) {
    %c0_i32 = arith.constant 0 : i32
    %c0_i32_0 = arith.constant 0 : i32
    %c0_i32_1 = arith.constant 0 : i32
    return %arg0, %c0_i32, %c0_i32_0 : i32, i32, i32
  }
}

module attributes {stable_mosaic.version = 11 : i64} {
  func.func @kernel(%arg0: i32, %arg1: memref<1x8x8x8xf32, #tpu.memory_space<vmem>>, %arg2: memref<1x8xf32, #tpu.memory_space<vmem>>, %arg3: memref<1x8xf32, #tpu.memory_space<vmem>>, %arg4: memref<9x8x8xf32, #tpu.memory_space<vmem>>, %arg5: memref<8x8x8xf32, #tpu.memory_space<vmem>>, %arg6: memref<8x8x8xf32, #tpu.memory_space<vmem>>, %arg7: memref<1x10x10x8xf32, #tpu.memory_space<vmem>>) attributes {dimension_semantics = [#tpu.dimension_semantics<parallel>], iteration_bounds = array<i64: 2>, scalar_prefetch = 0 : i64, scratch_operands = 1 : i64, tpu.core_type = #tpu.core_type<tc>, window_params = [{transform_indices = @transform_0, window_bounds = array<i64: 1, 8, 8, 8>}, {pipeline_mode = #tpu.pipeline_mode<synchronous>, transform_indices = @transform_1, window_bounds = array<i64: 1, 8>}, {pipeline_mode = #tpu.pipeline_mode<synchronous>, transform_indices = @transform_2, window_bounds = array<i64: 1, 8>}, {pipeline_mode = #tpu.pipeline_mode<synchronous>, transform_indices = @transform_3, window_bounds = array<i64: 9, 8, 8>}, {transform_indices = @transform_4, window_bounds = array<i64: 8, 8, 8>}, {transform_indices = @transform_5, window_bounds = array<i64: 8, 8, 8>}]} {
    %cst = arith.constant 0.000000e+00 : f32
    %0 = vector.broadcast %cst : f32 to vector<1x10x10x8xf32>
    %c0 = arith.constant 0 : index
    %c0_0 = arith.constant 0 : index
    %c0_1 = arith.constant 0 : index
    %c0_2 = arith.constant 0 : index
    %1 = vector.load %arg7[%c0, %c0_0, %c0_1, %c0_2] : memref<1x10x10x8xf32, #tpu.memory_space<vmem>>, vector<1x10x10x8xf32>
    tpu.vector_store %arg7[%c0, %c0_0, %c0_1, %c0_2], %0 {strides = array<i32>} : memref<1x10x10x8xf32, #tpu.memory_space<vmem>>, vector<1x10x10x8xf32>,
    %c0_3 = arith.constant 0 : index
    %c0_4 = arith.constant 0 : index
    %2 = vector.load %arg2[%c0_3, %c0_4] : memref<1x8xf32, #tpu.memory_space<vmem>>, vector<1x8xf32>
    %c0_5 = arith.constant 0 : index
    %c0_6 = arith.constant 0 : index
    %3 = vector.load %arg3[%c0_5, %c0_6] : memref<1x8xf32, #tpu.memory_space<vmem>>, vector<1x8xf32>
    %c0_7 = arith.constant 0 : index
    %c0_8 = arith.constant 0 : index
    %c0_9 = arith.constant 0 : index
    %c0_10 = arith.constant 0 : index
    %4 = vector.load %arg1[%c0_7, %c0_8, %c0_9, %c0_10] : memref<1x8x8x8xf32, #tpu.memory_space<vmem>>, vector<1x8x8x8xf32>
    %5 = vector.shape_cast %4 : vector<1x8x8x8xf32> to vector<8x8x8xf32>
    %6 = vector.shape_cast %2 : vector<1x8xf32> to vector<1x1x8xf32>
    %7 = vector.broadcast %6 : vector<1x1x8xf32> to vector<8x8x8xf32>
    %8 = arith.mulf %5, %7 : vector<8x8x8xf32>
    %9 = vector.shape_cast %3 : vector<1x8xf32> to vector<1x1x8xf32>
    %10 = vector.broadcast %9 : vector<1x1x8xf32> to vector<8x8x8xf32>
    %11 = arith.addf %8, %10 : vector<8x8x8xf32>
    %cst_11 = arith.constant 0.000000e+00 : f32
    %12 = vector.broadcast %cst_11 : f32 to vector<8x8x8xf32>
    %13 = arith.cmpf oge, %11, %12 : vector<8x8x8xf32>
    %cst_12 = arith.constant 1.000000e-01 : f32
    %14 = vector.broadcast %cst_12 : f32 to vector<8x8x8xf32>
    %15 = arith.mulf %14, %11 : vector<8x8x8xf32>
    %16 = arith.select %13, %11, %15 : vector<8x8x8xi1>, vector<8x8x8xf32>
    %c0_13 = arith.constant 0 : index
    %c1 = arith.constant 1 : index
    %c1_14 = arith.constant 1 : index
    %c0_15 = arith.constant 0 : index
    %17 = vector.load %arg7[%c0_13, %c1, %c1_14, %c0_15] : memref<1x10x10x8xf32, #tpu.memory_space<vmem>>, vector<1x8x8x8xf32>
    %18 = vector.shape_cast %17 : vector<1x8x8x8xf32> to vector<8x8x8xf32>
    %19 = vector.shape_cast %16 : vector<8x8x8xf32> to vector<1x8x8x8xf32>
    tpu.vector_store %arg7[%c0_13, %c1, %c1_14, %c0_15], %19 {strides = array<i32>} : memref<1x10x10x8xf32, #tpu.memory_space<vmem>>, vector<1x8x8x8xf32>,
    %cst_16 = arith.constant 0.000000e+00 : f32
    %20 = vector.broadcast %cst_16 : f32 to vector<64x8xf32>
    %c0_17 = arith.constant 0 : index
    %c0_18 = arith.constant 0 : index
    %c0_19 = arith.constant 0 : index
    %c0_20 = arith.constant 0 : index
    %21 = vector.load %arg7[%c0_17, %c0_18, %c0_19, %c0_20] : memref<1x10x10x8xf32, #tpu.memory_space<vmem>>, vector<1x8x8x8xf32>
    %22 = vector.shape_cast %21 : vector<1x8x8x8xf32> to vector<8x8x8xf32>
    %23 = vector.shape_cast %22 : vector<8x8x8xf32> to vector<64x8xf32>
    %c0_21 = arith.constant 0 : index
    %c0_22 = arith.constant 0 : index
    %c0_23 = arith.constant 0 : index
    %24 = vector.load %arg4[%c0_21, %c0_22, %c0_23] : memref<9x8x8xf32, #tpu.memory_space<vmem>>, vector<1x8x8xf32>
    %25 = vector.shape_cast %24 : vector<1x8x8xf32> to vector<8x8xf32>
    %cst_24 = arith.constant dense<0.000000e+00> : vector<64x8xf32>
    %26 = tpu.matmul %23, %25, %cst_24 {dimension_numbers = #tpu.dot_dimension_numbers<[1], [0], [0], [1], [0, 0, 1, 1], [], []>} : vector<64x8xf32>, vector<8x8xf32>, vector<64x8xf32> -> vector<64x8xf32>
    %27 = arith.addf %20, %26 : vector<64x8xf32>
    %c0_25 = arith.constant 0 : index
    %c0_26 = arith.constant 0 : index
    %c1_27 = arith.constant 1 : index
    %c0_28 = arith.constant 0 : index
    %28 = vector.load %arg7[%c0_25, %c0_26, %c1_27, %c0_28] : memref<1x10x10x8xf32, #tpu.memory_space<vmem>>, vector<1x8x8x8xf32>
    %29 = vector.shape_cast %28 : vector<1x8x8x8xf32> to vector<8x8x8xf32>
    %30 = vector.shape_cast %29 : vector<8x8x8xf32> to vector<64x8xf32>
    %c1_29 = arith.constant 1 : index
    %c0_30 = arith.constant 0 : index
    %c0_31 = arith.constant 0 : index
    %31 = vector.load %arg4[%c1_29, %c0_30, %c0_31] : memref<9x8x8xf32, #tpu.memory_space<vmem>>, vector<1x8x8xf32>
    %32 = vector.shape_cast %31 : vector<1x8x8xf32> to vector<8x8xf32>
    %cst_32 = arith.constant dense<0.000000e+00> : vector<64x8xf32>
    %33 = tpu.matmul %30, %32, %cst_32 {dimension_numbers = #tpu.dot_dimension_numbers<[1], [0], [0], [1], [0, 0, 1, 1], [], []>} : vector<64x8xf32>, vector<8x8xf32>, vector<64x8xf32> -> vector<64x8xf32>
    %34 = arith.addf %27, %33 : vector<64x8xf32>
    %c0_33 = arith.constant 0 : index
    %c0_34 = arith.constant 0 : index
    %c2 = arith.constant 2 : index
    %c0_35 = arith.constant 0 : index
    %35 = vector.load %arg7[%c0_33, %c0_34, %c2, %c0_35] : memref<1x10x10x8xf32, #tpu.memory_space<vmem>>, vector<1x8x8x8xf32>
    %36 = vector.shape_cast %35 : vector<1x8x8x8xf32> to vector<8x8x8xf32>
    %37 = vector.shape_cast %36 : vector<8x8x8xf32> to vector<64x8xf32>
    %c2_36 = arith.constant 2 : index
    %c0_37 = arith.constant 0 : index
    %c0_38 = arith.constant 0 : index
    %38 = vector.load %arg4[%c2_36, %c0_37, %c0_38] : memref<9x8x8xf32, #tpu.memory_space<vmem>>, vector<1x8x8xf32>
    %39 = vector.shape_cast %38 : vector<1x8x8xf32> to vector<8x8xf32>
    %cst_39 = arith.constant dense<0.000000e+00> : vector<64x8xf32>
    %40 = tpu.matmul %37, %39, %cst_39 {dimension_numbers = #tpu.dot_dimension_numbers<[1], [0], [0], [1], [0, 0, 1, 1], [], []>} : vector<64x8xf32>, vector<8x8xf32>, vector<64x8xf32> -> vector<64x8xf32>
    %41 = arith.addf %34, %40 : vector<64x8xf32>
    %c0_40 = arith.constant 0 : index
    %c1_41 = arith.constant 1 : index
    %c0_42 = arith.constant 0 : index
    %c0_43 = arith.constant 0 : index
    %42 = vector.load %arg7[%c0_40, %c1_41, %c0_42, %c0_43] : memref<1x10x10x8xf32, #tpu.memory_space<vmem>>, vector<1x8x8x8xf32>
    %43 = vector.shape_cast %42 : vector<1x8x8x8xf32> to vector<8x8x8xf32>
    %44 = vector.shape_cast %43 : vector<8x8x8xf32> to vector<64x8xf32>
    %c3 = arith.constant 3 : index
    %c0_44 = arith.constant 0 : index
    %c0_45 = arith.constant 0 : index
    %45 = vector.load %arg4[%c3, %c0_44, %c0_45] : memref<9x8x8xf32, #tpu.memory_space<vmem>>, vector<1x8x8xf32>
    %46 = vector.shape_cast %45 : vector<1x8x8xf32> to vector<8x8xf32>
    %cst_46 = arith.constant dense<0.000000e+00> : vector<64x8xf32>
    %47 = tpu.matmul %44, %46, %cst_46 {dimension_numbers = #tpu.dot_dimension_numbers<[1], [0], [0], [1], [0, 0, 1, 1], [], []>} : vector<64x8xf32>, vector<8x8xf32>, vector<64x8xf32> -> vector<64x8xf32>
    %48 = arith.addf %41, %47 : vector<64x8xf32>
    %c0_47 = arith.constant 0 : index
    %c1_48 = arith.constant 1 : index
    %c1_49 = arith.constant 1 : index
    %c0_50 = arith.constant 0 : index
    %49 = vector.load %arg7[%c0_47, %c1_48, %c1_49, %c0_50] : memref<1x10x10x8xf32, #tpu.memory_space<vmem>>, vector<1x8x8x8xf32>
    %50 = vector.shape_cast %49 : vector<1x8x8x8xf32> to vector<8x8x8xf32>
    %51 = vector.shape_cast %50 : vector<8x8x8xf32> to vector<64x8xf32>
    %c4 = arith.constant 4 : index
    %c0_51 = arith.constant 0 : index
    %c0_52 = arith.constant 0 : index
    %52 = vector.load %arg4[%c4, %c0_51, %c0_52] : memref<9x8x8xf32, #tpu.memory_space<vmem>>, vector<1x8x8xf32>
    %53 = vector.shape_cast %52 : vector<1x8x8xf32> to vector<8x8xf32>
    %cst_53 = arith.constant dense<0.000000e+00> : vector<64x8xf32>
    %54 = tpu.matmul %51, %53, %cst_53 {dimension_numbers = #tpu.dot_dimension_numbers<[1], [0], [0], [1], [0, 0, 1, 1], [], []>} : vector<64x8xf32>, vector<8x8xf32>, vector<64x8xf32> -> vector<64x8xf32>
    %55 = arith.addf %48, %54 : vector<64x8xf32>
    %c0_54 = arith.constant 0 : index
    %c1_55 = arith.constant 1 : index
    %c2_56 = arith.constant 2 : index
    %c0_57 = arith.constant 0 : index
    %56 = vector.load %arg7[%c0_54, %c1_55, %c2_56, %c0_57] : memref<1x10x10x8xf32, #tpu.memory_space<vmem>>, vector<1x8x8x8xf32>
    %57 = vector.shape_cast %56 : vector<1x8x8x8xf32> to vector<8x8x8xf32>
    %58 = vector.shape_cast %57 : vector<8x8x8xf32> to vector<64x8xf32>
    %c5 = arith.constant 5 : index
    %c0_58 = arith.constant 0 : index
    %c0_59 = arith.constant 0 : index
    %59 = vector.load %arg4[%c5, %c0_58, %c0_59] : memref<9x8x8xf32, #tpu.memory_space<vmem>>, vector<1x8x8xf32>
    %60 = vector.shape_cast %59 : vector<1x8x8xf32> to vector<8x8xf32>
    %cst_60 = arith.constant dense<0.000000e+00> : vector<64x8xf32>
    %61 = tpu.matmul %58, %60, %cst_60 {dimension_numbers = #tpu.dot_dimension_numbers<[1], [0], [0], [1], [0, 0, 1, 1], [], []>} : vector<64x8xf32>, vector<8x8xf32>, vector<64x8xf32> -> vector<64x8xf32>
    %62 = arith.addf %55, %61 : vector<64x8xf32>
    %c0_61 = arith.constant 0 : index
    %c2_62 = arith.constant 2 : index
    %c0_63 = arith.constant 0 : index
    %c0_64 = arith.constant 0 : index
    %63 = vector.load %arg7[%c0_61, %c2_62, %c0_63, %c0_64] : memref<1x10x10x8xf32, #tpu.memory_space<vmem>>, vector<1x8x8x8xf32>
    %64 = vector.shape_cast %63 : vector<1x8x8x8xf32> to vector<8x8x8xf32>
    %65 = vector.shape_cast %64 : vector<8x8x8xf32> to vector<64x8xf32>
    %c6 = arith.constant 6 : index
    %c0_65 = arith.constant 0 : index
    %c0_66 = arith.constant 0 : index
    %66 = vector.load %arg4[%c6, %c0_65, %c0_66] : memref<9x8x8xf32, #tpu.memory_space<vmem>>, vector<1x8x8xf32>
    %67 = vector.shape_cast %66 : vector<1x8x8xf32> to vector<8x8xf32>
    %cst_67 = arith.constant dense<0.000000e+00> : vector<64x8xf32>
    %68 = tpu.matmul %65, %67, %cst_67 {dimension_numbers = #tpu.dot_dimension_numbers<[1], [0], [0], [1], [0, 0, 1, 1], [], []>} : vector<64x8xf32>, vector<8x8xf32>, vector<64x8xf32> -> vector<64x8xf32>
    %69 = arith.addf %62, %68 : vector<64x8xf32>
    %c0_68 = arith.constant 0 : index
    %c2_69 = arith.constant 2 : index
    %c1_70 = arith.constant 1 : index
    %c0_71 = arith.constant 0 : index
    %70 = vector.load %arg7[%c0_68, %c2_69, %c1_70, %c0_71] : memref<1x10x10x8xf32, #tpu.memory_space<vmem>>, vector<1x8x8x8xf32>
    %71 = vector.shape_cast %70 : vector<1x8x8x8xf32> to vector<8x8x8xf32>
    %72 = vector.shape_cast %71 : vector<8x8x8xf32> to vector<64x8xf32>
    %c7 = arith.constant 7 : index
    %c0_72 = arith.constant 0 : index
    %c0_73 = arith.constant 0 : index
    %73 = vector.load %arg4[%c7, %c0_72, %c0_73] : memref<9x8x8xf32, #tpu.memory_space<vmem>>, vector<1x8x8xf32>
    %74 = vector.shape_cast %73 : vector<1x8x8xf32> to vector<8x8xf32>
    %cst_74 = arith.constant dense<0.000000e+00> : vector<64x8xf32>
    %75 = tpu.matmul %72, %74, %cst_74 {dimension_numbers = #tpu.dot_dimension_numbers<[1], [0], [0], [1], [0, 0, 1, 1], [], []>} : vector<64x8xf32>, vector<8x8xf32>, vector<64x8xf32> -> vector<64x8xf32>
    %76 = arith.addf %69, %75 : vector<64x8xf32>
    %c0_75 = arith.constant 0 : index
    %c2_76 = arith.constant 2 : index
    %c2_77 = arith.constant 2 : index
    %c0_78 = arith.constant 0 : index
    %77 = vector.load %arg7[%c0_75, %c2_76, %c2_77, %c0_78] : memref<1x10x10x8xf32, #tpu.memory_space<vmem>>, vector<1x8x8x8xf32>
    %78 = vector.shape_cast %77 : vector<1x8x8x8xf32> to vector<8x8x8xf32>
    %79 = vector.shape_cast %78 : vector<8x8x8xf32> to vector<64x8xf32>
    %c8 = arith.constant 8 : index
    %c0_79 = arith.constant 0 : index
    %c0_80 = arith.constant 0 : index
    %80 = vector.load %arg4[%c8, %c0_79, %c0_80] : memref<9x8x8xf32, #tpu.memory_space<vmem>>, vector<1x8x8xf32>
    %81 = vector.shape_cast %80 : vector<1x8x8xf32> to vector<8x8xf32>
    %cst_81 = arith.constant dense<0.000000e+00> : vector<64x8xf32>
    %82 = tpu.matmul %79, %81, %cst_81 {dimension_numbers = #tpu.dot_dimension_numbers<[1], [0], [0], [1], [0, 0, 1, 1], [], []>} : vector<64x8xf32>, vector<8x8xf32>, vector<64x8xf32> -> vector<64x8xf32>
    %83 = arith.addf %76, %82 : vector<64x8xf32>
    %c0_82 = arith.constant 0 : index
    %c0_83 = arith.constant 0 : index
    %c0_84 = arith.constant 0 : index
    %84 = vector.load %arg5[%c0_82, %c0_83, %c0_84] : memref<8x8x8xf32, #tpu.memory_space<vmem>>, vector<8x8x8xf32>
    %85 = vector.shape_cast %84 : vector<8x8x8xf32> to vector<64x8xf32>
    %86 = arith.addf %83, %85 : vector<64x8xf32>
    %87 = vector.shape_cast %86 : vector<64x8xf32> to vector<8x8x8xf32>
    %c0_85 = arith.constant 0 : index
    %c0_86 = arith.constant 0 : index
    %c0_87 = arith.constant 0 : index
    %88 = vector.load %arg6[%c0_85, %c0_86, %c0_87] : memref<8x8x8xf32, #tpu.memory_space<vmem>>, vector<8x8x8xf32>
    tpu.vector_store %arg6[%c0_85, %c0_86, %c0_87], %87 {strides = array<i32>} : memref<8x8x8xf32, #tpu.memory_space<vmem>>, vector<8x8x8xf32>,
    return
  }
  func.func @transform_0(%arg0: i32) -> (i32, i32, i32, i32) {
    %c0_i32 = arith.constant 0 : i32
    %c0_i32_0 = arith.constant 0 : i32
    %c0_i32_1 = arith.constant 0 : i32
    %c0_i32_2 = arith.constant 0 : i32
    return %arg0, %c0_i32, %c0_i32_0, %c0_i32_1 : i32, i32, i32, i32
  }
  func.func @transform_1(%arg0: i32) -> (i32, i32) {
    %c0_i32 = arith.constant 0 : i32
    %c0_i32_0 = arith.constant 0 : i32
    %c0_i32_1 = arith.constant 0 : i32
    return %c0_i32, %c0_i32_0 : i32, i32
  }
  func.func @transform_2(%arg0: i32) -> (i32, i32) {
    %c0_i32 = arith.constant 0 : i32
    %c0_i32_0 = arith.constant 0 : i32
    %c0_i32_1 = arith.constant 0 : i32
    return %c0_i32, %c0_i32_0 : i32, i32
  }
  func.func @transform_3(%arg0: i32) -> (i32, i32, i32) {
    %c0_i32 = arith.constant 0 : i32
    %c0_i32_0 = arith.constant 0 : i32
    %c0_i32_1 = arith.constant 0 : i32
    %c0_i32_2 = arith.constant 0 : i32
    return %c0_i32, %c0_i32_0, %c0_i32_1 : i32, i32, i32
  }
  func.func @transform_4(%arg0: i32) -> (i32, i32, i32) {
    %c0_i32 = arith.constant 0 : i32
    %c0_i32_0 = arith.constant 0 : i32
    %c0_i32_1 = arith.constant 0 : i32
    return %arg0, %c0_i32, %c0_i32_0 : i32, i32, i32
  }
  func.func @transform_5(%arg0: i32) -> (i32, i32, i32) {
    %c0_i32 = arith.constant 0 : i32
    %c0_i32_0 = arith.constant 0 : i32
    %c0_i32_1 = arith.constant 0 : i32
    return %arg0, %c0_i32, %c0_i32_0 : i32, i32, i32
  }
}

</mosaic_0001>

<llo_original>
// kernel: w_residual_forward.3
$region0: #{w_residual_forward.3}
  #allocation0 [shape = 'u32[]', space=smem, size = 0x4, offset = 0x4, fixed_abs, tag = 'smem constant byte address 0x4 - core index']
  #allocation1 [shape = 'u32[144,128]{1,0:T(1,128)}', space=vmem, size = 0x12000, scoped, tag = 'internal scratch']
  #allocation2 [shape = 'f32[1,10,10,8]{3,2,1,0:T(8,128)}', space=vmem, size = 0x14000, scoped, tag = 'scratch operand']
  %s0 = inlined_call_operand.vmem [shape: f32[2,8,8,8], index: 0, kind: input, shape index: {}]
  %s1 = inlined_call_operand.vmem [shape: f32[1,8], index: 1, kind: input, shape index: {}]
  %s2 = inlined_call_operand.vmem [shape: f32[1,8], index: 2, kind: input, shape index: {}]
  %s3 = inlined_call_operand.vmem [shape: f32[9,8,8], index: 3, kind: input, shape index: {}]
  %s4 = inlined_call_operand.vmem [shape: f32[16,8,8], index: 4, kind: input, shape index: {}]
  %s5 = inlined_call_operand.vmem [shape: f32[16,8,8], index: 5, kind: output, shape index: {}]
  %s6 = sld [smem:[#allocation0]]
  $region53: #{w_residual_forward.3} parent=0
    _
  %s8 = ssub.s32 1, %s6
  %s9 = scalar_select 0, %s8, %s6
  loop: start=0, step=1, limit=4
  $region2: #{w_residual_forward.3} parent=0 // loop_pre_header
    _
  $region3: #{w_residual_forward.3} parent=0 // loop_header
    %s11 = sphi 0, %s15
    %p12 = scmp.ge.s32.totalorder %s11, 4
    %s21 = sphi 0, %s23
    %s24 = sphi 0, %s21
    %s25 = sphi 0, %s24
    %s41 = sphi 0, %s25
    %s45 = sphi 0, %s45
    %s47 = sphi 0, %s45
    %s48 = sphi 0, %s47
    %s62 = sphi 0, %s48
    %s66 = sphi 0, %s66
    %s68 = sphi 0, %s66
    %s69 = sphi 0, %s68
    %s83 = sphi 0, %s69
    %s87 = sphi 0, %s87
    %s89 = sphi 0, %s87
    %s90 = sphi 0, %s89
    %s104 = sphi 0, %s90
    %s110 = sphi 0, %s112
    %s113 = sphi 0, %s110
    %s114 = sphi 0, %s113
    %s130 = sphi 0, %s114
    %s136 = sphi 0, %s138
    %s139 = sphi 0, %s136
    %s140 = sphi 0, %s139
    %s156 = sphi 0, %s140
  $region4: #{w_residual_forward.3} parent=0 // loop_header_branch
    %14 = sbr.rel (%p12) target = $region8
  $region5: #{w_residual_forward.3} parent=0 // loop_body
    %s16 = ssub.s32 %s11, 1
    %s17 = ssub.s32 %s11, 2
    %s18 = sadd.s32 %s11, 1
    %s19 = ssub.s32 %s11, %s18
    %p20 = scmp.eq.s32.totalorder %s19, 0
    %s22 = sadd.s32 %s21, 1
    %s23 = scalar_select %p20, %s21, %s22
    %p26 = pneg %p20
    %p27 = scmp.eq.s32.totalorder %s11, 1
    %p28 = por %p26, %p27
    %p29 = scmp.ne.s32.totalorder %s21, %s24
    %p30 = scmp.eq.s32.totalorder %s11, 0
    %p31 = por %p29, %p30
    %p32 = scmp.ne.s32.totalorder %s21, %s24
    %p33 = scmp.eq.s32.totalorder %s16, 1
    %p34 = por %p32, %p33
    %p35 = scmp.ne.s32.totalorder %s24, %s25
    %p36 = scmp.eq.s32.totalorder %s16, 0
    %p37 = por %p35, %p36
    %p38 = scmp.ne.s32.totalorder %s24, %s25
    %p39 = scmp.eq.s32.totalorder %s17, 1
    %p40 = por %p38, %p39
    %p42 = scmp.ne.s32.totalorder %s25, %s41
    %p43 = scmp.eq.s32.totalorder %s17, 0
    %p44 = por %p42, %p43
    %s46 = sadd.s32 %s45, 1
    %p49 = scmp.eq.s32.totalorder %s11, 1
    %p50 = scmp.ne.s32.totalorder %s45, %s47
    %p51 = scmp.eq.s32.totalorder %s11, 0
    %p52 = por %p50, %p51
    %p53 = scmp.ne.s32.totalorder %s45, %s47
    %p54 = scmp.eq.s32.totalorder %s16, 1
    %p55 = por %p53, %p54
    %p56 = scmp.ne.s32.totalorder %s47, %s48
    %p57 = scmp.eq.s32.totalorder %s16, 0
    %p58 = por %p56, %p57
    %p59 = scmp.ne.s32.totalorder %s47, %s48
    %p60 = scmp.eq.s32.totalorder %s17, 1
    %p61 = por %p59, %p60
    %p63 = scmp.ne.s32.totalorder %s48, %s62
    %p64 = scmp.eq.s32.totalorder %s17, 0
    %p65 = por %p63, %p64
    %s67 = sadd.s32 %s66, 1
    %p70 = scmp.eq.s32.totalorder %s11, 1
    %p71 = scmp.ne.s32.totalorder %s66, %s68
    %p72 = scmp.eq.s32.totalorder %s11, 0
    %p73 = por %p71, %p72
    %p74 = scmp.ne.s32.totalorder %s66, %s68
    %p75 = scmp.eq.s32.totalorder %s16, 1
    %p76 = por %p74, %p75
    %p77 = scmp.ne.s32.totalorder %s68, %s69
    %p78 = scmp.eq.s32.totalorder %s16, 0
    %p79 = por %p77, %p78
    %p80 = scmp.ne.s32.totalorder %s68, %s69
    %p81 = scmp.eq.s32.totalorder %s17, 1
    %p82 = por %p80, %p81
    %p84 = scmp.ne.s32.totalorder %s69, %s83
    %p85 = scmp.eq.s32.totalorder %s17, 0
    %p86 = por %p84, %p85
    %s88 = sadd.s32 %s87, 1
    %p91 = scmp.eq.s32.totalorder %s11, 1
    %p92 = scmp.ne.s32.totalorder %s87, %s89
    %p93 = scmp.eq.s32.totalorder %s11, 0
    %p94 = por %p92, %p93
    %p95 = scmp.ne.s32.totalorder %s87, %s89
    %p96 = scmp.eq.s32.totalorder %s16, 1
    %p97 = por %p95, %p96
    %p98 = scmp.ne.s32.totalorder %s89, %s90
    %p99 = scmp.eq.s32.totalorder %s16, 0
    %p100 = por %p98, %p99
    %p101 = scmp.ne.s32.totalorder %s89, %s90
    %p102 = scmp.eq.s32.totalorder %s17, 1
    %p103 = por %p101, %p102
    %p105 = scmp.ne.s32.totalorder %s90, %s104
    %p106 = scmp.eq.s32.totalorder %s17, 0
    %p107 = por %p105, %p106
    %s108 = ssub.s32 %s11, %s18
    %p109 = scmp.eq.s32.totalorder %s108, 0
    %s111 = sadd.s32 %s110, 1
    %s112 = scalar_select %p109, %s110, %s111
    %p115 = pneg %p109
    %p116 = scmp.eq.s32.totalorder %s11, 1
    %p117 = por %p115, %p116
    %p118 = scmp.ne.s32.totalorder %s110, %s113
    %p119 = scmp.eq.s32.totalorder %s11, 0
    %p120 = por %p118, %p119
    %p121 = scmp.ne.s32.totalorder %s110, %s113
    %p122 = scmp.eq.s32.totalorder %s16, 1
    %p123 = por %p121, %p122
    %p124 = scmp.ne.s32.totalorder %s113, %s114
    %p125 = scmp.eq.s32.totalorder %s16, 0
    %p126 = por %p124, %p125
    %p127 = scmp.ne.s32.totalorder %s113, %s114
    %p128 = scmp.eq.s32.totalorder %s17, 1
    %p129 = por %p127, %p128
    %p131 = scmp.ne.s32.totalorder %s114, %s130
    %p132 = scmp.eq.s32.totalorder %s17, 0
    %p133 = por %p131, %p132
    %s134 = ssub.s32 %s11, %s18
    %p135 = scmp.eq.s32.totalorder %s134, 0
    %s137 = sadd.s32 %s136, 1
    %s138 = scalar_select %p135, %s136, %s137
    %p141 = pneg %p135
    %p142 = scmp.eq.s32.totalorder %s11, 1
    %p143 = por %p141, %p142
    %p144 = scmp.ne.s32.totalorder %s136, %s139
    %p145 = scmp.eq.s32.totalorder %s11, 0
    %p146 = por %p144, %p145
    %p147 = scmp.ne.s32.totalorder %s136, %s139
    %p148 = scmp.eq.s32.totalorder %s16, 1
    %p149 = por %p147, %p148
    %p150 = scmp.ne.s32.totalorder %s139, %s140
    %p151 = scmp.eq.s32.totalorder %s16, 0
    %p152 = por %p150, %p151
    %p153 = scmp.ne.s32.totalorder %s139, %s140
    %p154 = scmp.eq.s32.totalorder %s17, 1
    %p155 = por %p153, %p154
    %p157 = scmp.ne.s32.totalorder %s140, %s156
    %p158 = scmp.eq.s32.totalorder %s17, 0
    %p159 = por %p157, %p158
    %p160 = scmp.le.s32.totalorder 1, %s11
    %p161 = scmp.lt.s32.totalorder %s11, 3
    %p162 = pnand %p160, %p161
    %p163 = pneg %p162
    // Predicated region
    $region9: #{w_residual_forward.3} parent=5 // pred_check
      _
    $region10: #{w_residual_forward.3} parent=5 // pred_check_branch
      %165 = sbr.rel (%p162) target = $region12
    $region11: #{w_residual_forward.3} parent=5 // pred_region
      %s166 = ssub.s32 %s11, 1
      // Predicated region
      $region13: #{w_residual_forward.3} parent=11 // pred_check
        %p167 = pneg %p58
      $region14: #{w_residual_forward.3} parent=11 // pred_check_branch
        %169 = sbr.rel (%p167) target = $region16
      $region15: #{w_residual_forward.3} parent=11 // pred_region
        _
      $region16: #{w_residual_forward.3} parent=11 // pred_fallthru
        _
      // Predicated region
      $region17: #{w_residual_forward.3} parent=11 // pred_check
        %p170 = pneg %p79
      $region18: #{w_residual_forward.3} parent=11 // pred_check_branch
        %172 = sbr.rel (%p170) target = $region20
      $region19: #{w_residual_forward.3} parent=11 // pred_region
        _
      $region20: #{w_residual_forward.3} parent=11 // pred_fallthru
        _
      // Predicated region
      $region21: #{w_residual_forward.3} parent=11 // pred_check
        %p173 = pneg %p100
      $region22: #{w_residual_forward.3} parent=11 // pred_check_branch
        %175 = sbr.rel (%p173) target = $region24
      $region23: #{w_residual_forward.3} parent=11 // pred_region
        _
      $region24: #{w_residual_forward.3} parent=11 // pred_fallthru
        _
    $region12: #{w_residual_forward.3} parent=5 // pred_fallthru
      _
    %p176 = scmp.lt.s32.totalorder %s11, 2
    // Predicated region
    $region25: #{w_residual_forward.3} parent=5 // pred_check
      %p177 = pneg %p176
    $region26: #{w_residual_forward.3} parent=5 // pred_check_branch
      %179 = sbr.rel (%p177) target = $region28
    $region27: #{w_residual_forward.3} parent=5 // pred_region
      // Predicated region
      $region29: #{w_residual_forward.3} parent=27 // pred_check
        %p180 = pneg %p31
      $region30: #{w_residual_forward.3} parent=27 // pred_check_branch
        %182 = sbr.rel (%p180) target = $region32
      $region31: #{w_residual_forward.3} parent=27 // pred_region
        %p183 = scmp.lt.s32.totalorder %s11, 1
        %s184 = scalar_select %p183, %s11, 1
        %s185 = smul.addr %s184, 8
        %s186 = smul.addr %s185, 8
        %s187 = scalar_lea.vmem %s0, %s186
      $region32: #{w_residual_forward.3} parent=27 // pred_fallthru
        _
      // Predicated region
      $region33: #{w_residual_forward.3} parent=27 // pred_check
        %p188 = pneg %p120
      $region34: #{w_residual_forward.3} parent=27 // pred_check_branch
        %190 = sbr.rel (%p188) target = $region36
      $region35: #{w_residual_forward.3} parent=27 // pred_region
        %s191 = smul.u32 8, %s11
        %p192 = scmp.lt.s32.totalorder %s191, 15
        %s193 = scalar_select %p192, %s191, 15
        %s194 = smul.addr %s193, 8
        %s195 = scalar_lea.vmem %s4, %s194
        %s196 = smul.u32 8, %s11
      $region36: #{w_residual_forward.3} parent=27 // pred_fallthru
        _
    $region28: #{w_residual_forward.3} parent=5 // pred_fallthru
      _
    %p197 = scmp.le.s32.totalorder 1, %s11
    %p198 = scmp.lt.s32.totalorder %s11, 3
    %p199 = pnand %p197, %p198
    %p200 = pneg %p199
    // Predicated region
    $region37: #{w_residual_forward.3} parent=5 // pred_check
      _
    $region38: #{w_residual_forward.3} parent=5 // pred_check_branch
      %202 = sbr.rel (%p199) target = $region40
    $region39: #{w_residual_forward.3} parent=5 // pred_region
      %s203 = ssub.s32 %s11, 1
      %p204 = scmp.lt.s32.totalorder %s16, 1
      %s205 = scalar_select %p204, %s16, 1
      %s206 = smul.addr %s205, 8
      %s207 = smul.addr %s206, 8
      %s208 = scalar_lea.vmem %s0, %s207
      %p209 = pneg %p37
      %p210 = pneg %p34
      %p211 = pneg %p58
      %p212 = pneg %p55
      %p213 = pneg %p79
      %p214 = pneg %p76
      %p215 = pneg %p100
      %p216 = pneg %p97
      %s217 = smul.u32 8, %s16
      %p218 = scmp.lt.s32.totalorder %s217, 15
      %s219 = scalar_select %p218, %s217, 15
      %s220 = smul.addr %s219, 8
      %s221 = scalar_lea.vmem %s4, %s220
      %p222 = pneg %p126
      %p223 = pneg %p123
      %p224 = pneg %p152
      %p225 = pneg %p149
      %s226 = smul.u32 8, %s16
      %p227 = scmp.lt.s32.totalorder %s226, 15
      %s228 = scalar_select %p227, %s226, 15
      %s229 = smul.addr %s228, 8
      %s230 = scalar_lea.vmem %s5, %s229
      %p231 = scmp.lt.s32.totalorder %s16, 1
      %s232 = scalar_select %p231, %s16, 1
      %s233 = smul.addr %s232, 8
      %s234 = smul.addr %s233, 8
      %s235 = scalar_lea.vmem %s0, %s234
      %s236 = smul.u32 8, %s16
      %p237 = scmp.lt.s32.totalorder %s236, 15
      %s238 = scalar_select %p237, %s236, 15
      %s239 = smul.addr %s238, 8
      %s240 = scalar_lea.vmem %s4, %s239
      %s241 = smul.u32 8, %s16
      %s242 = smul.u32 8, %s16
      %p243 = scmp.lt.s32.totalorder %s242, 15
      %s244 = scalar_select %p243, %s242, 15
      %s245 = smul.addr %s244, 8
      %s246 = scalar_lea.vmem %s5, %s245
      %s247 = smul.u32 8, %s16
      %vm248 = vcmask 64512
      %249 = vst.msk [vmem:[#allocation2] sm:$0xff] %vm248, 0.0
      %vm250 = vcmask 58368
      %251 = vst.msk [vmem:[#allocation2 + $0x8] sm:$0x3] %vm250, 0.0
      %252 = vst.msk [vmem:[#allocation2 + $0x10] sm:$0xff] %vm248, 0.0
      %253 = vst.msk [vmem:[#allocation2 + $0x18] sm:$0x3] %vm250, 0.0
      %254 = vst.msk [vmem:[#allocation2 + $0x20] sm:$0xff] %vm248, 0.0
      %255 = vst.msk [vmem:[#allocation2 + $0x28] sm:$0x3] %vm250, 0.0
      %256 = vst.msk [vmem:[#allocation2 + $0x30] sm:$0xff] %vm248, 0.0
      %257 = vst.msk [vmem:[#allocation2 + $0x38] sm:$0x3] %vm250, 0.0
      %258 = vst.msk [vmem:[#allocation2 + $0x40] sm:$0xff] %vm248, 0.0
      %259 = vst.msk [vmem:[#allocation2 + $0x48] sm:$0x3] %vm250, 0.0
      %260 = vst.msk [vmem:[#allocation2 + $0x50] sm:$0xff] %vm248, 0.0
      %261 = vst.msk [vmem:[#allocation2 + $0x58] sm:$0x3] %vm250, 0.0
      %262 = vst.msk [vmem:[#allocation2 + $0x60] sm:$0xff] %vm248, 0.0
      %263 = vst.msk [vmem:[#allocation2 + $0x68] sm:$0x3] %vm250, 0.0
      %264 = vst.msk [vmem:[#allocation2 + $0x70] sm:$0xff] %vm248, 0.0
      %265 = vst.msk [vmem:[#allocation2 + $0x78] sm:$0x3] %vm250, 0.0
      %266 = vst.msk [vmem:[#allocation2 + $0x80] sm:$0xff] %vm248, 0.0
      %267 = vst.msk [vmem:[#allocation2 + $0x88] sm:$0x3] %vm250, 0.0
      %268 = vst.msk [vmem:[#allocation2 + $0x90] sm:$0xff] %vm248, 0.0
      %269 = vst.msk [vmem:[#allocation2 + $0x98] sm:$0x3] %vm250, 0.0
      %v270 = vld [vmem:[%s1] sm:$0x1]
      %v271 = vld [vmem:[%s2] sm:$0x1]
      %v272 = vld [vmem:[%s235] sm:$0xff]
      %v273 = vld [vmem:[%s235 + $0x8] sm:$0xff]
      %v274 = vld [vmem:[%s235 + $0x10] sm:$0xff]
      %v275 = vld [vmem:[%s235 + $0x18] sm:$0xff]
      %v276 = vld [vmem:[%s235 + $0x20] sm:$0xff]
      %v277 = vld [vmem:[%s235 + $0x28] sm:$0xff]
      %v278 = vld [vmem:[%s235 + $0x30] sm:$0xff]
      %v279 = vld [vmem:[%s235 + $0x38] sm:$0xff]
      %v281 = vlaneseq
      %v282 = vshrl.u32 %v281, 7
      %v283 = vsub.s32 0, %v282
      %v284 = vrot.slane %v270, %v283
      %v286 = vmul.f32 %v272, %v284
      %v287 = vmul.f32 %v273, %v284
      %v288 = vmul.f32 %v274, %v284
      %v289 = vmul.f32 %v275, %v284
      %v290 = vmul.f32 %v276, %v284
      %v291 = vmul.f32 %v277, %v284
      %v292 = vmul.f32 %v278, %v284
      %v293 = vmul.f32 %v279, %v284
      %v295 = vlaneseq
      %v296 = vshrl.u32 %v295, 7
      %v297 = vsub.s32 0, %v296
      %v298 = vrot.slane %v271, %v297
      %v300 = vadd.f32 %v286, %v298
      %v301 = vadd.f32 %v287, %v298
      %v302 = vadd.f32 %v288, %v298
      %v303 = vadd.f32 %v289, %v298
      %v304 = vadd.f32 %v290, %v298
      %v305 = vadd.f32 %v291, %v298
      %v306 = vadd.f32 %v292, %v298
      %v307 = vadd.f32 %v293, %v298
      %vm308 = vcmp.ge.f32.partialorder %v300, 0.0
      %vm309 = vcmp.ge.f32.partialorder %v301, 0.0
      %vm310 = vcmp.ge.f32.partialorder %v302, 0.0
      %vm311 = vcmp.ge.f32.partialorder %v303, 0.0
      %vm312 = vcmp.ge.f32.partialorder %v304, 0.0
      %vm313 = vcmp.ge.f32.partialorder %v305, 0.0
      %vm314 = vcmp.ge.f32.partialorder %v306, 0.0
      %vm315 = vcmp.ge.f32.partialorder %v307, 0.0
      %v316 = vmul.f32 %v300, 0.1
      %v317 = vmul.f32 %v301, 0.1
      %v318 = vmul.f32 %v302, 0.1
      %v319 = vmul.f32 %v303, 0.1
      %v320 = vmul.f32 %v304, 0.1
      %v321 = vmul.f32 %v305, 0.1
      %v322 = vmul.f32 %v306, 0.1
      %v323 = vmul.f32 %v307, 0.1
      %v324 = vsel %vm308, %v300, %v316
      %v325 = vsel %vm309, %v301, %v317
      %v326 = vsel %vm310, %v302, %v318
      %v327 = vsel %vm311, %v303, %v319
      %v328 = vsel %vm312, %v304, %v320
      %v329 = vsel %vm313, %v305, %v321
      %v330 = vsel %vm314, %v306, %v322
      %v331 = vsel %vm315, %v307, %v323
      %s332 = scalar_lea.vmem [#allocation2], 16
      %333 = vst.msk [vmem:[%s332 + $0x1] sm:$0xff] %vm248, %v324
      %334 = vst.msk [vmem:[%s332 + $0x11] sm:$0xff] %vm248, %v325
      %335 = vst.msk [vmem:[%s332 + $0x21] sm:$0xff] %vm248, %v326
      %336 = vst.msk [vmem:[%s332 + $0x31] sm:$0xff] %vm248, %v327
      %337 = vst.msk [vmem:[%s332 + $0x41] sm:$0xff] %vm248, %v328
      %338 = vst.msk [vmem:[%s332 + $0x51] sm:$0xff] %vm248, %v329
      %339 = vst.msk [vmem:[%s332 + $0x61] sm:$0xff] %vm248, %v330
      %340 = vst.msk [vmem:[%s332 + $0x71] sm:$0xff] %vm248, %v331
      %v341 = vld [vmem:[#allocation2] sm:$0xff]
      %v342 = vld [vmem:[#allocation2 + $0x10] sm:$0xff]
      %v343 = vld [vmem:[#allocation2 + $0x20] sm:$0xff]
      %v344 = vld [vmem:[#allocation2 + $0x30] sm:$0xff]
      %v345 = vld [vmem:[#allocation2 + $0x40] sm:$0xff]
      %v346 = vld [vmem:[#allocation2 + $0x50] sm:$0xff]
      %v347 = vld [vmem:[#allocation2 + $0x60] sm:$0xff]
      %v348 = vld [vmem:[#allocation2 + $0x70] sm:$0xff]
      %v349 = vld [vmem:[%s3] sm:$0xff]
      %v350 = vld [vmem:[#allocation2 + $0x1] sm:$0xff]
      %v351 = vld [vmem:[#allocation2 + $0x11] sm:$0xff]
      %v352 = vld [vmem:[#allocation2 + $0x21] sm:$0xff]
      %v353 = vld [vmem:[#allocation2 + $0x31] sm:$0xff]
      %v354 = vld [vmem:[#allocation2 + $0x41] sm:$0xff]
      %v355 = vld [vmem:[#allocation2 + $0x51] sm:$0xff]
      %v356 = vld [vmem:[#allocation2 + $0x61] sm:$0xff]
      %v357 = vld [vmem:[#allocation2 + $0x71] sm:$0xff]
      %s358 = scalar_lea.vmem %s3, 8
      %v359 = vld [vmem:[%s358] sm:$0xff]
      %v361 = vsel %vm248, %v350, 0
      %v364 = vsel %vm248, %v351, 0
      %v367 = vsel %vm248, %v352, 0
      %v370 = vsel %vm248, %v353, 0
      %v373 = vsel %vm248, %v354, 0
      %v376 = vsel %vm248, %v355, 0
      %v379 = vsel %vm248, %v356, 0
      %v382 = vsel %vm248, %v357, 0
      %384 = vmatprep.subr.mxu0 0.0
      %385 = vmatpush1.msra.mxu0 %v359
      %386 = vmatprep.subr.mxu0 0.0
      %387 = vmatpush1.msra.mxu0 0.0
      %388 = vmatprep.subr.mxu0 0.0
      %389 = vmatpush1.msra.mxu0 0.0
      %390 = vmatprep.subr.mxu0 0.0
      %391 = vmatpush1.msra.mxu0 0.0
      %392 = vmatprep.subr.mxu0 0.0
      %393 = vmatpush1.msra.mxu0 0.0
      %394 = vmatprep.subr.mxu0 0.0
      %395 = vmatpush1.msra.mxu0 0.0
      %396 = vmatprep.subr.mxu0 0.0
      %397 = vmatpush1.msra.mxu0 0.0
      %398 = vmatprep.subr.mxu0 0.0
      %399 = vmatpush1.msra.mxu0 0.0
      %400 = vmatprep.subr.mxu0 0.0
      %401 = vmatpush1.msra.mxu0 0.0
      %402 = vmatprep.subr.mxu0 0.0
      %403 = vmatpush1.msra.mxu0 0.0
      %404 = vmatprep.subr.mxu0 0.0
      %405 = vmatpush1.msra.mxu0 0.0
      %406 = vmatprep.subr.mxu0 0.0
      %407 = vmatpush1.msra.mxu0 0.0
      %408 = vmatprep.subr.mxu0 0.0
      %409 = vmatpush1.msra.mxu0 0.0
      %410 = vmatprep.subr.mxu0 0.0
      %411 = vmatpush1.msra.mxu0 0.0
      %412 = vmatprep.subr.mxu0 0.0
      %413 = vmatpush1.msra.mxu0 0.0
      %414 = vmatprep.subr.mxu0 0.0
      %415 = vmatpush1.msra.mxu0 0.0
      %416 = vmatprep.subr.mxu0 0.0
      %417 = vmatpush1.msra.mxu0 0.0
      %418 = vmatprep.subr.mxu0 0.0
      %419 = vmatpush1.msra.mxu0 0.0
      %420 = vmatprep.subr.mxu0 0.0
      %421 = vmatpush1.msra.mxu0 0.0
      %422 = vmatprep.subr.mxu0 0.0
      %423 = vmatpush1.msra.mxu0 0.0
      %424 = vmatprep.subr.mxu0 0.0
      %425 = vmatpush1.msra.mxu0 0.0
      %426 = vmatprep.subr.mxu0 0.0
      %427 = vmatpush1.msra.mxu0 0.0
      %428 = vmatprep.subr.mxu0 0.0
      %429 = vmatpush1.msra.mxu0 0.0
      %430 = vmatprep.subr.mxu0 0.0
      %431 = vmatpush1.msra.mxu0 0.0
      %432 = vmatprep.subr.mxu0 0.0
      %433 = vmatpush1.msra.mxu0 0.0
      %434 = vmatprep.subr.mxu0 0.0
      %435 = vmatpush1.msra.mxu0 0.0
      %436 = vmatprep.subr.mxu0 0.0
      %437 = vmatpush1.msra.mxu0 0.0
      %438 = vmatprep.subr.mxu0 0.0
      %439 = vmatpush1.msra.mxu0 0.0
      %440 = vmatprep.subr.mxu0 0.0
      %441 = vmatpush1.msra.mxu0 0.0
      %442 = vmatprep.subr.mxu0 0.0
      %443 = vmatpush1.msra.mxu0 0.0
      %444 = vmatprep.subr.mxu0 0.0
      %445 = vmatpush1.msra.mxu0 0.0
      %446 = vmatprep.subr.mxu0 0.0
      %447 = vmatpush1.msra.mxu0 0.0
      %448 = vmatprep.mubr.f32.mxu0 0.0
      %449 = vmatmul.mubr.f32.gmra.mrb[0].mxu0 %v361
      %v450 = vpop.f32.mrb[0].mxu0
      %v451 = vadd.f32 0.0, %v450
      %v452 = vpop.f32.mrb[0].mxu0
      %453 = vmatprep.mubr.f32.mxu0 0.0
      %454 = vmatmul.mubr.f32.gmra.mrb[0].mxu0 %v364
      %v455 = vpop.f32.mrb[0].mxu0
      %v456 = vadd.f32 0.0, %v455
      %v457 = vpop.f32.mrb[0].mxu0
      %458 = vmatprep.mubr.f32.mxu0 0.0
      %459 = vmatmul.mubr.f32.gmra.mrb[0].mxu0 %v367
      %v460 = vpop.f32.mrb[0].mxu0
      %v461 = vadd.f32 0.0, %v460
      %v462 = vpop.f32.mrb[0].mxu0
      %463 = vmatprep.mubr.f32.mxu0 0.0
      %464 = vmatmul.mubr.f32.gmra.mrb[0].mxu0 %v370
      %v465 = vpop.f32.mrb[0].mxu0
      %v466 = vadd.f32 0.0, %v465
      %v467 = vpop.f32.mrb[0].mxu0
      %468 = vmatprep.mubr.f32.mxu0 0.0
      %469 = vmatmul.mubr.f32.gmra.mrb[0].mxu0 %v373
      %v470 = vpop.f32.mrb[0].mxu0
      %v471 = vadd.f32 0.0, %v470
      %v472 = vpop.f32.mrb[0].mxu0
      %473 = vmatprep.mubr.f32.mxu0 0.0
      %474 = vmatmul.mubr.f32.gmra.mrb[0].mxu0 %v376
      %v475 = vpop.f32.mrb[0].mxu0
      %v476 = vadd.f32 0.0, %v475
      %v477 = vpop.f32.mrb[0].mxu0
      %478 = vmatprep.mubr.f32.mxu0 0.0
      %479 = vmatmul.mubr.f32.gmra.mrb[0].mxu0 %v379
      %v480 = vpop.f32.mrb[0].mxu0
      %v481 = vadd.f32 0.0, %v480
      %v482 = vpop.f32.mrb[0].mxu0
      %483 = vmatprep.mubr.f32.mxu0 0.0
      %484 = vmatmul.mubr.f32.gmra.mrb[0].mxu0 %v382
      %v485 = vpop.f32.mrb[0].mxu0
      %v486 = vadd.f32 0.0, %v485
      %v487 = vpop.f32.mrb[0].mxu0
      %488 = vdwg.mxu0
      %v490 = vsel %vm248, %v341, 0
      %v493 = vsel %vm248, %v342, 0
      %v496 = vsel %vm248, %v343, 0
      %v499 = vsel %vm248, %v344, 0
      %v502 = vsel %vm248, %v345, 0
      %v505 = vsel %vm248, %v346, 0
      %v508 = vsel %vm248, %v347, 0
      %v511 = vsel %vm248, %v348, 0
      %513 = vmatprep.subr.mxu0 0.0
      %514 = vmatpush1.msra.mxu0 %v349
      %515 = vmatprep.subr.mxu0 0.0
      %516 = vmatpush1.msra.mxu0 0.0
      %517 = vmatprep.subr.mxu0 0.0
      %518 = vmatpush1.msra.mxu0 0.0
      %519 = vmatprep.subr.mxu0 0.0
      %520 = vmatpush1.msra.mxu0 0.0
      %521 = vmatprep.subr.mxu0 0.0
      %522 = vmatpush1.msra.mxu0 0.0
      %523 = vmatprep.subr.mxu0 0.0
      %524 = vmatpush1.msra.mxu0 0.0
      %525 = vmatprep.subr.mxu0 0.0
      %526 = vmatpush1.msra.mxu0 0.0
      %527 = vmatprep.subr.mxu0 0.0
      %528 = vmatpush1.msra.mxu0 0.0
      %529 = vmatprep.subr.mxu0 0.0
      %530 = vmatpush1.msra.mxu0 0.0
      %531 = vmatprep.subr.mxu0 0.0
      %532 = vmatpush1.msra.mxu0 0.0
      %533 = vmatprep.subr.mxu0 0.0
      %534 = vmatpush1.msra.mxu0 0.0
      %535 = vmatprep.subr.mxu0 0.0
      %536 = vmatpush1.msra.mxu0 0.0
      %537 = vmatprep.subr.mxu0 0.0
      %538 = vmatpush1.msra.mxu0 0.0
      %539 = vmatprep.subr.mxu0 0.0
      %540 = vmatpush1.msra.mxu0 0.0
      %541 = vmatprep.subr.mxu0 0.0
      %542 = vmatpush1.msra.mxu0 0.0
      %543 = vmatprep.subr.mxu0 0.0
      %544 = vmatpush1.msra.mxu0 0.0
      %545 = vmatprep.subr.mxu0 0.0
      %546 = vmatpush1.msra.mxu0 0.0
      %547 = vmatprep.subr.mxu0 0.0
      %548 = vmatpush1.msra.mxu0 0.0
      %549 = vmatprep.subr.mxu0 0.0
      %550 = vmatpush1.msra.mxu0 0.0
      %551 = vmatprep.subr.mxu0 0.0
      %552 = vmatpush1.msra.mxu0 0.0
      %553 = vmatprep.subr.mxu0 0.0
      %554 = vmatpush1.msra.mxu0 0.0
      %555 = vmatprep.subr.mxu0 0.0
      %556 = vmatpush1.msra.mxu0 0.0
      %557 = vmatprep.subr.mxu0 0.0
      %558 = vmatpush1.msra.mxu0 0.0
      %559 = vmatprep.subr.mxu0 0.0
      %560 = vmatpush1.msra.mxu0 0.0
      %561 = vmatprep.subr.mxu0 0.0
      %562 = vmatpush1.msra.mxu0 0.0
      %563 = vmatprep.subr.mxu0 0.0
      %564 = vmatpush1.msra.mxu0 0.0
      %565 = vmatprep.subr.mxu0 0.0
      %566 = vmatpush1.msra.mxu0 0.0
      %567 = vmatprep.subr.mxu0 0.0
      %568 = vmatpush1.msra.mxu0 0.0
      %569 = vmatprep.subr.mxu0 0.0
      %570 = vmatpush1.msra.mxu0 0.0
      %571 = vmatprep.subr.mxu0 0.0
      %572 = vmatpush1.msra.mxu0 0.0
      %573 = vmatprep.subr.mxu0 0.0
      %574 = vmatpush1.msra.mxu0 0.0
      %575 = vmatprep.subr.mxu0 0.0
      %576 = vmatpush1.msra.mxu0 0.0
      %577 = vmatprep.mubr.f32.mxu0 0.0
      %578 = vmatmul.mubr.f32.gmra.mrb[0].mxu0 %v490
      %v579 = vpop.f32.mrb[0].mxu0
      %v580 = vadd.f32 %v451, %v579
      %v581 = vpop.f32.mrb[0].mxu0
      %582 = vmatprep.mubr.f32.mxu0 0.0
      %583 = vmatmul.mubr.f32.gmra.mrb[0].mxu0 %v493
      %v584 = vpop.f32.mrb[0].mxu0
      %v585 = vadd.f32 %v456, %v584
      %v586 = vpop.f32.mrb[0].mxu0
      %587 = vmatprep.mubr.f32.mxu0 0.0
      %588 = vmatmul.mubr.f32.gmra.mrb[0].mxu0 %v496
      %v589 = vpop.f32.mrb[0].mxu0
      %v590 = vadd.f32 %v461, %v589
      %v591 = vpop.f32.mrb[0].mxu0
      %592 = vmatprep.mubr.f32.mxu0 0.0
      %593 = vmatmul.mubr.f32.gmra.mrb[0].mxu0 %v499
      %v594 = vpop.f32.mrb[0].mxu0
      %v595 = vadd.f32 %v466, %v594
      %v596 = vpop.f32.mrb[0].mxu0
      %597 = vmatprep.mubr.f32.mxu0 0.0
      %598 = vmatmul.mubr.f32.gmra.mrb[0].mxu0 %v502
      %v599 = vpop.f32.mrb[0].mxu0
      %v600 = vadd.f32 %v471, %v599
      %v601 = vpop.f32.mrb[0].mxu0
      %602 = vmatprep.mubr.f32.mxu0 0.0
      %603 = vmatmul.mubr.f32.gmra.mrb[0].mxu0 %v505
      %v604 = vpop.f32.mrb[0].mxu0
      %v605 = vadd.f32 %v476, %v604
      %v606 = vpop.f32.mrb[0].mxu0
      %607 = vmatprep.mubr.f32.mxu0 0.0
      %608 = vmatmul.mubr.f32.gmra.mrb[0].mxu0 %v508
      %v609 = vpop.f32.mrb[0].mxu0
      %v610 = vadd.f32 %v481, %v609
      %v611 = vpop.f32.mrb[0].mxu0
      %612 = vmatprep.mubr.f32.mxu0 0.0
      %613 = vmatmul.mubr.f32.gmra.mrb[0].mxu0 %v511
      %v614 = vpop.f32.mrb[0].mxu0
      %v615 = vadd.f32 %v486, %v614
      %v616 = vpop.f32.mrb[0].mxu0
      %617 = vdwg.mxu0
      %v618 = vld [vmem:[#allocation2 + $0x2] sm:$0xff]
      %v619 = vld [vmem:[#allocation2 + $0x12] sm:$0xff]
      %v620 = vld [vmem:[#allocation2 + $0x22] sm:$0xff]
      %v621 = vld [vmem:[#allocation2 + $0x32] sm:$0xff]
      %v622 = vld [vmem:[#allocation2 + $0x42] sm:$0xff]
      %v623 = vld [vmem:[#allocation2 + $0x52] sm:$0xff]
      %v624 = vld [vmem:[#allocation2 + $0x62] sm:$0xff]
      %v625 = vld [vmem:[#allocation2 + $0x72] sm:$0xff]
      %s626 = scalar_lea.vmem %s3, 16
      %v627 = vld [vmem:[%s626] sm:$0xff]
      %v629 = vsel %vm248, %v618, 0
      %v632 = vsel %vm248, %v619, 0
      %v635 = vsel %vm248, %v620, 0
      %v638 = vsel %vm248, %v621, 0
      %v641 = vsel %vm248, %v622, 0
      %v644 = vsel %vm248, %v623, 0
      %v647 = vsel %vm248, %v624, 0
      %v650 = vsel %vm248, %v625, 0
      %652 = vmatprep.subr.mxu0 0.0
      %653 = vmatpush1.msra.mxu0 %v627
      %654 = vmatprep.subr.mxu0 0.0
      %655 = vmatpush1.msra.mxu0 0.0
      %656 = vmatprep.subr.mxu0 0.0
      %657 = vmatpush1.msra.mxu0 0.0
      %658 = vmatprep.subr.mxu0 0.0
      %659 = vmatpush1.msra.mxu0 0.0
      %660 = vmatprep.subr.mxu0 0.0
      %661 = vmatpush1.msra.mxu0 0.0
      %662 = vmatprep.subr.mxu0 0.0
      %663 = vmatpush1.msra.mxu0 0.0
      %664 = vmatprep.subr.mxu0 0.0
      %665 = vmatpush1.msra.mxu0 0.0
      %666 = vmatprep.subr.mxu0 0.0
      %667 = vmatpush1.msra.mxu0 0.0
      %668 = vmatprep.subr.mxu0 0.0
      %669 = vmatpush1.msra.mxu0 0.0
      %670 = vmatprep.subr.mxu0 0.0
      %671 = vmatpush1.msra.mxu0 0.0
      %672 = vmatprep.subr.mxu0 0.0
      %673 = vmatpush1.msra.mxu0 0.0
      %674 = vmatprep.subr.mxu0 0.0
      %675 = vmatpush1.msra.mxu0 0.0
      %676 = vmatprep.subr.mxu0 0.0
      %677 = vmatpush1.msra.mxu0 0.0
      %678 = vmatprep.subr.mxu0 0.0
      %679 = vmatpush1.msra.mxu0 0.0
      %680 = vmatprep.subr.mxu0 0.0
      %681 = vmatpush1.msra.mxu0 0.0
      %682 = vmatprep.subr.mxu0 0.0
      %683 = vmatpush1.msra.mxu0 0.0
      %684 = vmatprep.subr.mxu0 0.0
      %685 = vmatpush1.msra.mxu0 0.0
      %686 = vmatprep.subr.mxu0 0.0
      %687 = vmatpush1.msra.mxu0 0.0
      %688 = vmatprep.subr.mxu0 0.0
      %689 = vmatpush1.msra.mxu0 0.0
      %690 = vmatprep.subr.mxu0 0.0
      %691 = vmatpush1.msra.mxu0 0.0
      %692 = vmatprep.subr.mxu0 0.0
      %693 = vmatpush1.msra.mxu0 0.0
      %694 = vmatprep.subr.mxu0 0.0
      %695 = vmatpush1.msra.mxu0 0.0
      %696 = vmatprep.subr.mxu0 0.0
      %697 = vmatpush1.msra.mxu0 0.0
      %698 = vmatprep.subr.mxu0 0.0
      %699 = vmatpush1.msra.mxu0 0.0
      %700 = vmatprep.subr.mxu0 0.0
      %701 = vmatpush1.msra.mxu0 0.0
      %702 = vmatprep.subr.mxu0 0.0
      %703 = vmatpush1.msra.mxu0 0.0
      %704 = vmatprep.subr.mxu0 0.0
      %705 = vmatpush1.msra.mxu0 0.0
      %706 = vmatprep.subr.mxu0 0.0
      %707 = vmatpush1.msra.mxu0 0.0
      %708 = vmatprep.subr.mxu0 0.0
      %709 = vmatpush1.msra.mxu0 0.0
      %710 = vmatprep.subr.mxu0 0.0
      %711 = vmatpush1.msra.mxu0 0.0
      %712 = vmatprep.subr.mxu0 0.0
      %713 = vmatpush1.msra.mxu0 0.0
      %714 = vmatprep.subr.mxu0 0.0
      %715 = vmatpush1.msra.mxu0 0.0
      %716 = vmatprep.mubr.f32.mxu0 0.0
      %717 = vmatmul.mubr.f32.gmra.mrb[0].mxu0 %v629
      %v718 = vpop.f32.mrb[0].mxu0
      %v719 = vadd.f32 0.0, %v718
      %v720 = vpop.f32.mrb[0].mxu0
      %721 = vmatprep.mubr.f32.mxu0 0.0
      %722 = vmatmul.mubr.f32.gmra.mrb[0].mxu0 %v632
      %v723 = vpop.f32.mrb[0].mxu0
      %v724 = vadd.f32 0.0, %v723
      %v725 = vpop.f32.mrb[0].mxu0
      %726 = vmatprep.mubr.f32.mxu0 0.0
      %727 = vmatmul.mubr.f32.gmra.mrb[0].mxu0 %v635
      %v728 = vpop.f32.mrb[0].mxu0
      %v729 = vadd.f32 0.0, %v728
      %v730 = vpop.f32.mrb[0].mxu0
      %731 = vmatprep.mubr.f32.mxu0 0.0
      %732 = vmatmul.mubr.f32.gmra.mrb[0].mxu0 %v638
      %v733 = vpop.f32.mrb[0].mxu0
      %v734 = vadd.f32 0.0, %v733
      %v735 = vpop.f32.mrb[0].mxu0
      %736 = vmatprep.mubr.f32.mxu0 0.0
      %737 = vmatmul.mubr.f32.gmra.mrb[0].mxu0 %v641
      %v738 = vpop.f32.mrb[0].mxu0
      %v739 = vadd.f32 0.0, %v738
      %v740 = vpop.f32.mrb[0].mxu0
      %741 = vmatprep.mubr.f32.mxu0 0.0
      %742 = vmatmul.mubr.f32.gmra.mrb[0].mxu0 %v644
      %v743 = vpop.f32.mrb[0].mxu0
      %v744 = vadd.f32 0.0, %v743
      %v745 = vpop.f32.mrb[0].mxu0
      %746 = vmatprep.mubr.f32.mxu0 0.0
      %747 = vmatmul.mubr.f32.gmra.mrb[0].mxu0 %v647
      %v748 = vpop.f32.mrb[0].mxu0
      %v749 = vadd.f32 0.0, %v748
      %v750 = vpop.f32.mrb[0].mxu0
      %751 = vmatprep.mubr.f32.mxu0 0.0
      %752 = vmatmul.mubr.f32.gmra.mrb[0].mxu0 %v650
      %v753 = vpop.f32.mrb[0].mxu0
      %v754 = vadd.f32 0.0, %v753
      %v755 = vpop.f32.mrb[0].mxu0
      %756 = vdwg.mxu0
      %v757 = vadd.f32 %v580, %v719
      %v758 = vadd.f32 %v585, %v724
      %v759 = vadd.f32 %v590, %v729
      %v760 = vadd.f32 %v595, %v734
      %v761 = vadd.f32 %v600, %v739
      %v762 = vadd.f32 %v605, %v744
      %v763 = vadd.f32 %v610, %v749
      %v764 = vadd.f32 %v615, %v754
      %v765 = vld [vmem:[%s332] sm:$0xff]
      %v766 = vld [vmem:[%s332 + $0x10] sm:$0xff]
      %v767 = vld [vmem:[%s332 + $0x20] sm:$0xff]
      %v768 = vld [vmem:[%s332 + $0x30] sm:$0xff]
      %v769 = vld [vmem:[%s332 + $0x40] sm:$0xff]
      %v770 = vld [vmem:[%s332 + $0x50] sm:$0xff]
      %v771 = vld [vmem:[%s332 + $0x60] sm:$0xff]
      %v772 = vld [vmem:[%s332 + $0x70] sm:$0xff]
      %s773 = scalar_lea.vmem %s3, 24
      %v774 = vld [vmem:[%s773] sm:$0xff]
      %v776 = vsel %vm248, %v765, 0
      %v779 = vsel %vm248, %v766, 0
      %v782 = vsel %vm248, %v767, 0
      %v785 = vsel %vm248, %v768, 0
      %v788 = vsel %vm248, %v769, 0
      %v791 = vsel %vm248, %v770, 0
      %v794 = vsel %vm248, %v771, 0
      %v797 = vsel %vm248, %v772, 0
      %799 = vmatprep.subr.mxu0 0.0
      %800 = vmatpush1.msra.mxu0 %v774
      %801 = vmatprep.subr.mxu0 0.0
      %802 = vmatpush1.msra.mxu0 0.0
      %803 = vmatprep.subr.mxu0 0.0
      %804 = vmatpush1.msra.mxu0 0.0
      %805 = vmatprep.subr.mxu0 0.0
      %806 = vmatpush1.msra.mxu0 0.0
      %807 = vmatprep.subr.mxu0 0.0
      %808 = vmatpush1.msra.mxu0 0.0
      %809 = vmatprep.subr.mxu0 0.0
      %810 = vmatpush1.msra.mxu0 0.0
      %811 = vmatprep.subr.mxu0 0.0
      %812 = vmatpush1.msra.mxu0 0.0
      %813 = vmatprep.subr.mxu0 0.0
      %814 = vmatpush1.msra.mxu0 0.0
      %815 = vmatprep.subr.mxu0 0.0
      %816 = vmatpush1.msra.mxu0 0.0
      %817 = vmatprep.subr.mxu0 0.0
      %818 = vmatpush1.msra.mxu0 0.0
      %819 = vmatprep.subr.mxu0 0.0
      %820 = vmatpush1.msra.mxu0 0.0
      %821 = vmatprep.subr.mxu0 0.0
      %822 = vmatpush1.msra.mxu0 0.0
      %823 = vmatprep.subr.mxu0 0.0
      %824 = vmatpush1.msra.mxu0 0.0
      %825 = vmatprep.subr.mxu0 0.0
      %826 = vmatpush1.msra.mxu0 0.0
      %827 = vmatprep.subr.mxu0 0.0
      %828 = vmatpush1.msra.mxu0 0.0
      %829 = vmatprep.subr.mxu0 0.0
      %830 = vmatpush1.msra.mxu0 0.0
      %831 = vmatprep.subr.mxu0 0.0
      %832 = vmatpush1.msra.mxu0 0.0
      %833 = vmatprep.subr.mxu0 0.0
      %834 = vmatpush1.msra.mxu0 0.0
      %835 = vmatprep.subr.mxu0 0.0
      %836 = vmatpush1.msra.mxu0 0.0
      %837 = vmatprep.subr.mxu0 0.0
      %838 = vmatpush1.msra.mxu0 0.0
      %839 = vmatprep.subr.mxu0 0.0
      %840 = vmatpush1.msra.mxu0 0.0
      %841 = vmatprep.subr.mxu0 0.0
      %842 = vmatpush1.msra.mxu0 0.0
      %843 = vmatprep.subr.mxu0 0.0
      %844 = vmatpush1.msra.mxu0 0.0
      %845 = vmatprep.subr.mxu0 0.0
      %846 = vmatpush1.msra.mxu0 0.0
      %847 = vmatprep.subr.mxu0 0.0
      %848 = vmatpush1.msra.mxu0 0.0
      %849 = vmatprep.subr.mxu0 0.0
      %850 = vmatpush1.msra.mxu0 0.0
      %851 = vmatprep.subr.mxu0 0.0
      %852 = vmatpush1.msra.mxu0 0.0
      %853 = vmatprep.subr.mxu0 0.0
      %854 = vmatpush1.msra.mxu0 0.0
      %855 = vmatprep.subr.mxu0 0.0
      %856 = vmatpush1.msra.mxu0 0.0
      %857 = vmatprep.subr.mxu0 0.0
      %858 = vmatpush1.msra.mxu0 0.0
      %859 = vmatprep.subr.mxu0 0.0
      %860 = vmatpush1.msra.mxu0 0.0
      %861 = vmatprep.subr.mxu0 0.0
      %862 = vmatpush1.msra.mxu0 0.0
      %863 = vmatprep.mubr.f32.mxu0 0.0
      %864 = vmatmul.mubr.f32.gmra.mrb[0].mxu0 %v776
      %v865 = vpop.f32.mrb[0].mxu0
      %v866 = vadd.f32 0.0, %v865
      %v867 = vpop.f32.mrb[0].mxu0
      %868 = vmatprep.mubr.f32.mxu0 0.0
      %869 = vmatmul.mubr.f32.gmra.mrb[0].mxu0 %v779
      %v870 = vpop.f32.mrb[0].mxu0
      %v871 = vadd.f32 0.0, %v870
      %v872 = vpop.f32.mrb[0].mxu0
      %873 = vmatprep.mubr.f32.mxu0 0.0
      %874 = vmatmul.mubr.f32.gmra.mrb[0].mxu0 %v782
      %v875 = vpop.f32.mrb[0].mxu0
      %v876 = vadd.f32 0.0, %v875
      %v877 = vpop.f32.mrb[0].mxu0
      %878 = vmatprep.mubr.f32.mxu0 0.0
      %879 = vmatmul.mubr.f32.gmra.mrb[0].mxu0 %v785
      %v880 = vpop.f32.mrb[0].mxu0
      %v881 = vadd.f32 0.0, %v880
      %v882 = vpop.f32.mrb[0].mxu0
      %883 = vmatprep.mubr.f32.mxu0 0.0
      %884 = vmatmul.mubr.f32.gmra.mrb[0].mxu0 %v788
      %v885 = vpop.f32.mrb[0].mxu0
      %v886 = vadd.f32 0.0, %v885
      %v887 = vpop.f32.mrb[0].mxu0
      %888 = vmatprep.mubr.f32.mxu0 0.0
      %889 = vmatmul.mubr.f32.gmra.mrb[0].mxu0 %v791
      %v890 = vpop.f32.mrb[0].mxu0
      %v891 = vadd.f32 0.0, %v890
      %v892 = vpop.f32.mrb[0].mxu0
      %893 = vmatprep.mubr.f32.mxu0 0.0
      %894 = vmatmul.mubr.f32.gmra.mrb[0].mxu0 %v794
      %v895 = vpop.f32.mrb[0].mxu0
      %v896 = vadd.f32 0.0, %v895
      %v897 = vpop.f32.mrb[0].mxu0
      %898 = vmatprep.mubr.f32.mxu0 0.0
      %899 = vmatmul.mubr.f32.gmra.mrb[0].mxu0 %v797
      %v900 = vpop.f32.mrb[0].mxu0
      %v901 = vadd.f32 0.0, %v900
      %v902 = vpop.f32.mrb[0].mxu0
      %903 = vdwg.mxu0
      %v904 = vadd.f32 %v757, %v866
      %v905 = vadd.f32 %v758, %v871
      %v906 = vadd.f32 %v759, %v876
      %v907 = vadd.f32 %v760, %v881
      %v908 = vadd.f32 %v761, %v886
      %v909 = vadd.f32 %v762, %v891
      %v910 = vadd.f32 %v763, %v896
      %v911 = vadd.f32 %v764, %v901
      %v912 = vld [vmem:[%s332 + $0x1] sm:$0xff]
      %v913 = vld [vmem:[%s332 + $0x11] sm:$0xff]
      %v914 = vld [vmem:[%s332 + $0x21] sm:$0xff]
      %v915 = vld [vmem:[%s332 + $0x31] sm:$0xff]
      %v916 = vld [vmem:[%s332 + $0x41] sm:$0xff]
      %v917 = vld [vmem:[%s332 + $0x51] sm:$0xff]
      %v918 = vld [vmem:[%s332 + $0x61] sm:$0xff]
      %v919 = vld [vmem:[%s332 + $0x71] sm:$0xff]
      %s920 = scalar_lea.vmem %s3, 32
      %v921 = vld [vmem:[%s920] sm:$0xff]
      %v923 = vsel %vm248, %v912, 0
      %v926 = vsel %vm248, %v913, 0
      %v929 = vsel %vm248, %v914, 0
      %v932 = vsel %vm248, %v915, 0
      %v935 = vsel %vm248, %v916, 0
      %v938 = vsel %vm248, %v917, 0
      %v941 = vsel %vm248, %v918, 0
      %v944 = vsel %vm248, %v919, 0
      %946 = vmatprep.subr.mxu0 0.0
      %947 = vmatpush1.msra.mxu0 %v921
      %948 = vmatprep.subr.mxu0 0.0
      %949 = vmatpush1.msra.mxu0 0.0
      %950 = vmatprep.subr.mxu0 0.0
      %951 = vmatpush1.msra.mxu0 0.0
      %952 = vmatprep.subr.mxu0 0.0
      %953 = vmatpush1.msra.mxu0 0.0
      %954 = vmatprep.subr.mxu0 0.0
      %955 = vmatpush1.msra.mxu0 0.0
      %956 = vmatprep.subr.mxu0 0.0
      %957 = vmatpush1.msra.mxu0 0.0
      %958 = vmatprep.subr.mxu0 0.0
      %959 = vmatpush1.msra.mxu0 0.0
      %960 = vmatprep.subr.mxu0 0.0
      %961 = vmatpush1.msra.mxu0 0.0
      %962 = vmatprep.subr.mxu0 0.0
      %963 = vmatpush1.msra.mxu0 0.0
      %964 = vmatprep.subr.mxu0 0.0
      %965 = vmatpush1.msra.mxu0 0.0
      %966 = vmatprep.subr.mxu0 0.0
      %967 = vmatpush1.msra.mxu0 0.0
      %968 = vmatprep.subr.mxu0 0.0
      %969 = vmatpush1.msra.mxu0 0.0
      %970 = vmatprep.subr.mxu0 0.0
      %971 = vmatpush1.msra.mxu0 0.0
      %972 = vmatprep.subr.mxu0 0.0
      %973 = vmatpush1.msra.mxu0 0.0
      %974 = vmatprep.subr.mxu0 0.0
      %975 = vmatpush1.msra.mxu0 0.0
      %976 = vmatprep.subr.mxu0 0.0
      %977 = vmatpush1.msra.mxu0 0.0
      %978 = vmatprep.subr.mxu0 0.0
      %979 = vmatpush1.msra.mxu0 0.0
      %980 = vmatprep.subr.mxu0 0.0
      %981 = vmatpush1.msra.mxu0 0.0
      %982 = vmatprep.subr.mxu0 0.0
      %983 = vmatpush1.msra.mxu0 0.0
      %984 = vmatprep.subr.mxu0 0.0
      %985 = vmatpush1.msra.mxu0 0.0
      %986 = vmatprep.subr.mxu0 0.0
      %987 = vmatpush1.msra.mxu0 0.0
      %988 = vmatprep.subr.mxu0 0.0
      %989 = vmatpush1.msra.mxu0 0.0
      %990 = vmatprep.subr.mxu0 0.0
      %991 = vmatpush1.msra.mxu0 0.0
      %992 = vmatprep.subr.mxu0 0.0
      %993 = vmatpush1.msra.mxu0 0.0
      %994 = vmatprep.subr.mxu0 0.0
      %995 = vmatpush1.msra.mxu0 0.0
      %996 = vmatprep.subr.mxu0 0.0
      %997 = vmatpush1.msra.mxu0 0.0
      %998 = vmatprep.subr.mxu0 0.0
      %999 = vmatpush1.msra.mxu0 0.0
      %1000 = vmatprep.subr.mxu0 0.0
      %1001 = vmatpush1.msra.mxu0 0.0
      %1002 = vmatprep.subr.mxu0 0.0
      %1003 = vmatpush1.msra.mxu0 0.0
      %1004 = vmatprep.subr.mxu0 0.0
      %1005 = vmatpush1.msra.mxu0 0.0
      %1006 = vmatprep.subr.mxu0 0.0
      %1007 = vmatpush1.msra.mxu0 0.0
      %1008 = vmatprep.subr.mxu0 0.0
      %1009 = vmatpush1.msra.mxu0 0.0
      %1010 = vmatprep.mubr.f32.mxu0 0.0
      %1011 = vmatmul.mubr.f32.gmra.mrb[0].mxu0 %v923
      %v1012 = vpop.f32.mrb[0].mxu0
      %v1013 = vadd.f32 0.0, %v1012
      %v1014 = vpop.f32.mrb[0].mxu0
      %1015 = vmatprep.mubr.f32.mxu0 0.0
      %1016 = vmatmul.mubr.f32.gmra.mrb[0].mxu0 %v926
      %v1017 = vpop.f32.mrb[0].mxu0
      %v1018 = vadd.f32 0.0, %v1017
      %v1019 = vpop.f32.mrb[0].mxu0
      %1020 = vmatprep.mubr.f32.mxu0 0.0
      %1021 = vmatmul.mubr.f32.gmra.mrb[0].mxu0 %v929
      %v1022 = vpop.f32.mrb[0].mxu0
      %v1023 = vadd.f32 0.0, %v1022
      %v1024 = vpop.f32.mrb[0].mxu0
      %1025 = vmatprep.mubr.f32.mxu0 0.0
      %1026 = vmatmul.mubr.f32.gmra.mrb[0].mxu0 %v932
      %v1027 = vpop.f32.mrb[0].mxu0
      %v1028 = vadd.f32 0.0, %v1027
      %v1029 = vpop.f32.mrb[0].mxu0
      %1030 = vmatprep.mubr.f32.mxu0 0.0
      %1031 = vmatmul.mubr.f32.gmra.mrb[0].mxu0 %v935
      %v1032 = vpop.f32.mrb[0].mxu0
      %v1033 = vadd.f32 0.0, %v1032
      %v1034 = vpop.f32.mrb[0].mxu0
      %1035 = vmatprep.mubr.f32.mxu0 0.0
      %1036 = vmatmul.mubr.f32.gmra.mrb[0].mxu0 %v938
      %v1037 = vpop.f32.mrb[0].mxu0
      %v1038 = vadd.f32 0.0, %v1037
      %v1039 = vpop.f32.mrb[0].mxu0
      %1040 = vmatprep.mubr.f32.mxu0 0.0
      %1041 = vmatmul.mubr.f32.gmra.mrb[0].mxu0 %v941
      %v1042 = vpop.f32.mrb[0].mxu0
      %v1043 = vadd.f32 0.0, %v1042
      %v1044 = vpop.f32.mrb[0].mxu0
      %1045 = vmatprep.mubr.f32.mxu0 0.0
      %1046 = vmatmul.mubr.f32.gmra.mrb[0].mxu0 %v944
      %v1047 = vpop.f32.mrb[0].mxu0
      %v1048 = vadd.f32 0.0, %v1047
      %v1049 = vpop.f32.mrb[0].mxu0
      %1050 = vdwg.mxu0
      %v1051 = vadd.f32 %v904, %v1013
      %v1052 = vadd.f32 %v905, %v1018
      %v1053 = vadd.f32 %v906, %v1023
      %v1054 = vadd.f32 %v907, %v1028
      %v1055 = vadd.f32 %v908, %v1033
      %v1056 = vadd.f32 %v909, %v1038
      %v1057 = vadd.f32 %v910, %v1043
      %v1058 = vadd.f32 %v911, %v1048
      %v1059 = vld [vmem:[%s332 + $0x2] sm:$0xff]
      %v1060 = vld [vmem:[%s332 + $0x12] sm:$0xff]
      %v1061 = vld [vmem:[%s332 + $0x22] sm:$0xff]
      %v1062 = vld [vmem:[%s332 + $0x32] sm:$0xff]
      %v1063 = vld [vmem:[%s332 + $0x42] sm:$0xff]
      %v1064 = vld [vmem:[%s332 + $0x52] sm:$0xff]
      %v1065 = vld [vmem:[%s332 + $0x62] sm:$0xff]
      %v1066 = vld [vmem:[%s332 + $0x72] sm:$0xff]
      %s1067 = scalar_lea.vmem %s3, 40
      %v1068 = vld [vmem:[%s1067] sm:$0xff]
      %v1070 = vsel %vm248, %v1059, 0
      %v1073 = vsel %vm248, %v1060, 0
      %v1076 = vsel %vm248, %v1061, 0
      %v1079 = vsel %vm248, %v1062, 0
      %v1082 = vsel %vm248, %v1063, 0
      %v1085 = vsel %vm248, %v1064, 0
      %v1088 = vsel %vm248, %v1065, 0
      %v1091 = vsel %vm248, %v1066, 0
      %1093 = vmatprep.subr.mxu0 0.0
      %1094 = vmatpush1.msra.mxu0 %v1068
      %1095 = vmatprep.subr.mxu0 0.0
      %1096 = vmatpush1.msra.mxu0 0.0
      %1097 = vmatprep.subr.mxu0 0.0
      %1098 = vmatpush1.msra.mxu0 0.0
      %1099 = vmatprep.subr.mxu0 0.0
      %1100 = vmatpush1.msra.mxu0 0.0
      %1101 = vmatprep.subr.mxu0 0.0
      %1102 = vmatpush1.msra.mxu0 0.0
      %1103 = vmatprep.subr.mxu0 0.0
      %1104 = vmatpush1.msra.mxu0 0.0
      %1105 = vmatprep.subr.mxu0 0.0
      %1106 = vmatpush1.msra.mxu0 0.0
      %1107 = vmatprep.subr.mxu0 0.0
      %1108 = vmatpush1.msra.mxu0 0.0
      %1109 = vmatprep.subr.mxu0 0.0
      %1110 = vmatpush1.msra.mxu0 0.0
      %1111 = vmatprep.subr.mxu0 0.0
      %1112 = vmatpush1.msra.mxu0 0.0
      %1113 = vmatprep.subr.mxu0 0.0
      %1114 = vmatpush1.msra.mxu0 0.0
      %1115 = vmatprep.subr.mxu0 0.0
      %1116 = vmatpush1.msra.mxu0 0.0
      %1117 = vmatprep.subr.mxu0 0.0
      %1118 = vmatpush1.msra.mxu0 0.0
      %1119 = vmatprep.subr.mxu0 0.0
      %1120 = vmatpush1.msra.mxu0 0.0
      %1121 = vmatprep.subr.mxu0 0.0
      %1122 = vmatpush1.msra.mxu0 0.0
      %1123 = vmatprep.subr.mxu0 0.0
      %1124 = vmatpush1.msra.mxu0 0.0
      %1125 = vmatprep.subr.mxu0 0.0
      %1126 = vmatpush1.msra.mxu0 0.0
      %1127 = vmatprep.subr.mxu0 0.0
      %1128 = vmatpush1.msra.mxu0 0.0
      %1129 = vmatprep.subr.mxu0 0.0
      %1130 = vmatpush1.msra.mxu0 0.0
      %1131 = vmatprep.subr.mxu0 0.0
      %1132 = vmatpush1.msra.mxu0 0.0
      %1133 = vmatprep.subr.mxu0 0.0
      %1134 = vmatpush1.msra.mxu0 0.0
      %1135 = vmatprep.subr.mxu0 0.0
      %1136 = vmatpush1.msra.mxu0 0.0
      %1137 = vmatprep.subr.mxu0 0.0
      %1138 = vmatpush1.msra.mxu0 0.0
      %1139 = vmatprep.subr.mxu0 0.0
      %1140 = vmatpush1.msra.mxu0 0.0
      %1141 = vmatprep.subr.mxu0 0.0
      %1142 = vmatpush1.msra.mxu0 0.0
      %1143 = vmatprep.subr.mxu0 0.0
      %1144 = vmatpush1.msra.mxu0 0.0
      %1145 = vmatprep.subr.mxu0 0.0
      %1146 = vmatpush1.msra.mxu0 0.0
      %1147 = vmatprep.subr.mxu0 0.0
      %1148 = vmatpush1.msra.mxu0 0.0
      %1149 = vmatprep.subr.mxu0 0.0
      %1150 = vmatpush1.msra.mxu0 0.0
      %1151 = vmatprep.subr.mxu0 0.0
      %1152 = vmatpush1.msra.mxu0 0.0
      %1153 = vmatprep.subr.mxu0 0.0
      %1154 = vmatpush1.msra.mxu0 0.0
      %1155 = vmatprep.subr.mxu0 0.0
      %1156 = vmatpush1.msra.mxu0 0.0
      %1157 = vmatprep.mubr.f32.mxu0 0.0
      %1158 = vmatmul.mubr.f32.gmra.mrb[0].mxu0 %v1070
      %v1159 = vpop.f32.mrb[0].mxu0
      %v1160 = vadd.f32 0.0, %v1159
      %v1161 = vpop.f32.mrb[0].mxu0
      %1162 = vmatprep.mubr.f32.mxu0 0.0
      %1163 = vmatmul.mubr.f32.gmra.mrb[0].mxu0 %v1073
      %v1164 = vpop.f32.mrb[0].mxu0
      %v1165 = vadd.f32 0.0, %v1164
      %v1166 = vpop.f32.mrb[0].mxu0
      %1167 = vmatprep.mubr.f32.mxu0 0.0
      %1168 = vmatmul.mubr.f32.gmra.mrb[0].mxu0 %v1076
      %v1169 = vpop.f32.mrb[0].mxu0
      %v1170 = vadd.f32 0.0, %v1169
      %v1171 = vpop.f32.mrb[0].mxu0
      %1172 = vmatprep.mubr.f32.mxu0 0.0
      %1173 = vmatmul.mubr.f32.gmra.mrb[0].mxu0 %v1079
      %v1174 = vpop.f32.mrb[0].mxu0
      %v1175 = vadd.f32 0.0, %v1174
      %v1176 = vpop.f32.mrb[0].mxu0
      %1177 = vmatprep.mubr.f32.mxu0 0.0
      %1178 = vmatmul.mubr.f32.gmra.mrb[0].mxu0 %v1082
      %v1179 = vpop.f32.mrb[0].mxu0
      %v1180 = vadd.f32 0.0, %v1179
      %v1181 = vpop.f32.mrb[0].mxu0
      %1182 = vmatprep.mubr.f32.mxu0 0.0
      %1183 = vmatmul.mubr.f32.gmra.mrb[0].mxu0 %v1085
      %v1184 = vpop.f32.mrb[0].mxu0
      %v1185 = vadd.f32 0.0, %v1184
      %v1186 = vpop.f32.mrb[0].mxu0
      %1187 = vmatprep.mubr.f32.mxu0 0.0
      %1188 = vmatmul.mubr.f32.gmra.mrb[0].mxu0 %v1088
      %v1189 = vpop.f32.mrb[0].mxu0
      %v1190 = vadd.f32 0.0, %v1189
      %v1191 = vpop.f32.mrb[0].mxu0
      %1192 = vmatprep.mubr.f32.mxu0 0.0
      %1193 = vmatmul.mubr.f32.gmra.mrb[0].mxu0 %v1091
      %v1194 = vpop.f32.mrb[0].mxu0
      %v1195 = vadd.f32 0.0, %v1194
      %v1196 = vpop.f32.mrb[0].mxu0
      %1197 = vdwg.mxu0
      %v1198 = vadd.f32 %v1051, %v1160
      %v1199 = vadd.f32 %v1052, %v1165
      %v1200 = vadd.f32 %v1053, %v1170
      %v1201 = vadd.f32 %v1054, %v1175
      %v1202 = vadd.f32 %v1055, %v1180
      %v1203 = vadd.f32 %v1056, %v1185
      %v1204 = vadd.f32 %v1057, %v1190
      %v1205 = vadd.f32 %v1058, %v1195
      %s1206 = scalar_lea.vmem [#allocation2], 32
      %v1207 = vld [vmem:[%s1206] sm:$0xff]
      %v1208 = vld [vmem:[%s1206 + $0x10] sm:$0xff]
      %v1209 = vld [vmem:[%s1206 + $0x20] sm:$0xff]
      %v1210 = vld [vmem:[%s1206 + $0x30] sm:$0xff]
      %v1211 = vld [vmem:[%s1206 + $0x40] sm:$0xff]
      %v1212 = vld [vmem:[%s1206 + $0x50] sm:$0xff]
      %v1213 = vld [vmem:[%s1206 + $0x60] sm:$0xff]
      %v1214 = vld [vmem:[%s1206 + $0x70] sm:$0xff]
      %s1215 = scalar_lea.vmem %s3, 48
      %v1216 = vld [vmem:[%s1215] sm:$0xff]
      %v1218 = vsel %vm248, %v1207, 0
      %v1221 = vsel %vm248, %v1208, 0
      %v1224 = vsel %vm248, %v1209, 0
      %v1227 = vsel %vm248, %v1210, 0
      %v1230 = vsel %vm248, %v1211, 0
      %v1233 = vsel %vm248, %v1212, 0
      %v1236 = vsel %vm248, %v1213, 0
      %v1239 = vsel %vm248, %v1214, 0
      %1241 = vmatprep.subr.mxu0 0.0
      %1242 = vmatpush1.msra.mxu0 %v1216
      %1243 = vmatprep.subr.mxu0 0.0
      %1244 = vmatpush1.msra.mxu0 0.0
      %1245 = vmatprep.subr.mxu0 0.0
      %1246 = vmatpush1.msra.mxu0 0.0
      %1247 = vmatprep.subr.mxu0 0.0
      %1248 = vmatpush1.msra.mxu0 0.0
      %1249 = vmatprep.subr.mxu0 0.0
      %1250 = vmatpush1.msra.mxu0 0.0
      %1251 = vmatprep.subr.mxu0 0.0
      %1252 = vmatpush1.msra.mxu0 0.0
      %1253 = vmatprep.subr.mxu0 0.0
      %1254 = vmatpush1.msra.mxu0 0.0
      %1255 = vmatprep.subr.mxu0 0.0
      %1256 = vmatpush1.msra.mxu0 0.0
      %1257 = vmatprep.subr.mxu0 0.0
      %1258 = vmatpush1.msra.mxu0 0.0
      %1259 = vmatprep.subr.mxu0 0.0
      %1260 = vmatpush1.msra.mxu0 0.0
      %1261 = vmatprep.subr.mxu0 0.0
      %1262 = vmatpush1.msra.mxu0 0.0
      %1263 = vmatprep.subr.mxu0 0.0
      %1264 = vmatpush1.msra.mxu0 0.0
      %1265 = vmatprep.subr.mxu0 0.0
      %1266 = vmatpush1.msra.mxu0 0.0
      %1267 = vmatprep.subr.mxu0 0.0
      %1268 = vmatpush1.msra.mxu0 0.0
      %1269 = vmatprep.subr.mxu0 0.0
      %1270 = vmatpush1.msra.mxu0 0.0
      %1271 = vmatprep.subr.mxu0 0.0
      %1272 = vmatpush1.msra.mxu0 0.0
      %1273 = vmatprep.subr.mxu0 0.0
      %1274 = vmatpush1.msra.mxu0 0.0
      %1275 = vmatprep.subr.mxu0 0.0
      %1276 = vmatpush1.msra.mxu0 0.0
      %1277 = vmatprep.subr.mxu0 0.0
      %1278 = vmatpush1.msra.mxu0 0.0
      %1279 = vmatprep.subr.mxu0 0.0
      %1280 = vmatpush1.msra.mxu0 0.0
      %1281 = vmatprep.subr.mxu0 0.0
      %1282 = vmatpush1.msra.mxu0 0.0
      %1283 = vmatprep.subr.mxu0 0.0
      %1284 = vmatpush1.msra.mxu0 0.0
      %1285 = vmatprep.subr.mxu0 0.0
      %1286 = vmatpush1.msra.mxu0 0.0
      %1287 = vmatprep.subr.mxu0 0.0
      %1288 = vmatpush1.msra.mxu0 0.0
      %1289 = vmatprep.subr.mxu0 0.0
      %1290 = vmatpush1.msra.mxu0 0.0
      %1291 = vmatprep.subr.mxu0 0.0
      %1292 = vmatpush1.msra.mxu0 0.0
      %1293 = vmatprep.subr.mxu0 0.0
      %1294 = vmatpush1.msra.mxu0 0.0
      %1295 = vmatprep.subr.mxu0 0.0
      %1296 = vmatpush1.msra.mxu0 0.0
      %1297 = vmatprep.subr.mxu0 0.0
      %1298 = vmatpush1.msra.mxu0 0.0
      %1299 = vmatprep.subr.mxu0 0.0
      %1300 = vmatpush1.msra.mxu0 0.0
      %1301 = vmatprep.subr.mxu0 0.0
      %1302 = vmatpush1.msra.mxu0 0.0
      %1303 = vmatprep.subr.mxu0 0.0
      %1304 = vmatpush1.msra.mxu0 0.0
      %1305 = vmatprep.mubr.f32.mxu0 0.0
      %1306 = vmatmul.mubr.f32.gmra.mrb[0].mxu0 %v1218
      %v1307 = vpop.f32.mrb[0].mxu0
      %v1308 = vadd.f32 0.0, %v1307
      %v1309 = vpop.f32.mrb[0].mxu0
      %1310 = vmatprep.mubr.f32.mxu0 0.0
      %1311 = vmatmul.mubr.f32.gmra.mrb[0].mxu0 %v1221
      %v1312 = vpop.f32.mrb[0].mxu0
      %v1313 = vadd.f32 0.0, %v1312
      %v1314 = vpop.f32.mrb[0].mxu0
      %1315 = vmatprep.mubr.f32.mxu0 0.0
      %1316 = vmatmul.mubr.f32.gmra.mrb[0].mxu0 %v1224
      %v1317 = vpop.f32.mrb[0].mxu0
      %v1318 = vadd.f32 0.0, %v1317
      %v1319 = vpop.f32.mrb[0].mxu0
      %1320 = vmatprep.mubr.f32.mxu0 0.0
      %1321 = vmatmul.mubr.f32.gmra.mrb[0].mxu0 %v1227
      %v1322 = vpop.f32.mrb[0].mxu0
      %v1323 = vadd.f32 0.0, %v1322
      %v1324 = vpop.f32.mrb[0].mxu0
      %1325 = vmatprep.mubr.f32.mxu0 0.0
      %1326 = vmatmul.mubr.f32.gmra.mrb[0].mxu0 %v1230
      %v1327 = vpop.f32.mrb[0].mxu0
      %v1328 = vadd.f32 0.0, %v1327
      %v1329 = vpop.f32.mrb[0].mxu0
      %1330 = vmatprep.mubr.f32.mxu0 0.0
      %1331 = vmatmul.mubr.f32.gmra.mrb[0].mxu0 %v1233
      %v1332 = vpop.f32.mrb[0].mxu0
      %v1333 = vadd.f32 0.0, %v1332
      %v1334 = vpop.f32.mrb[0].mxu0
      %1335 = vmatprep.mubr.f32.mxu0 0.0
      %1336 = vmatmul.mubr.f32.gmra.mrb[0].mxu0 %v1236
      %v1337 = vpop.f32.mrb[0].mxu0
      %v1338 = vadd.f32 0.0, %v1337
      %v1339 = vpop.f32.mrb[0].mxu0
      %1340 = vmatprep.mubr.f32.mxu0 0.0
      %1341 = vmatmul.mubr.f32.gmra.mrb[0].mxu0 %v1239
      %v1342 = vpop.f32.mrb[0].mxu0
      %v1343 = vadd.f32 0.0, %v1342
      %v1344 = vpop.f32.mrb[0].mxu0
      %1345 = vdwg.mxu0
      %v1346 = vadd.f32 %v1198, %v1308
      %v1347 = vadd.f32 %v1199, %v1313
      %v1348 = vadd.f32 %v1200, %v1318
      %v1349 = vadd.f32 %v1201, %v1323
      %v1350 = vadd.f32 %v1202, %v1328
      %v1351 = vadd.f32 %v1203, %v1333
      %v1352 = vadd.f32 %v1204, %v1338
      %v1353 = vadd.f32 %v1205, %v1343
      %v1354 = vld [vmem:[%s1206 + $0x1] sm:$0xff]
      %v1355 = vld [vmem:[%s1206 + $0x11] sm:$0xff]
      %v1356 = vld [vmem:[%s1206 + $0x21] sm:$0xff]
      %v1357 = vld [vmem:[%s1206 + $0x31] sm:$0xff]
      %v1358 = vld [vmem:[%s1206 + $0x41] sm:$0xff]
      %v1359 = vld [vmem:[%s1206 + $0x51] sm:$0xff]
      %v1360 = vld [vmem:[%s1206 + $0x61] sm:$0xff]
      %v1361 = vld [vmem:[%s1206 + $0x71] sm:$0xff]
      %s1362 = scalar_lea.vmem %s3, 56
      %v1363 = vld [vmem:[%s1362] sm:$0xff]
      %v1365 = vsel %vm248, %v1354, 0
      %v1368 = vsel %vm248, %v1355, 0
      %v1371 = vsel %vm248, %v1356, 0
      %v1374 = vsel %vm248, %v1357, 0
      %v1377 = vsel %vm248, %v1358, 0
      %v1380 = vsel %vm248, %v1359, 0
      %v1383 = vsel %vm248, %v1360, 0
      %v1386 = vsel %vm248, %v1361, 0
      %1388 = vmatprep.subr.mxu0 0.0
      %1389 = vmatpush1.msra.mxu0 %v1363
      %1390 = vmatprep.subr.mxu0 0.0
      %1391 = vmatpush1.msra.mxu0 0.0
      %1392 = vmatprep.subr.mxu0 0.0
      %1393 = vmatpush1.msra.mxu0 0.0
      %1394 = vmatprep.subr.mxu0 0.0
      %1395 = vmatpush1.msra.mxu0 0.0
      %1396 = vmatprep.subr.mxu0 0.0
      %1397 = vmatpush1.msra.mxu0 0.0
      %1398 = vmatprep.subr.mxu0 0.0
      %1399 = vmatpush1.msra.mxu0 0.0
      %1400 = vmatprep.subr.mxu0 0.0
      %1401 = vmatpush1.msra.mxu0 0.0
      %1402 = vmatprep.subr.mxu0 0.0
      %1403 = vmatpush1.msra.mxu0 0.0
      %1404 = vmatprep.subr.mxu0 0.0
      %1405 = vmatpush1.msra.mxu0 0.0
      %1406 = vmatprep.subr.mxu0 0.0
      %1407 = vmatpush1.msra.mxu0 0.0
      %1408 = vmatprep.subr.mxu0 0.0
      %1409 = vmatpush1.msra.mxu0 0.0
      %1410 = vmatprep.subr.mxu0 0.0
      %1411 = vmatpush1.msra.mxu0 0.0
      %1412 = vmatprep.subr.mxu0 0.0
      %1413 = vmatpush1.msra.mxu0 0.0
      %1414 = vmatprep.subr.mxu0 0.0
      %1415 = vmatpush1.msra.mxu0 0.0
      %1416 = vmatprep.subr.mxu0 0.0
      %1417 = vmatpush1.msra.mxu0 0.0
      %1418 = vmatprep.subr.mxu0 0.0
      %1419 = vmatpush1.msra.mxu0 0.0
      %1420 = vmatprep.subr.mxu0 0.0
      %1421 = vmatpush1.msra.mxu0 0.0
      %1422 = vmatprep.subr.mxu0 0.0
      %1423 = vmatpush1.msra.mxu0 0.0
      %1424 = vmatprep.subr.mxu0 0.0
      %1425 = vmatpush1.msra.mxu0 0.0
      %1426 = vmatprep.subr.mxu0 0.0
      %1427 = vmatpush1.msra.mxu0 0.0
      %1428 = vmatprep.subr.mxu0 0.0
      %1429 = vmatpush1.msra.mxu0 0.0
      %1430 = vmatprep.subr.mxu0 0.0
      %1431 = vmatpush1.msra.mxu0 0.0
      %1432 = vmatprep.subr.mxu0 0.0
      %1433 = vmatpush1.msra.mxu0 0.0
      %1434 = vmatprep.subr.mxu0 0.0
      %1435 = vmatpush1.msra.mxu0 0.0
      %1436 = vmatprep.subr.mxu0 0.0
      %1437 = vmatpush1.msra.mxu0 0.0
      %1438 = vmatprep.subr.mxu0 0.0
      %1439 = vmatpush1.msra.mxu0 0.0
      %1440 = vmatprep.subr.mxu0 0.0
      %1441 = vmatpush1.msra.mxu0 0.0
      %1442 = vmatprep.subr.mxu0 0.0
      %1443 = vmatpush1.msra.mxu0 0.0
      %1444 = vmatprep.subr.mxu0 0.0
      %1445 = vmatpush1.msra.mxu0 0.0
      %1446 = vmatprep.subr.mxu0 0.0
      %1447 = vmatpush1.msra.mxu0 0.0
      %1448 = vmatprep.subr.mxu0 0.0
      %1449 = vmatpush1.msra.mxu0 0.0
      %1450 = vmatprep.subr.mxu0 0.0
      %1451 = vmatpush1.msra.mxu0 0.0
      %1452 = vmatprep.mubr.f32.mxu0 0.0
      %1453 = vmatmul.mubr.f32.gmra.mrb[0].mxu0 %v1365
      %v1454 = vpop.f32.mrb[0].mxu0
      %v1455 = vadd.f32 0.0, %v1454
      %v1456 = vpop.f32.mrb[0].mxu0
      %1457 = vmatprep.mubr.f32.mxu0 0.0
      %1458 = vmatmul.mubr.f32.gmra.mrb[0].mxu0 %v1368
      %v1459 = vpop.f32.mrb[0].mxu0
      %v1460 = vadd.f32 0.0, %v1459
      %v1461 = vpop.f32.mrb[0].mxu0
      %1462 = vmatprep.mubr.f32.mxu0 0.0
      %1463 = vmatmul.mubr.f32.gmra.mrb[0].mxu0 %v1371
      %v1464 = vpop.f32.mrb[0].mxu0
      %v1465 = vadd.f32 0.0, %v1464
      %v1466 = vpop.f32.mrb[0].mxu0
      %1467 = vmatprep.mubr.f32.mxu0 0.0
      %1468 = vmatmul.mubr.f32.gmra.mrb[0].mxu0 %v1374
      %v1469 = vpop.f32.mrb[0].mxu0
      %v1470 = vadd.f32 0.0, %v1469
      %v1471 = vpop.f32.mrb[0].mxu0
      %1472 = vmatprep.mubr.f32.mxu0 0.0
      %1473 = vmatmul.mubr.f32.gmra.mrb[0].mxu0 %v1377
      %v1474 = vpop.f32.mrb[0].mxu0
      %v1475 = vadd.f32 0.0, %v1474
      %v1476 = vpop.f32.mrb[0].mxu0
      %1477 = vmatprep.mubr.f32.mxu0 0.0
      %1478 = vmatmul.mubr.f32.gmra.mrb[0].mxu0 %v1380
      %v1479 = vpop.f32.mrb[0].mxu0
      %v1480 = vadd.f32 0.0, %v1479
      %v1481 = vpop.f32.mrb[0].mxu0
      %1482 = vmatprep.mubr.f32.mxu0 0.0
      %1483 = vmatmul.mubr.f32.gmra.mrb[0].mxu0 %v1383
      %v1484 = vpop.f32.mrb[0].mxu0
      %v1485 = vadd.f32 0.0, %v1484
      %v1486 = vpop.f32.mrb[0].mxu0
      %1487 = vmatprep.mubr.f32.mxu0 0.0
      %1488 = vmatmul.mubr.f32.gmra.mrb[0].mxu0 %v1386
      %v1489 = vpop.f32.mrb[0].mxu0
      %v1490 = vadd.f32 0.0, %v1489
      %v1491 = vpop.f32.mrb[0].mxu0
      %1492 = vdwg.mxu0
      %v1493 = vadd.f32 %v1346, %v1455
      %v1494 = vadd.f32 %v1347, %v1460
      %v1495 = vadd.f32 %v1348, %v1465
      %v1496 = vadd.f32 %v1349, %v1470
      %v1497 = vadd.f32 %v1350, %v1475
      %v1498 = vadd.f32 %v1351, %v1480
      %v1499 = vadd.f32 %v1352, %v1485
      %v1500 = vadd.f32 %v1353, %v1490
      %v1501 = vld [vmem:[%s1206 + $0x2] sm:$0xff]
      %v1502 = vld [vmem:[%s1206 + $0x12] sm:$0xff]
      %v1503 = vld [vmem:[%s1206 + $0x22] sm:$0xff]
      %v1504 = vld [vmem:[%s1206 + $0x32] sm:$0xff]
      %v1505 = vld [vmem:[%s1206 + $0x42] sm:$0xff]
      %v1506 = vld [vmem:[%s1206 + $0x52] sm:$0xff]
      %v1507 = vld [vmem:[%s1206 + $0x62] sm:$0xff]
      %v1508 = vld [vmem:[%s1206 + $0x72] sm:$0xff]
      %s1509 = scalar_lea.vmem %s3, 64
      %v1510 = vld [vmem:[%s1509] sm:$0xff]
      %v1512 = vsel %vm248, %v1501, 0
      %v1515 = vsel %vm248, %v1502, 0
      %v1518 = vsel %vm248, %v1503, 0
      %v1521 = vsel %vm248, %v1504, 0
      %v1524 = vsel %vm248, %v1505, 0
      %v1527 = vsel %vm248, %v1506, 0
      %v1530 = vsel %vm248, %v1507, 0
      %v1533 = vsel %vm248, %v1508, 0
      %1535 = vmatprep.subr.mxu0 0.0
      %1536 = vmatpush1.msra.mxu0 %v1510
      %1537 = vmatprep.subr.mxu0 0.0
      %1538 = vmatpush1.msra.mxu0 0.0
      %1539 = vmatprep.subr.mxu0 0.0
      %1540 = vmatpush1.msra.mxu0 0.0
      %1541 = vmatprep.subr.mxu0 0.0
      %1542 = vmatpush1.msra.mxu0 0.0
      %1543 = vmatprep.subr.mxu0 0.0
      %1544 = vmatpush1.msra.mxu0 0.0
      %1545 = vmatprep.subr.mxu0 0.0
      %1546 = vmatpush1.msra.mxu0 0.0
      %1547 = vmatprep.subr.mxu0 0.0
      %1548 = vmatpush1.msra.mxu0 0.0
      %1549 = vmatprep.subr.mxu0 0.0
      %1550 = vmatpush1.msra.mxu0 0.0
      %1551 = vmatprep.subr.mxu0 0.0
      %1552 = vmatpush1.msra.mxu0 0.0
      %1553 = vmatprep.subr.mxu0 0.0
      %1554 = vmatpush1.msra.mxu0 0.0
      %1555 = vmatprep.subr.mxu0 0.0
      %1556 = vmatpush1.msra.mxu0 0.0
      %1557 = vmatprep.subr.mxu0 0.0
      %1558 = vmatpush1.msra.mxu0 0.0
      %1559 = vmatprep.subr.mxu0 0.0
      %1560 = vmatpush1.msra.mxu0 0.0
      %1561 = vmatprep.subr.mxu0 0.0
      %1562 = vmatpush1.msra.mxu0 0.0
      %1563 = vmatprep.subr.mxu0 0.0
      %1564 = vmatpush1.msra.mxu0 0.0
      %1565 = vmatprep.subr.mxu0 0.0
      %1566 = vmatpush1.msra.mxu0 0.0
      %1567 = vmatprep.subr.mxu0 0.0
      %1568 = vmatpush1.msra.mxu0 0.0
      %1569 = vmatprep.subr.mxu0 0.0
      %1570 = vmatpush1.msra.mxu0 0.0
      %1571 = vmatprep.subr.mxu0 0.0
      %1572 = vmatpush1.msra.mxu0 0.0
      %1573 = vmatprep.subr.mxu0 0.0
      %1574 = vmatpush1.msra.mxu0 0.0
      %1575 = vmatprep.subr.mxu0 0.0
      %1576 = vmatpush1.msra.mxu0 0.0
      %1577 = vmatprep.subr.mxu0 0.0
      %1578 = vmatpush1.msra.mxu0 0.0
      %1579 = vmatprep.subr.mxu0 0.0
      %1580 = vmatpush1.msra.mxu0 0.0
      %1581 = vmatprep.subr.mxu0 0.0
      %1582 = vmatpush1.msra.mxu0 0.0
      %1583 = vmatprep.subr.mxu0 0.0
      %1584 = vmatpush1.msra.mxu0 0.0
      %1585 = vmatprep.subr.mxu0 0.0
      %1586 = vmatpush1.msra.mxu0 0.0
      %1587 = vmatprep.subr.mxu0 0.0
      %1588 = vmatpush1.msra.mxu0 0.0
      %1589 = vmatprep.subr.mxu0 0.0
      %1590 = vmatpush1.msra.mxu0 0.0
      %1591 = vmatprep.subr.mxu0 0.0
      %1592 = vmatpush1.msra.mxu0 0.0
      %1593 = vmatprep.subr.mxu0 0.0
      %1594 = vmatpush1.msra.mxu0 0.0
      %1595 = vmatprep.subr.mxu0 0.0
      %1596 = vmatpush1.msra.mxu0 0.0
      %1597 = vmatprep.subr.mxu0 0.0
      %1598 = vmatpush1.msra.mxu0 0.0
      %1599 = vmatprep.mubr.f32.mxu0 0.0
      %1600 = vmatmul.mubr.f32.gmra.mrb[0].mxu0 %v1512
      %v1601 = vpop.f32.mrb[0].mxu0
      %v1602 = vadd.f32 0.0, %v1601
      %v1603 = vpop.f32.mrb[0].mxu0
      %1604 = vmatprep.mubr.f32.mxu0 0.0
      %1605 = vmatmul.mubr.f32.gmra.mrb[0].mxu0 %v1515
      %v1606 = vpop.f32.mrb[0].mxu0
      %v1607 = vadd.f32 0.0, %v1606
      %v1608 = vpop.f32.mrb[0].mxu0
      %1609 = vmatprep.mubr.f32.mxu0 0.0
      %1610 = vmatmul.mubr.f32.gmra.mrb[0].mxu0 %v1518
      %v1611 = vpop.f32.mrb[0].mxu0
      %v1612 = vadd.f32 0.0, %v1611
      %v1613 = vpop.f32.mrb[0].mxu0
      %1614 = vmatprep.mubr.f32.mxu0 0.0
      %1615 = vmatmul.mubr.f32.gmra.mrb[0].mxu0 %v1521
      %v1616 = vpop.f32.mrb[0].mxu0
      %v1617 = vadd.f32 0.0, %v1616
      %v1618 = vpop.f32.mrb[0].mxu0
      %1619 = vmatprep.mubr.f32.mxu0 0.0
      %1620 = vmatmul.mubr.f32.gmra.mrb[0].mxu0 %v1524
      %v1621 = vpop.f32.mrb[0].mxu0
      %v1622 = vadd.f32 0.0, %v1621
      %v1623 = vpop.f32.mrb[0].mxu0
      %1624 = vmatprep.mubr.f32.mxu0 0.0
      %1625 = vmatmul.mubr.f32.gmra.mrb[0].mxu0 %v1527
      %v1626 = vpop.f32.mrb[0].mxu0
      %v1627 = vadd.f32 0.0, %v1626
      %v1628 = vpop.f32.mrb[0].mxu0
      %1629 = vmatprep.mubr.f32.mxu0 0.0
      %1630 = vmatmul.mubr.f32.gmra.mrb[0].mxu0 %v1530
      %v1631 = vpop.f32.mrb[0].mxu0
      %v1632 = vadd.f32 0.0, %v1631
      %v1633 = vpop.f32.mrb[0].mxu0
      %1634 = vmatprep.mubr.f32.mxu0 0.0
      %1635 = vmatmul.mubr.f32.gmra.mrb[0].mxu0 %v1533
      %v1636 = vpop.f32.mrb[0].mxu0
      %v1637 = vadd.f32 0.0, %v1636
      %v1638 = vpop.f32.mrb[0].mxu0
      %1639 = vdwg.mxu0
      %v1640 = vadd.f32 %v1493, %v1602
      %v1641 = vadd.f32 %v1494, %v1607
      %v1642 = vadd.f32 %v1495, %v1612
      %v1643 = vadd.f32 %v1496, %v1617
      %v1644 = vadd.f32 %v1497, %v1622
      %v1645 = vadd.f32 %v1498, %v1627
      %v1646 = vadd.f32 %v1499, %v1632
      %v1647 = vadd.f32 %v1500, %v1637
      %v1648 = vld [vmem:[%s240] sm:$0xff]
      %v1649 = vld [vmem:[%s240 + $0x8] sm:$0xff]
      %v1650 = vld [vmem:[%s240 + $0x10] sm:$0xff]
      %v1651 = vld [vmem:[%s240 + $0x18] sm:$0xff]
      %v1652 = vld [vmem:[%s240 + $0x20] sm:$0xff]
      %v1653 = vld [vmem:[%s240 + $0x28] sm:$0xff]
      %v1654 = vld [vmem:[%s240 + $0x30] sm:$0xff]
      %v1655 = vld [vmem:[%s240 + $0x38] sm:$0xff]
      %v1656 = vadd.f32 %v1640, %v1648
      %v1657 = vadd.f32 %v1641, %v1649
      %v1658 = vadd.f32 %v1642, %v1650
      %v1659 = vadd.f32 %v1643, %v1651
      %v1660 = vadd.f32 %v1644, %v1652
      %v1661 = vadd.f32 %v1645, %v1653
      %v1662 = vadd.f32 %v1646, %v1654
      %v1663 = vadd.f32 %v1647, %v1655
      %1664 = vst.msk [vmem:[%s246] sm:$0xff] %vm248, %v1656
      %1665 = vst.msk [vmem:[%s246 + $0x8] sm:$0xff] %vm248, %v1657
      %1666 = vst.msk [vmem:[%s246 + $0x10] sm:$0xff] %vm248, %v1658
      %1667 = vst.msk [vmem:[%s246 + $0x18] sm:$0xff] %vm248, %v1659
      %1668 = vst.msk [vmem:[%s246 + $0x20] sm:$0xff] %vm248, %v1660
      %1669 = vst.msk [vmem:[%s246 + $0x28] sm:$0xff] %vm248, %v1661
      %1670 = vst.msk [vmem:[%s246 + $0x30] sm:$0xff] %vm248, %v1662
      %1671 = vst.msk [vmem:[%s246 + $0x38] sm:$0xff] %vm248, %v1663
      %s1672 = smul.u32 8, %s16
      %p1673 = scmp.lt.s32.totalorder %s1672, 15
      %s1674 = scalar_select %p1673, %s1672, 15
      %s1675 = smul.addr %s1674, 8
      %s1676 = scalar_lea.vmem %s5, %s1675
      // Predicated region
      $region41: #{w_residual_forward.3} parent=39 // pred_check
        %p1677 = pneg %p149
      $region42: #{w_residual_forward.3} parent=39 // pred_check_branch
        %1679 = sbr.rel (%p1677) target = $region44
      $region43: #{w_residual_forward.3} parent=39 // pred_region
        %s1680 = smul.u32 8, %s16
      $region44: #{w_residual_forward.3} parent=39 // pred_fallthru
        _
    $region40: #{w_residual_forward.3} parent=5 // pred_fallthru
      _
    %p1681 = scmp.le.s32.totalorder 2, %s11
    // Predicated region
    $region45: #{w_residual_forward.3} parent=5 // pred_check
      %p1682 = pneg %p1681
    $region46: #{w_residual_forward.3} parent=5 // pred_check_branch
      %1684 = sbr.rel (%p1682) target = $region48
    $region47: #{w_residual_forward.3} parent=5 // pred_region
      %s1685 = ssub.s32 %s11, 2
      // Predicated region
      $region49: #{w_residual_forward.3} parent=47 // pred_check
        %p1686 = pneg %p155
      $region50: #{w_residual_forward.3} parent=47 // pred_check_branch
        %1688 = sbr.rel (%p1686) target = $region52
      $region51: #{w_residual_forward.3} parent=47 // pred_region
        %s1689 = smul.u32 8, %s17
        %p1690 = scmp.lt.s32.totalorder %s1689, 15
        %s1691 = scalar_select %p1690, %s1689, 15
        %s1692 = smul.addr %s1691, 8
        %s1693 = scalar_lea.vmem %s5, %s1692
      $region52: #{w_residual_forward.3} parent=47 // pred_fallthru
        _
    $region48: #{w_residual_forward.3} parent=5 // pred_fallthru
      _
  $region6: #{w_residual_forward.3} parent=0 // loop_footer
    %s15 = sadd.s32 1, %s11
  $region7: #{w_residual_forward.3} parent=0 // loop_footer_branch
    %10 = sbr.rel target = $region3
  $region8: #{w_residual_forward.3} parent=0 // loop_exit
    _

// kernel: w_residual_forward.2
$region0: #{w_residual_forward.2}
  #allocation0 [shape = 'u32[]', space=smem, size = 0x4, offset = 0x4, fixed_abs, tag = 'smem constant byte address 0x4 - core index']
  #allocation1 [shape = 'u32[144,128]{1,0:T(1,128)}', space=vmem, size = 0x12000, scoped, tag = 'internal scratch']
  #allocation2 [shape = 'f32[4,9,9,4]{3,2,1,0:T(8,128)}', space=vmem, size = 0x48000, scoped, tag = 'scratch operand']
  %s0 = inlined_call_operand.vmem [shape: f32[8,8,8,4], index: 0, kind: input, shape index: {}]
  %s1 = inlined_call_operand.vmem [shape: f32[1,4], index: 1, kind: input, shape index: {}]
  %s2 = inlined_call_operand.vmem [shape: f32[1,4], index: 2, kind: input, shape index: {}]
  %s3 = inlined_call_operand.vmem [shape: f32[9,4,8], index: 3, kind: input, shape index: {}]
  %s4 = inlined_call_operand.vmem [shape: f32[16,8,8], index: 4, kind: output, shape index: {}]
  %s5 = sld [smem:[#allocation0]]
  $region49: #{w_residual_forward.2} parent=0
    _
  %s7 = ssub.s32 1, %s5
  %s8 = scalar_select 0, %s7, %s5
  loop: start=0, step=1, limit=4
  $region2: #{w_residual_forward.2} parent=0 // loop_pre_header
    _
  $region3: #{w_residual_forward.2} parent=0 // loop_header
    %s10 = sphi 0, %s14
    %p11 = scmp.ge.s32.totalorder %s10, 4
    %s20 = sphi 0, %s22
    %s23 = sphi 0, %s20
    %s24 = sphi 0, %s23
    %s40 = sphi 0, %s24
    %s44 = sphi 0, %s44
    %s46 = sphi 0, %s44
    %s47 = sphi 0, %s46
    %s61 = sphi 0, %s47
    %s65 = sphi 0, %s65
    %s67 = sphi 0, %s65
    %s68 = sphi 0, %s67
    %s82 = sphi 0, %s68
    %s86 = sphi 0, %s86
    %s88 = sphi 0, %s86
    %s89 = sphi 0, %s88
    %s103 = sphi 0, %s89
    %s109 = sphi 0, %s111
    %s112 = sphi 0, %s109
    %s113 = sphi 0, %s112
    %s129 = sphi 0, %s113
  $region4: #{w_residual_forward.2} parent=0 // loop_header_branch
    %13 = sbr.rel (%p11) target = $region8
  $region5: #{w_residual_forward.2} parent=0 // loop_body
    %s15 = ssub.s32 %s10, 1
    %s16 = ssub.s32 %s10, 2
    %s17 = sadd.s32 %s10, 1
    %s18 = ssub.s32 %s10, %s17
    %p19 = scmp.eq.s32.totalorder %s18, 0
    %s21 = sadd.s32 %s20, 1
    %s22 = scalar_select %p19, %s20, %s21
    %p25 = pneg %p19
    %p26 = scmp.eq.s32.totalorder %s10, 1
    %p27 = por %p25, %p26
    %p28 = scmp.ne.s32.totalorder %s20, %s23
    %p29 = scmp.eq.s32.totalorder %s10, 0
    %p30 = por %p28, %p29
    %p31 = scmp.ne.s32.totalorder %s20, %s23
    %p32 = scmp.eq.s32.totalorder %s15, 1
    %p33 = por %p31, %p32
    %p34 = scmp.ne.s32.totalorder %s23, %s24
    %p35 = scmp.eq.s32.totalorder %s15, 0
    %p36 = por %p34, %p35
    %p37 = scmp.ne.s32.totalorder %s23, %s24
    %p38 = scmp.eq.s32.totalorder %s16, 1
    %p39 = por %p37, %p38
    %p41 = scmp.ne.s32.totalorder %s24, %s40
    %p42 = scmp.eq.s32.totalorder %s16, 0
    %p43 = por %p41, %p42
    %s45 = sadd.s32 %s44, 1
    %p48 = scmp.eq.s32.totalorder %s10, 1
    %p49 = scmp.ne.s32.totalorder %s44, %s46
    %p50 = scmp.eq.s32.totalorder %s10, 0
    %p51 = por %p49, %p50
    %p52 = scmp.ne.s32.totalorder %s44, %s46
    %p53 = scmp.eq.s32.totalorder %s15, 1
    %p54 = por %p52, %p53
    %p55 = scmp.ne.s32.totalorder %s46, %s47
    %p56 = scmp.eq.s32.totalorder %s15, 0
    %p57 = por %p55, %p56
    %p58 = scmp.ne.s32.totalorder %s46, %s47
    %p59 = scmp.eq.s32.totalorder %s16, 1
    %p60 = por %p58, %p59
    %p62 = scmp.ne.s32.totalorder %s47, %s61
    %p63 = scmp.eq.s32.totalorder %s16, 0
    %p64 = por %p62, %p63
    %s66 = sadd.s32 %s65, 1
    %p69 = scmp.eq.s32.totalorder %s10, 1
    %p70 = scmp.ne.s32.totalorder %s65, %s67
    %p71 = scmp.eq.s32.totalorder %s10, 0
    %p72 = por %p70, %p71
    %p73 = scmp.ne.s32.totalorder %s65, %s67
    %p74 = scmp.eq.s32.totalorder %s15, 1
    %p75 = por %p73, %p74
    %p76 = scmp.ne.s32.totalorder %s67, %s68
    %p77 = scmp.eq.s32.totalorder %s15, 0
    %p78 = por %p76, %p77
    %p79 = scmp.ne.s32.totalorder %s67, %s68
    %p80 = scmp.eq.s32.totalorder %s16, 1
    %p81 = por %p79, %p80
    %p83 = scmp.ne.s32.totalorder %s68, %s82
    %p84 = scmp.eq.s32.totalorder %s16, 0
    %p85 = por %p83, %p84
    %s87 = sadd.s32 %s86, 1
    %p90 = scmp.eq.s32.totalorder %s10, 1
    %p91 = scmp.ne.s32.totalorder %s86, %s88
    %p92 = scmp.eq.s32.totalorder %s10, 0
    %p93 = por %p91, %p92
    %p94 = scmp.ne.s32.totalorder %s86, %s88
    %p95 = scmp.eq.s32.totalorder %s15, 1
    %p96 = por %p94, %p95
    %p97 = scmp.ne.s32.totalorder %s88, %s89
    %p98 = scmp.eq.s32.totalorder %s15, 0
    %p99 = por %p97, %p98
    %p100 = scmp.ne.s32.totalorder %s88, %s89
    %p101 = scmp.eq.s32.totalorder %s16, 1
    %p102 = por %p100, %p101
    %p104 = scmp.ne.s32.totalorder %s89, %s103
    %p105 = scmp.eq.s32.totalorder %s16, 0
    %p106 = por %p104, %p105
    %s107 = ssub.s32 %s10, %s17
    %p108 = scmp.eq.s32.totalorder %s107, 0
    %s110 = sadd.s32 %s109, 1
    %s111 = scalar_select %p108, %s109, %s110
    %p114 = pneg %p108
    %p115 = scmp.eq.s32.totalorder %s10, 1
    %p116 = por %p114, %p115
    %p117 = scmp.ne.s32.totalorder %s109, %s112
    %p118 = scmp.eq.s32.totalorder %s10, 0
    %p119 = por %p117, %p118
    %p120 = scmp.ne.s32.totalorder %s109, %s112
    %p121 = scmp.eq.s32.totalorder %s15, 1
    %p122 = por %p120, %p121
    %p123 = scmp.ne.s32.totalorder %s112, %s113
    %p124 = scmp.eq.s32.totalorder %s15, 0
    %p125 = por %p123, %p124
    %p126 = scmp.ne.s32.totalorder %s112, %s113
    %p127 = scmp.eq.s32.totalorder %s16, 1
    %p128 = por %p126, %p127
    %p130 = scmp.ne.s32.totalorder %s113, %s129
    %p131 = scmp.eq.s32.totalorder %s16, 0
    %p132 = por %p130, %p131
    %p133 = scmp.le.s32.totalorder 1, %s10
    %p134 = scmp.lt.s32.totalorder %s10, 3
    %p135 = pnand %p133, %p134
    %p136 = pneg %p135
    // Predicated region
    $region9: #{w_residual_forward.2} parent=5 // pred_check
      _
    $region10: #{w_residual_forward.2} parent=5 // pred_check_branch
      %138 = sbr.rel (%p135) target = $region12
    $region11: #{w_residual_forward.2} parent=5 // pred_region
      %s139 = ssub.s32 %s10, 1
      // Predicated region
      $region13: #{w_residual_forward.2} parent=11 // pred_check
        %p140 = pneg %p57
      $region14: #{w_residual_forward.2} parent=11 // pred_check_branch
        %142 = sbr.rel (%p140) target = $region16
      $region15: #{w_residual_forward.2} parent=11 // pred_region
        _
      $region16: #{w_residual_forward.2} parent=11 // pred_fallthru
        _
      // Predicated region
      $region17: #{w_residual_forward.2} parent=11 // pred_check
        %p143 = pneg %p78
      $region18: #{w_residual_forward.2} parent=11 // pred_check_branch
        %145 = sbr.rel (%p143) target = $region20
      $region19: #{w_residual_forward.2} parent=11 // pred_region
        _
      $region20: #{w_residual_forward.2} parent=11 // pred_fallthru
        _
      // Predicated region
      $region21: #{w_residual_forward.2} parent=11 // pred_check
        %p146 = pneg %p99
      $region22: #{w_residual_forward.2} parent=11 // pred_check_branch
        %148 = sbr.rel (%p146) target = $region24
      $region23: #{w_residual_forward.2} parent=11 // pred_region
        _
      $region24: #{w_residual_forward.2} parent=11 // pred_fallthru
        _
    $region12: #{w_residual_forward.2} parent=5 // pred_fallthru
      _
    %p149 = scmp.lt.s32.totalorder %s10, 2
    // Predicated region
    $region25: #{w_residual_forward.2} parent=5 // pred_check
      %p150 = pneg %p149
    $region26: #{w_residual_forward.2} parent=5 // pred_check_branch
      %152 = sbr.rel (%p150) target = $region28
    $region27: #{w_residual_forward.2} parent=5 // pred_region
      // Predicated region
      $region29: #{w_residual_forward.2} parent=27 // pred_check
        %p153 = pneg %p30
      $region30: #{w_residual_forward.2} parent=27 // pred_check_branch
        %155 = sbr.rel (%p153) target = $region32
      $region31: #{w_residual_forward.2} parent=27 // pred_region
        %s156 = smul.u32 4, %s10
        %p157 = scmp.lt.s32.totalorder %s156, 7
        %s158 = scalar_select %p157, %s156, 7
        %s159 = smul.addr %s158, 8
        %s160 = smul.addr %s159, 8
        %s161 = scalar_lea.vmem %s0, %s160
        %s162 = smul.u32 4, %s10
      $region32: #{w_residual_forward.2} parent=27 // pred_fallthru
        _
    $region28: #{w_residual_forward.2} parent=5 // pred_fallthru
      _
    %p163 = scmp.le.s32.totalorder 1, %s10
    %p164 = scmp.lt.s32.totalorder %s10, 3
    %p165 = pnand %p163, %p164
    %p166 = pneg %p165
    // Predicated region
    $region33: #{w_residual_forward.2} parent=5 // pred_check
      _
    $region34: #{w_residual_forward.2} parent=5 // pred_check_branch
      %168 = sbr.rel (%p165) target = $region36
    $region35: #{w_residual_forward.2} parent=5 // pred_region
      %s169 = ssub.s32 %s10, 1
      %s170 = smul.u32 4, %s15
      %p171 = scmp.lt.s32.totalorder %s170, 7
      %s172 = scalar_select %p171, %s170, 7
      %s173 = smul.addr %s172, 8
      %s174 = smul.addr %s173, 8
      %s175 = scalar_lea.vmem %s0, %s174
      %p176 = pneg %p36
      %p177 = pneg %p33
      %p178 = pneg %p57
      %p179 = pneg %p54
      %p180 = pneg %p78
      %p181 = pneg %p75
      %p182 = pneg %p99
      %p183 = pneg %p96
      %p184 = pneg %p125
      %p185 = pneg %p122
      %s186 = smul.u32 8, %s15
      %p187 = scmp.lt.s32.totalorder %s186, 15
      %s188 = scalar_select %p187, %s186, 15
      %s189 = smul.addr %s188, 8
      %s190 = scalar_lea.vmem %s4, %s189
      %s191 = smul.u32 4, %s15
      %p192 = scmp.lt.s32.totalorder %s191, 7
      %s193 = scalar_select %p192, %s191, 7
      %s194 = smul.addr %s193, 8
      %s195 = smul.addr %s194, 8
      %s196 = scalar_lea.vmem %s0, %s195
      %s197 = smul.u32 4, %s15
      %s198 = smul.u32 8, %s15
      %p199 = scmp.lt.s32.totalorder %s198, 15
      %s200 = scalar_select %p199, %s198, 15
      %s201 = smul.addr %s200, 8
      %s202 = scalar_lea.vmem %s4, %s201
      %s203 = smul.u32 8, %s15
      %vm204 = vcmask 31744
      %205 = vst.msk [vmem:[#allocation2] sm:$0xff] %vm204, 0.0
      %vm206 = vcmask 24576
      %207 = vst.msk [vmem:[#allocation2 + $0x8] sm:$0x1] %vm206, 0.0
      %208 = vst.msk [vmem:[#allocation2 + $0x10] sm:$0xff] %vm204, 0.0
      %209 = vst.msk [vmem:[#allocation2 + $0x18] sm:$0x1] %vm206, 0.0
      %210 = vst.msk [vmem:[#allocation2 + $0x20] sm:$0xff] %vm204, 0.0
      %211 = vst.msk [vmem:[#allocation2 + $0x28] sm:$0x1] %vm206, 0.0
      %212 = vst.msk [vmem:[#allocation2 + $0x30] sm:$0xff] %vm204, 0.0
      %213 = vst.msk [vmem:[#allocation2 + $0x38] sm:$0x1] %vm206, 0.0
      %214 = vst.msk [vmem:[#allocation2 + $0x40] sm:$0xff] %vm204, 0.0
      %215 = vst.msk [vmem:[#allocation2 + $0x48] sm:$0x1] %vm206, 0.0
      %216 = vst.msk [vmem:[#allocation2 + $0x50] sm:$0xff] %vm204, 0.0
      %217 = vst.msk [vmem:[#allocation2 + $0x58] sm:$0x1] %vm206, 0.0
      %218 = vst.msk [vmem:[#allocation2 + $0x60] sm:$0xff] %vm204, 0.0
      %219 = vst.msk [vmem:[#allocation2 + $0x68] sm:$0x1] %vm206, 0.0
      %220 = vst.msk [vmem:[#allocation2 + $0x70] sm:$0xff] %vm204, 0.0
      %221 = vst.msk [vmem:[#allocation2 + $0x78] sm:$0x1] %vm206, 0.0
      %222 = vst.msk [vmem:[#allocation2 + $0x80] sm:$0xff] %vm204, 0.0
      %223 = vst.msk [vmem:[#allocation2 + $0x88] sm:$0x1] %vm206, 0.0
      %224 = vst.msk [vmem:[#allocation2 + $0x90] sm:$0xff] %vm204, 0.0
      %225 = vst.msk [vmem:[#allocation2 + $0x98] sm:$0x1] %vm206, 0.0
      %226 = vst.msk [vmem:[#allocation2 + $0xa0] sm:$0xff] %vm204, 0.0
      %227 = vst.msk [vmem:[#allocation2 + $0xa8] sm:$0x1] %vm206, 0.0
      %228 = vst.msk [vmem:[#allocation2 + $0xb0] sm:$0xff] %vm204, 0.0
      %229 = vst.msk [vmem:[#allocation2 + $0xb8] sm:$0x1] %vm206, 0.0
      %230 = vst.msk [vmem:[#allocation2 + $0xc0] sm:$0xff] %vm204, 0.0
      %231 = vst.msk [vmem:[#allocation2 + $0xc8] sm:$0x1] %vm206, 0.0
      %232 = vst.msk [vmem:[#allocation2 + $0xd0] sm:$0xff] %vm204, 0.0
      %233 = vst.msk [vmem:[#allocation2 + $0xd8] sm:$0x1] %vm206, 0.0
      %234 = vst.msk [vmem:[#allocation2 + $0xe0] sm:$0xff] %vm204, 0.0
      %235 = vst.msk [vmem:[#allocation2 + $0xe8] sm:$0x1] %vm206, 0.0
      %236 = vst.msk [vmem:[#allocation2 + $0xf0] sm:$0xff] %vm204, 0.0
      %237 = vst.msk [vmem:[#allocation2 + $0xf8] sm:$0x1] %vm206, 0.0
      %238 = vst.msk [vmem:[#allocation2 + $0x100] sm:$0xff] %vm204, 0.0
      %239 = vst.msk [vmem:[#allocation2 + $0x108] sm:$0x1] %vm206, 0.0
      %240 = vst.msk [vmem:[#allocation2 + $0x110] sm:$0xff] %vm204, 0.0
      %241 = vst.msk [vmem:[#allocation2 + $0x118] sm:$0x1] %vm206, 0.0
      %242 = vst.msk [vmem:[#allocation2 + $0x120] sm:$0xff] %vm204, 0.0
      %243 = vst.msk [vmem:[#allocation2 + $0x128] sm:$0x1] %vm206, 0.0
      %244 = vst.msk [vmem:[#allocation2 + $0x130] sm:$0xff] %vm204, 0.0
      %245 = vst.msk [vmem:[#allocation2 + $0x138] sm:$0x1] %vm206, 0.0
      %246 = vst.msk [vmem:[#allocation2 + $0x140] sm:$0xff] %vm204, 0.0
      %247 = vst.msk [vmem:[#allocation2 + $0x148] sm:$0x1] %vm206, 0.0
      %248 = vst.msk [vmem:[#allocation2 + $0x150] sm:$0xff] %vm204, 0.0
      %249 = vst.msk [vmem:[#allocation2 + $0x158] sm:$0x1] %vm206, 0.0
      %250 = vst.msk [vmem:[#allocation2 + $0x160] sm:$0xff] %vm204, 0.0
      %251 = vst.msk [vmem:[#allocation2 + $0x168] sm:$0x1] %vm206, 0.0
      %252 = vst.msk [vmem:[#allocation2 + $0x170] sm:$0xff] %vm204, 0.0
      %253 = vst.msk [vmem:[#allocation2 + $0x178] sm:$0x1] %vm206, 0.0
      %254 = vst.msk [vmem:[#allocation2 + $0x180] sm:$0xff] %vm204, 0.0
      %255 = vst.msk [vmem:[#allocation2 + $0x188] sm:$0x1] %vm206, 0.0
      %256 = vst.msk [vmem:[#allocation2 + $0x190] sm:$0xff] %vm204, 0.0
      %257 = vst.msk [vmem:[#allocation2 + $0x198] sm:$0x1] %vm206, 0.0
      %258 = vst.msk [vmem:[#allocation2 + $0x1a0] sm:$0xff] %vm204, 0.0
      %259 = vst.msk [vmem:[#allocation2 + $0x1a8] sm:$0x1] %vm206, 0.0
      %260 = vst.msk [vmem:[#allocation2 + $0x1b0] sm:$0xff] %vm204, 0.0
      %261 = vst.msk [vmem:[#allocation2 + $0x1b8] sm:$0x1] %vm206, 0.0
      %262 = vst.msk [vmem:[#allocation2 + $0x1c0] sm:$0xff] %vm204, 0.0
      %263 = vst.msk [vmem:[#allocation2 + $0x1c8] sm:$0x1] %vm206, 0.0
      %264 = vst.msk [vmem:[#allocation2 + $0x1d0] sm:$0xff] %vm204, 0.0
      %265 = vst.msk [vmem:[#allocation2 + $0x1d8] sm:$0x1] %vm206, 0.0
      %266 = vst.msk [vmem:[#allocation2 + $0x1e0] sm:$0xff] %vm204, 0.0
      %267 = vst.msk [vmem:[#allocation2 + $0x1e8] sm:$0x1] %vm206, 0.0
      %268 = vst.msk [vmem:[#allocation2 + $0x1f0] sm:$0xff] %vm204, 0.0
      %269 = vst.msk [vmem:[#allocation2 + $0x1f8] sm:$0x1] %vm206, 0.0
      %270 = vst.msk [vmem:[#allocation2 + $0x200] sm:$0xff] %vm204, 0.0
      %271 = vst.msk [vmem:[#allocation2 + $0x208] sm:$0x1] %vm206, 0.0
      %272 = vst.msk [vmem:[#allocation2 + $0x210] sm:$0xff] %vm204, 0.0
      %273 = vst.msk [vmem:[#allocation2 + $0x218] sm:$0x1] %vm206, 0.0
      %274 = vst.msk [vmem:[#allocation2 + $0x220] sm:$0xff] %vm204, 0.0
      %275 = vst.msk [vmem:[#allocation2 + $0x228] sm:$0x1] %vm206, 0.0
      %276 = vst.msk [vmem:[#allocation2 + $0x230] sm:$0xff] %vm204, 0.0
      %277 = vst.msk [vmem:[#allocation2 + $0x238] sm:$0x1] %vm206, 0.0
      %v278 = vld [vmem:[%s1] sm:$0x1]
      %v279 = vld [vmem:[%s2] sm:$0x1]
      %s280 = scalar_lea.vmem %s196, 192
      %v281 = vld [vmem:[%s280] sm:$0xff]
      %v282 = vld [vmem:[%s280 + $0x8] sm:$0xff]
      %v283 = vld [vmem:[%s280 + $0x10] sm:$0xff]
      %v284 = vld [vmem:[%s280 + $0x18] sm:$0xff]
      %v285 = vld [vmem:[%s280 + $0x20] sm:$0xff]
      %v286 = vld [vmem:[%s280 + $0x28] sm:$0xff]
      %v287 = vld [vmem:[%s280 + $0x30] sm:$0xff]
      %v288 = vld [vmem:[%s280 + $0x38] sm:$0xff]
      %v290 = vlaneseq
      %v291 = vshrl.u32 %v290, 7
      %v292 = vsub.s32 0, %v291
      %v293 = vrot.slane %v278, %v292
      %v295 = vmul.f32 %v281, %v293
      %v296 = vmul.f32 %v282, %v293
      %v297 = vmul.f32 %v283, %v293
      %v298 = vmul.f32 %v284, %v293
      %v299 = vmul.f32 %v285, %v293
      %v300 = vmul.f32 %v286, %v293
      %v301 = vmul.f32 %v287, %v293
      %v302 = vmul.f32 %v288, %v293
      %v304 = vlaneseq
      %v305 = vshrl.u32 %v304, 7
      %v306 = vsub.s32 0, %v305
      %v307 = vrot.slane %v279, %v306
      %v309 = vadd.f32 %v295, %v307
      %v310 = vadd.f32 %v296, %v307
      %v311 = vadd.f32 %v297, %v307
      %v312 = vadd.f32 %v298, %v307
      %v313 = vadd.f32 %v299, %v307
      %v314 = vadd.f32 %v300, %v307
      %v315 = vadd.f32 %v301, %v307
      %v316 = vadd.f32 %v302, %v307
      %vm317 = vcmp.ge.f32.partialorder %v309, 0.0
      %vm318 = vcmp.ge.f32.partialorder %v310, 0.0
      %vm319 = vcmp.ge.f32.partialorder %v311, 0.0
      %vm320 = vcmp.ge.f32.partialorder %v312, 0.0
      %vm321 = vcmp.ge.f32.partialorder %v313, 0.0
      %vm322 = vcmp.ge.f32.partialorder %v314, 0.0
      %vm323 = vcmp.ge.f32.partialorder %v315, 0.0
      %vm324 = vcmp.ge.f32.partialorder %v316, 0.0
      %v325 = vmul.f32 %v309, 0.1
      %v326 = vmul.f32 %v310, 0.1
      %v327 = vmul.f32 %v311, 0.1
      %v328 = vmul.f32 %v312, 0.1
      %v329 = vmul.f32 %v313, 0.1
      %v330 = vmul.f32 %v314, 0.1
      %v331 = vmul.f32 %v315, 0.1
      %v332 = vmul.f32 %v316, 0.1
      %v333 = vsel %vm317, %v309, %v325
      %v334 = vsel %vm318, %v310, %v326
      %v335 = vsel %vm319, %v311, %v327
      %v336 = vsel %vm320, %v312, %v328
      %v337 = vsel %vm321, %v313, %v329
      %v338 = vsel %vm322, %v314, %v330
      %v339 = vsel %vm323, %v315, %v331
      %v340 = vsel %vm324, %v316, %v332
      %s341 = scalar_lea.vmem [#allocation2], 16
      %342 = vst.msk [vmem:[%s341 + $0x1] sm:$0xff] %vm204, %v333
      %343 = vst.msk [vmem:[%s341 + $0x11] sm:$0xff] %vm204, %v334
      %344 = vst.msk [vmem:[%s341 + $0x21] sm:$0xff] %vm204, %v335
      %345 = vst.msk [vmem:[%s341 + $0x31] sm:$0xff] %vm204, %v336
      %346 = vst.msk [vmem:[%s341 + $0x41] sm:$0xff] %vm204, %v337
      %347 = vst.msk [vmem:[%s341 + $0x51] sm:$0xff] %vm204, %v338
      %348 = vst.msk [vmem:[%s341 + $0x61] sm:$0xff] %vm204, %v339
      %349 = vst.msk [vmem:[%s341 + $0x71] sm:$0xff] %vm204, %v340
      %s350 = scalar_lea.vmem %s196, 128
      %v351 = vld [vmem:[%s350] sm:$0xff]
      %v352 = vld [vmem:[%s350 + $0x8] sm:$0xff]
      %v353 = vld [vmem:[%s350 + $0x10] sm:$0xff]
      %v354 = vld [vmem:[%s350 + $0x18] sm:$0xff]
      %v355 = vld [vmem:[%s350 + $0x20] sm:$0xff]
      %v356 = vld [vmem:[%s350 + $0x28] sm:$0xff]
      %v357 = vld [vmem:[%s350 + $0x30] sm:$0xff]
      %v358 = vld [vmem:[%s350 + $0x38] sm:$0xff]
      %v359 = vmul.f32 %v351, %v293
      %v360 = vmul.f32 %v352, %v293
      %v361 = vmul.f32 %v353, %v293
      %v362 = vmul.f32 %v354, %v293
      %v363 = vmul.f32 %v355, %v293
      %v364 = vmul.f32 %v356, %v293
      %v365 = vmul.f32 %v357, %v293
      %v366 = vmul.f32 %v358, %v293
      %v367 = vadd.f32 %v359, %v307
      %v368 = vadd.f32 %v360, %v307
      %v369 = vadd.f32 %v361, %v307
      %v370 = vadd.f32 %v362, %v307
      %v371 = vadd.f32 %v363, %v307
      %v372 = vadd.f32 %v364, %v307
      %v373 = vadd.f32 %v365, %v307
      %v374 = vadd.f32 %v366, %v307
      %vm375 = vcmp.ge.f32.partialorder %v367, 0.0
      %vm376 = vcmp.ge.f32.partialorder %v368, 0.0
      %vm377 = vcmp.ge.f32.partialorder %v369, 0.0
      %vm378 = vcmp.ge.f32.partialorder %v370, 0.0
      %vm379 = vcmp.ge.f32.partialorder %v371, 0.0
      %vm380 = vcmp.ge.f32.partialorder %v372, 0.0
      %vm381 = vcmp.ge.f32.partialorder %v373, 0.0
      %vm382 = vcmp.ge.f32.partialorder %v374, 0.0
      %v383 = vmul.f32 %v367, 0.1
      %v384 = vmul.f32 %v368, 0.1
      %v385 = vmul.f32 %v369, 0.1
      %v386 = vmul.f32 %v370, 0.1
      %v387 = vmul.f32 %v371, 0.1
      %v388 = vmul.f32 %v372, 0.1
      %v389 = vmul.f32 %v373, 0.1
      %v390 = vmul.f32 %v374, 0.1
      %v391 = vsel %vm375, %v367, %v383
      %v392 = vsel %vm376, %v368, %v384
      %v393 = vsel %vm377, %v369, %v385
      %v394 = vsel %vm378, %v370, %v386
      %v395 = vsel %vm379, %v371, %v387
      %v396 = vsel %vm380, %v372, %v388
      %v397 = vsel %vm381, %v373, %v389
      %v398 = vsel %vm382, %v374, %v390
      %s399 = scalar_lea.vmem [#allocation2], 160
      %400 = vst.msk [vmem:[%s399] sm:$0xff] %vm204, %v391
      %401 = vst.msk [vmem:[%s399 + $0x10] sm:$0xff] %vm204, %v392
      %402 = vst.msk [vmem:[%s399 + $0x20] sm:$0xff] %vm204, %v393
      %403 = vst.msk [vmem:[%s399 + $0x30] sm:$0xff] %vm204, %v394
      %404 = vst.msk [vmem:[%s399 + $0x40] sm:$0xff] %vm204, %v395
      %405 = vst.msk [vmem:[%s399 + $0x50] sm:$0xff] %vm204, %v396
      %406 = vst.msk [vmem:[%s399 + $0x60] sm:$0xff] %vm204, %v397
      %407 = vst.msk [vmem:[%s399 + $0x70] sm:$0xff] %vm204, %v398
      %s408 = scalar_lea.vmem %s196, 64
      %v409 = vld [vmem:[%s408] sm:$0xff]
      %v410 = vld [vmem:[%s408 + $0x8] sm:$0xff]
      %v411 = vld [vmem:[%s408 + $0x10] sm:$0xff]
      %v412 = vld [vmem:[%s408 + $0x18] sm:$0xff]
      %v413 = vld [vmem:[%s408 + $0x20] sm:$0xff]
      %v414 = vld [vmem:[%s408 + $0x28] sm:$0xff]
      %v415 = vld [vmem:[%s408 + $0x30] sm:$0xff]
      %v416 = vld [vmem:[%s408 + $0x38] sm:$0xff]
      %v417 = vmul.f32 %v409, %v293
      %v418 = vmul.f32 %v410, %v293
      %v419 = vmul.f32 %v411, %v293
      %v420 = vmul.f32 %v412, %v293
      %v421 = vmul.f32 %v413, %v293
      %v422 = vmul.f32 %v414, %v293
      %v423 = vmul.f32 %v415, %v293
      %v424 = vmul.f32 %v416, %v293
      %v425 = vadd.f32 %v417, %v307
      %v426 = vadd.f32 %v418, %v307
      %v427 = vadd.f32 %v419, %v307
      %v428 = vadd.f32 %v420, %v307
      %v429 = vadd.f32 %v421, %v307
      %v430 = vadd.f32 %v422, %v307
      %v431 = vadd.f32 %v423, %v307
      %v432 = vadd.f32 %v424, %v307
      %vm433 = vcmp.ge.f32.partialorder %v425, 0.0
      %vm434 = vcmp.ge.f32.partialorder %v426, 0.0
      %vm435 = vcmp.ge.f32.partialorder %v427, 0.0
      %vm436 = vcmp.ge.f32.partialorder %v428, 0.0
      %vm437 = vcmp.ge.f32.partialorder %v429, 0.0
      %vm438 = vcmp.ge.f32.partialorder %v430, 0.0
      %vm439 = vcmp.ge.f32.partialorder %v431, 0.0
      %vm440 = vcmp.ge.f32.partialorder %v432, 0.0
      %v441 = vmul.f32 %v425, 0.1
      %v442 = vmul.f32 %v426, 0.1
      %v443 = vmul.f32 %v427, 0.1
      %v444 = vmul.f32 %v428, 0.1
      %v445 = vmul.f32 %v429, 0.1
      %v446 = vmul.f32 %v430, 0.1
      %v447 = vmul.f32 %v431, 0.1
      %v448 = vmul.f32 %v432, 0.1
      %v449 = vsel %vm433, %v425, %v441
      %v450 = vsel %vm434, %v426, %v442
      %v451 = vsel %vm435, %v427, %v443
      %v452 = vsel %vm436, %v428, %v444
      %v453 = vsel %vm437, %v429, %v445
      %v454 = vsel %vm438, %v430, %v446
      %v455 = vsel %vm439, %v431, %v447
      %v456 = vsel %vm440, %v432, %v448
      %s457 = scalar_lea.vmem [#allocation2], 288
      %458 = vst.msk [vmem:[%s457 + $0x1] sm:$0xff] %vm204, %v449
      %459 = vst.msk [vmem:[%s457 + $0x11] sm:$0xff] %vm204, %v450
      %460 = vst.msk [vmem:[%s457 + $0x21] sm:$0xff] %vm204, %v451
      %461 = vst.msk [vmem:[%s457 + $0x31] sm:$0xff] %vm204, %v452
      %462 = vst.msk [vmem:[%s457 + $0x41] sm:$0xff] %vm204, %v453
      %463 = vst.msk [vmem:[%s457 + $0x51] sm:$0xff] %vm204, %v454
      %464 = vst.msk [vmem:[%s457 + $0x61] sm:$0xff] %vm204, %v455
      %465 = vst.msk [vmem:[%s457 + $0x71] sm:$0xff] %vm204, %v456
      %v466 = vld [vmem:[%s196] sm:$0xff]
      %v467 = vld [vmem:[%s196 + $0x8] sm:$0xff]
      %v468 = vld [vmem:[%s196 + $0x10] sm:$0xff]
      %v469 = vld [vmem:[%s196 + $0x18] sm:$0xff]
      %v470 = vld [vmem:[%s196 + $0x20] sm:$0xff]
      %v471 = vld [vmem:[%s196 + $0x28] sm:$0xff]
      %v472 = vld [vmem:[%s196 + $0x30] sm:$0xff]
      %v473 = vld [vmem:[%s196 + $0x38] sm:$0xff]
      %v474 = vmul.f32 %v466, %v293
      %v475 = vmul.f32 %v467, %v293
      %v476 = vmul.f32 %v468, %v293
      %v477 = vmul.f32 %v469, %v293
      %v478 = vmul.f32 %v470, %v293
      %v479 = vmul.f32 %v471, %v293
      %v480 = vmul.f32 %v472, %v293
      %v481 = vmul.f32 %v473, %v293
      %v482 = vadd.f32 %v474, %v307
      %v483 = vadd.f32 %v475, %v307
      %v484 = vadd.f32 %v476, %v307
      %v485 = vadd.f32 %v477, %v307
      %v486 = vadd.f32 %v478, %v307
      %v487 = vadd.f32 %v479, %v307
      %v488 = vadd.f32 %v480, %v307
      %v489 = vadd.f32 %v481, %v307
      %vm490 = vcmp.ge.f32.partialorder %v482, 0.0
      %vm491 = vcmp.ge.f32.partialorder %v483, 0.0
      %vm492 = vcmp.ge.f32.partialorder %v484, 0.0
      %vm493 = vcmp.ge.f32.partialorder %v485, 0.0
      %vm494 = vcmp.ge.f32.partialorder %v486, 0.0
      %vm495 = vcmp.ge.f32.partialorder %v487, 0.0
      %vm496 = vcmp.ge.f32.partialorder %v488, 0.0
      %vm497 = vcmp.ge.f32.partialorder %v489, 0.0
      %v498 = vmul.f32 %v482, 0.1
      %v499 = vmul.f32 %v483, 0.1
      %v500 = vmul.f32 %v484, 0.1
      %v501 = vmul.f32 %v485, 0.1
      %v502 = vmul.f32 %v486, 0.1
      %v503 = vmul.f32 %v487, 0.1
      %v504 = vmul.f32 %v488, 0.1
      %v505 = vmul.f32 %v489, 0.1
      %v506 = vsel %vm490, %v482, %v498
      %v507 = vsel %vm491, %v483, %v499
      %v508 = vsel %vm492, %v484, %v500
      %v509 = vsel %vm493, %v485, %v501
      %v510 = vsel %vm494, %v486, %v502
      %v511 = vsel %vm495, %v487, %v503
      %v512 = vsel %vm496, %v488, %v504
      %v513 = vsel %vm497, %v489, %v505
      %s514 = scalar_lea.vmem [#allocation2], 432
      %515 = vst.msk [vmem:[%s514] sm:$0xff] %vm204, %v506
      %516 = vst.msk [vmem:[%s514 + $0x10] sm:$0xff] %vm204, %v507
      %517 = vst.msk [vmem:[%s514 + $0x20] sm:$0xff] %vm204, %v508
      %518 = vst.msk [vmem:[%s514 + $0x30] sm:$0xff] %vm204, %v509
      %519 = vst.msk [vmem:[%s514 + $0x40] sm:$0xff] %vm204, %v510
      %520 = vst.msk [vmem:[%s514 + $0x50] sm:$0xff] %vm204, %v511
      %521 = vst.msk [vmem:[%s514 + $0x60] sm:$0xff] %vm204, %v512
      %522 = vst.msk [vmem:[%s514 + $0x70] sm:$0xff] %vm204, %v513
      %v523 = vld [vmem:[#allocation2] sm:$0xff]
      %v524 = vld [vmem:[#allocation2 + $0x10] sm:$0xff]
      %v525 = vld [vmem:[#allocation2 + $0x20] sm:$0xff]
      %v526 = vld [vmem:[#allocation2 + $0x30] sm:$0xff]
      %v527 = vld [vmem:[#allocation2 + $0x40] sm:$0xff]
      %v528 = vld [vmem:[#allocation2 + $0x50] sm:$0xff]
      %v529 = vld [vmem:[#allocation2 + $0x60] sm:$0xff]
      %v530 = vld [vmem:[#allocation2 + $0x70] sm:$0xff]
      %v531 = vld [vmem:[%s3] sm:$0xf]
      %s532 = scalar_lea.vmem [#allocation2], 144
      %v533 = vld [vmem:[%s532] sm:$0xff]
      %v534 = vld [vmem:[%s532 + $0x10] sm:$0xff]
      %v535 = vld [vmem:[%s532 + $0x20] sm:$0xff]
      %v536 = vld [vmem:[%s532 + $0x30] sm:$0xff]
      %v537 = vld [vmem:[%s532 + $0x40] sm:$0xff]
      %v538 = vld [vmem:[%s532 + $0x50] sm:$0xff]
      %v539 = vld [vmem:[%s532 + $0x60] sm:$0xff]
      %v540 = vld [vmem:[%s532 + $0x70] sm:$0xff]
      %s541 = scalar_lea.vmem %s3, 4
      %v542 = vld [vmem:[%s541] sm:$0xf]
      %v544 = vsel %vm204, %v533, 0
      %v547 = vsel %vm204, %v534, 0
      %v550 = vsel %vm204, %v535, 0
      %v553 = vsel %vm204, %v536, 0
      %v556 = vsel %vm204, %v537, 0
      %v559 = vsel %vm204, %v538, 0
      %v562 = vsel %vm204, %v539, 0
      %v565 = vsel %vm204, %v540, 0
      %vm567 = vcmask 1043456
      %v569 = vsel %vm567, %v542, 0
      %571 = vmatprep.subr.mxu0 0.0
      %572 = vmatpush1.msra.mxu0 %v569
      %573 = vmatprep.subr.mxu0 0.0
      %574 = vmatpush1.msra.mxu0 0.0
      %575 = vmatprep.subr.mxu0 0.0
      %576 = vmatpush1.msra.mxu0 0.0
      %577 = vmatprep.subr.mxu0 0.0
      %578 = vmatpush1.msra.mxu0 0.0
      %579 = vmatprep.subr.mxu0 0.0
      %580 = vmatpush1.msra.mxu0 0.0
      %581 = vmatprep.subr.mxu0 0.0
      %582 = vmatpush1.msra.mxu0 0.0
      %583 = vmatprep.subr.mxu0 0.0
      %584 = vmatpush1.msra.mxu0 0.0
      %585 = vmatprep.subr.mxu0 0.0
      %586 = vmatpush1.msra.mxu0 0.0
      %587 = vmatprep.subr.mxu0 0.0
      %588 = vmatpush1.msra.mxu0 0.0
      %589 = vmatprep.subr.mxu0 0.0
      %590 = vmatpush1.msra.mxu0 0.0
      %591 = vmatprep.subr.mxu0 0.0
      %592 = vmatpush1.msra.mxu0 0.0
      %593 = vmatprep.subr.mxu0 0.0
      %594 = vmatpush1.msra.mxu0 0.0
      %595 = vmatprep.subr.mxu0 0.0
      %596 = vmatpush1.msra.mxu0 0.0
      %597 = vmatprep.subr.mxu0 0.0
      %598 = vmatpush1.msra.mxu0 0.0
      %599 = vmatprep.subr.mxu0 0.0
      %600 = vmatpush1.msra.mxu0 0.0
      %601 = vmatprep.subr.mxu0 0.0
      %602 = vmatpush1.msra.mxu0 0.0
      %603 = vmatprep.subr.mxu0 0.0
      %604 = vmatpush1.msra.mxu0 0.0
      %605 = vmatprep.subr.mxu0 0.0
      %606 = vmatpush1.msra.mxu0 0.0
      %607 = vmatprep.subr.mxu0 0.0
      %608 = vmatpush1.msra.mxu0 0.0
      %609 = vmatprep.subr.mxu0 0.0
      %610 = vmatpush1.msra.mxu0 0.0
      %611 = vmatprep.subr.mxu0 0.0
      %612 = vmatpush1.msra.mxu0 0.0
      %613 = vmatprep.subr.mxu0 0.0
      %614 = vmatpush1.msra.mxu0 0.0
      %615 = vmatprep.subr.mxu0 0.0
      %616 = vmatpush1.msra.mxu0 0.0
      %617 = vmatprep.subr.mxu0 0.0
      %618 = vmatpush1.msra.mxu0 0.0
      %619 = vmatprep.subr.mxu0 0.0
      %620 = vmatpush1.msra.mxu0 0.0
      %621 = vmatprep.subr.mxu0 0.0
      %622 = vmatpush1.msra.mxu0 0.0
      %623 = vmatprep.subr.mxu0 0.0
      %624 = vmatpush1.msra.mxu0 0.0
      %625 = vmatprep.subr.mxu0 0.0
      %626 = vmatpush1.msra.mxu0 0.0
      %627 = vmatprep.subr.mxu0 0.0
      %628 = vmatpush1.msra.mxu0 0.0
      %629 = vmatprep.subr.mxu0 0.0
      %630 = vmatpush1.msra.mxu0 0.0
      %631 = vmatprep.subr.mxu0 0.0
      %632 = vmatpush1.msra.mxu0 0.0
      %633 = vmatprep.subr.mxu0 0.0
      %634 = vmatpush1.msra.mxu0 0.0
      %635 = vmatprep.mubr.f32.mxu0 0.0
      %636 = vmatmul.mubr.f32.gmra.mrb[0].mxu0 %v544
      %v637 = vpop.f32.mrb[0].mxu0
      %v638 = vadd.f32 0.0, %v637
      %v639 = vpop.f32.mrb[0].mxu0
      %640 = vmatprep.mubr.f32.mxu0 0.0
      %641 = vmatmul.mubr.f32.gmra.mrb[0].mxu0 %v547
      %v642 = vpop.f32.mrb[0].mxu0
      %v643 = vadd.f32 0.0, %v642
      %v644 = vpop.f32.mrb[0].mxu0
      %645 = vmatprep.mubr.f32.mxu0 0.0
      %646 = vmatmul.mubr.f32.gmra.mrb[0].mxu0 %v550
      %v647 = vpop.f32.mrb[0].mxu0
      %v648 = vadd.f32 0.0, %v647
      %v649 = vpop.f32.mrb[0].mxu0
      %650 = vmatprep.mubr.f32.mxu0 0.0
      %651 = vmatmul.mubr.f32.gmra.mrb[0].mxu0 %v553
      %v652 = vpop.f32.mrb[0].mxu0
      %v653 = vadd.f32 0.0, %v652
      %v654 = vpop.f32.mrb[0].mxu0
      %655 = vmatprep.mubr.f32.mxu0 0.0
      %656 = vmatmul.mubr.f32.gmra.mrb[0].mxu0 %v556
      %v657 = vpop.f32.mrb[0].mxu0
      %v658 = vadd.f32 0.0, %v657
      %v659 = vpop.f32.mrb[0].mxu0
      %660 = vmatprep.mubr.f32.mxu0 0.0
      %661 = vmatmul.mubr.f32.gmra.mrb[0].mxu0 %v559
      %v662 = vpop.f32.mrb[0].mxu0
      %v663 = vadd.f32 0.0, %v662
      %v664 = vpop.f32.mrb[0].mxu0
      %665 = vmatprep.mubr.f32.mxu0 0.0
      %666 = vmatmul.mubr.f32.gmra.mrb[0].mxu0 %v562
      %v667 = vpop.f32.mrb[0].mxu0
      %v668 = vadd.f32 0.0, %v667
      %v669 = vpop.f32.mrb[0].mxu0
      %670 = vmatprep.mubr.f32.mxu0 0.0
      %671 = vmatmul.mubr.f32.gmra.mrb[0].mxu0 %v565
      %v672 = vpop.f32.mrb[0].mxu0
      %v673 = vadd.f32 0.0, %v672
      %v674 = vpop.f32.mrb[0].mxu0
      %675 = vdwg.mxu0
      %v677 = vsel %vm204, %v523, 0
      %v680 = vsel %vm204, %v524, 0
      %v683 = vsel %vm204, %v525, 0
      %v686 = vsel %vm204, %v526, 0
      %v689 = vsel %vm204, %v527, 0
      %v692 = vsel %vm204, %v528, 0
      %v695 = vsel %vm204, %v529, 0
      %v698 = vsel %vm204, %v530, 0
      %v701 = vsel %vm567, %v531, 0
      %703 = vmatprep.subr.mxu0 0.0
      %704 = vmatpush1.msra.mxu0 %v701
      %705 = vmatprep.subr.mxu0 0.0
      %706 = vmatpush1.msra.mxu0 0.0
      %707 = vmatprep.subr.mxu0 0.0
      %708 = vmatpush1.msra.mxu0 0.0
      %709 = vmatprep.subr.mxu0 0.0
      %710 = vmatpush1.msra.mxu0 0.0
      %711 = vmatprep.subr.mxu0 0.0
      %712 = vmatpush1.msra.mxu0 0.0
      %713 = vmatprep.subr.mxu0 0.0
      %714 = vmatpush1.msra.mxu0 0.0
      %715 = vmatprep.subr.mxu0 0.0
      %716 = vmatpush1.msra.mxu0 0.0
      %717 = vmatprep.subr.mxu0 0.0
      %718 = vmatpush1.msra.mxu0 0.0
      %719 = vmatprep.subr.mxu0 0.0
      %720 = vmatpush1.msra.mxu0 0.0
      %721 = vmatprep.subr.mxu0 0.0
      %722 = vmatpush1.msra.mxu0 0.0
      %723 = vmatprep.subr.mxu0 0.0
      %724 = vmatpush1.msra.mxu0 0.0
      %725 = vmatprep.subr.mxu0 0.0
      %726 = vmatpush1.msra.mxu0 0.0
      %727 = vmatprep.subr.mxu0 0.0
      %728 = vmatpush1.msra.mxu0 0.0
      %729 = vmatprep.subr.mxu0 0.0
      %730 = vmatpush1.msra.mxu0 0.0
      %731 = vmatprep.subr.mxu0 0.0
      %732 = vmatpush1.msra.mxu0 0.0
      %733 = vmatprep.subr.mxu0 0.0
      %734 = vmatpush1.msra.mxu0 0.0
      %735 = vmatprep.subr.mxu0 0.0
      %736 = vmatpush1.msra.mxu0 0.0
      %737 = vmatprep.subr.mxu0 0.0
      %738 = vmatpush1.msra.mxu0 0.0
      %739 = vmatprep.subr.mxu0 0.0
      %740 = vmatpush1.msra.mxu0 0.0
      %741 = vmatprep.subr.mxu0 0.0
      %742 = vmatpush1.msra.mxu0 0.0
      %743 = vmatprep.subr.mxu0 0.0
      %744 = vmatpush1.msra.mxu0 0.0
      %745 = vmatprep.subr.mxu0 0.0
      %746 = vmatpush1.msra.mxu0 0.0
      %747 = vmatprep.subr.mxu0 0.0
      %748 = vmatpush1.msra.mxu0 0.0
      %749 = vmatprep.subr.mxu0 0.0
      %750 = vmatpush1.msra.mxu0 0.0
      %751 = vmatprep.subr.mxu0 0.0
      %752 = vmatpush1.msra.mxu0 0.0
      %753 = vmatprep.subr.mxu0 0.0
      %754 = vmatpush1.msra.mxu0 0.0
      %755 = vmatprep.subr.mxu0 0.0
      %756 = vmatpush1.msra.mxu0 0.0
      %757 = vmatprep.subr.mxu0 0.0
      %758 = vmatpush1.msra.mxu0 0.0
      %759 = vmatprep.subr.mxu0 0.0
      %760 = vmatpush1.msra.mxu0 0.0
      %761 = vmatprep.subr.mxu0 0.0
      %762 = vmatpush1.msra.mxu0 0.0
      %763 = vmatprep.subr.mxu0 0.0
      %764 = vmatpush1.msra.mxu0 0.0
      %765 = vmatprep.subr.mxu0 0.0
      %766 = vmatpush1.msra.mxu0 0.0
      %767 = vmatprep.mubr.f32.mxu0 0.0
      %768 = vmatmul.mubr.f32.gmra.mrb[0].mxu0 %v677
      %v769 = vpop.f32.mrb[0].mxu0
      %v770 = vadd.f32 %v638, %v769
      %v771 = vpop.f32.mrb[0].mxu0
      %772 = vmatprep.mubr.f32.mxu0 0.0
      %773 = vmatmul.mubr.f32.gmra.mrb[0].mxu0 %v680
      %v774 = vpop.f32.mrb[0].mxu0
      %v775 = vadd.f32 %v643, %v774
      %v776 = vpop.f32.mrb[0].mxu0
      %777 = vmatprep.mubr.f32.mxu0 0.0
      %778 = vmatmul.mubr.f32.gmra.mrb[0].mxu0 %v683
      %v779 = vpop.f32.mrb[0].mxu0
      %v780 = vadd.f32 %v648, %v779
      %v781 = vpop.f32.mrb[0].mxu0
      %782 = vmatprep.mubr.f32.mxu0 0.0
      %783 = vmatmul.mubr.f32.gmra.mrb[0].mxu0 %v686
      %v784 = vpop.f32.mrb[0].mxu0
      %v785 = vadd.f32 %v653, %v784
      %v786 = vpop.f32.mrb[0].mxu0
      %787 = vmatprep.mubr.f32.mxu0 0.0
      %788 = vmatmul.mubr.f32.gmra.mrb[0].mxu0 %v689
      %v789 = vpop.f32.mrb[0].mxu0
      %v790 = vadd.f32 %v658, %v789
      %v791 = vpop.f32.mrb[0].mxu0
      %792 = vmatprep.mubr.f32.mxu0 0.0
      %793 = vmatmul.mubr.f32.gmra.mrb[0].mxu0 %v692
      %v794 = vpop.f32.mrb[0].mxu0
      %v795 = vadd.f32 %v663, %v794
      %v796 = vpop.f32.mrb[0].mxu0
      %797 = vmatprep.mubr.f32.mxu0 0.0
      %798 = vmatmul.mubr.f32.gmra.mrb[0].mxu0 %v695
      %v799 = vpop.f32.mrb[0].mxu0
      %v800 = vadd.f32 %v668, %v799
      %v801 = vpop.f32.mrb[0].mxu0
      %802 = vmatprep.mubr.f32.mxu0 0.0
      %803 = vmatmul.mubr.f32.gmra.mrb[0].mxu0 %v698
      %v804 = vpop.f32.mrb[0].mxu0
      %v805 = vadd.f32 %v673, %v804
      %v806 = vpop.f32.mrb[0].mxu0
      %807 = vdwg.mxu0
      %v808 = vld [vmem:[#allocation2 + $0x1] sm:$0xff]
      %v809 = vld [vmem:[#allocation2 + $0x11] sm:$0xff]
      %v810 = vld [vmem:[#allocation2 + $0x21] sm:$0xff]
      %v811 = vld [vmem:[#allocation2 + $0x31] sm:$0xff]
      %v812 = vld [vmem:[#allocation2 + $0x41] sm:$0xff]
      %v813 = vld [vmem:[#allocation2 + $0x51] sm:$0xff]
      %v814 = vld [vmem:[#allocation2 + $0x61] sm:$0xff]
      %v815 = vld [vmem:[#allocation2 + $0x71] sm:$0xff]
      %s816 = scalar_lea.vmem %s3, 8
      %v817 = vld [vmem:[%s816] sm:$0xf]
      %v819 = vsel %vm204, %v808, 0
      %v822 = vsel %vm204, %v809, 0
      %v825 = vsel %vm204, %v810, 0
      %v828 = vsel %vm204, %v811, 0
      %v831 = vsel %vm204, %v812, 0
      %v834 = vsel %vm204, %v813, 0
      %v837 = vsel %vm204, %v814, 0
      %v840 = vsel %vm204, %v815, 0
      %v843 = vsel %vm567, %v817, 0
      %845 = vmatprep.subr.mxu0 0.0
      %846 = vmatpush1.msra.mxu0 %v843
      %847 = vmatprep.subr.mxu0 0.0
      %848 = vmatpush1.msra.mxu0 0.0
      %849 = vmatprep.subr.mxu0 0.0
      %850 = vmatpush1.msra.mxu0 0.0
      %851 = vmatprep.subr.mxu0 0.0
      %852 = vmatpush1.msra.mxu0 0.0
      %853 = vmatprep.subr.mxu0 0.0
      %854 = vmatpush1.msra.mxu0 0.0
      %855 = vmatprep.subr.mxu0 0.0
      %856 = vmatpush1.msra.mxu0 0.0
      %857 = vmatprep.subr.mxu0 0.0
      %858 = vmatpush1.msra.mxu0 0.0
      %859 = vmatprep.subr.mxu0 0.0
      %860 = vmatpush1.msra.mxu0 0.0
      %861 = vmatprep.subr.mxu0 0.0
      %862 = vmatpush1.msra.mxu0 0.0
      %863 = vmatprep.subr.mxu0 0.0
      %864 = vmatpush1.msra.mxu0 0.0
      %865 = vmatprep.subr.mxu0 0.0
      %866 = vmatpush1.msra.mxu0 0.0
      %867 = vmatprep.subr.mxu0 0.0
      %868 = vmatpush1.msra.mxu0 0.0
      %869 = vmatprep.subr.mxu0 0.0
      %870 = vmatpush1.msra.mxu0 0.0
      %871 = vmatprep.subr.mxu0 0.0
      %872 = vmatpush1.msra.mxu0 0.0
      %873 = vmatprep.subr.mxu0 0.0
      %874 = vmatpush1.msra.mxu0 0.0
      %875 = vmatprep.subr.mxu0 0.0
      %876 = vmatpush1.msra.mxu0 0.0
      %877 = vmatprep.subr.mxu0 0.0
      %878 = vmatpush1.msra.mxu0 0.0
      %879 = vmatprep.subr.mxu0 0.0
      %880 = vmatpush1.msra.mxu0 0.0
      %881 = vmatprep.subr.mxu0 0.0
      %882 = vmatpush1.msra.mxu0 0.0
      %883 = vmatprep.subr.mxu0 0.0
      %884 = vmatpush1.msra.mxu0 0.0
      %885 = vmatprep.subr.mxu0 0.0
      %886 = vmatpush1.msra.mxu0 0.0
      %887 = vmatprep.subr.mxu0 0.0
      %888 = vmatpush1.msra.mxu0 0.0
      %889 = vmatprep.subr.mxu0 0.0
      %890 = vmatpush1.msra.mxu0 0.0
      %891 = vmatprep.subr.mxu0 0.0
      %892 = vmatpush1.msra.mxu0 0.0
      %893 = vmatprep.subr.mxu0 0.0
      %894 = vmatpush1.msra.mxu0 0.0
      %895 = vmatprep.subr.mxu0 0.0
      %896 = vmatpush1.msra.mxu0 0.0
      %897 = vmatprep.subr.mxu0 0.0
      %898 = vmatpush1.msra.mxu0 0.0
      %899 = vmatprep.subr.mxu0 0.0
      %900 = vmatpush1.msra.mxu0 0.0
      %901 = vmatprep.subr.mxu0 0.0
      %902 = vmatpush1.msra.mxu0 0.0
      %903 = vmatprep.subr.mxu0 0.0
      %904 = vmatpush1.msra.mxu0 0.0
      %905 = vmatprep.subr.mxu0 0.0
      %906 = vmatpush1.msra.mxu0 0.0
      %907 = vmatprep.subr.mxu0 0.0
      %908 = vmatpush1.msra.mxu0 0.0
      %909 = vmatprep.mubr.f32.mxu0 0.0
      %910 = vmatmul.mubr.f32.gmra.mrb[0].mxu0 %v819
      %v911 = vpop.f32.mrb[0].mxu0
      %v912 = vadd.f32 0.0, %v911
      %v913 = vpop.f32.mrb[0].mxu0
      %914 = vmatprep.mubr.f32.mxu0 0.0
      %915 = vmatmul.mubr.f32.gmra.mrb[0].mxu0 %v822
      %v916 = vpop.f32.mrb[0].mxu0
      %v917 = vadd.f32 0.0, %v916
      %v918 = vpop.f32.mrb[0].mxu0
      %919 = vmatprep.mubr.f32.mxu0 0.0
      %920 = vmatmul.mubr.f32.gmra.mrb[0].mxu0 %v825
      %v921 = vpop.f32.mrb[0].mxu0
      %v922 = vadd.f32 0.0, %v921
      %v923 = vpop.f32.mrb[0].mxu0
      %924 = vmatprep.mubr.f32.mxu0 0.0
      %925 = vmatmul.mubr.f32.gmra.mrb[0].mxu0 %v828
      %v926 = vpop.f32.mrb[0].mxu0
      %v927 = vadd.f32 0.0, %v926
      %v928 = vpop.f32.mrb[0].mxu0
      %929 = vmatprep.mubr.f32.mxu0 0.0
      %930 = vmatmul.mubr.f32.gmra.mrb[0].mxu0 %v831
      %v931 = vpop.f32.mrb[0].mxu0
      %v932 = vadd.f32 0.0, %v931
      %v933 = vpop.f32.mrb[0].mxu0
      %934 = vmatprep.mubr.f32.mxu0 0.0
      %935 = vmatmul.mubr.f32.gmra.mrb[0].mxu0 %v834
      %v936 = vpop.f32.mrb[0].mxu0
      %v937 = vadd.f32 0.0, %v936
      %v938 = vpop.f32.mrb[0].mxu0
      %939 = vmatprep.mubr.f32.mxu0 0.0
      %940 = vmatmul.mubr.f32.gmra.mrb[0].mxu0 %v837
      %v941 = vpop.f32.mrb[0].mxu0
      %v942 = vadd.f32 0.0, %v941
      %v943 = vpop.f32.mrb[0].mxu0
      %944 = vmatprep.mubr.f32.mxu0 0.0
      %945 = vmatmul.mubr.f32.gmra.mrb[0].mxu0 %v840
      %v946 = vpop.f32.mrb[0].mxu0
      %v947 = vadd.f32 0.0, %v946
      %v948 = vpop.f32.mrb[0].mxu0
      %949 = vdwg.mxu0
      %v950 = vadd.f32 %v770, %v912
      %v951 = vadd.f32 %v775, %v917
      %v952 = vadd.f32 %v780, %v922
      %v953 = vadd.f32 %v785, %v927
      %v954 = vadd.f32 %v790, %v932
      %v955 = vadd.f32 %v795, %v937
      %v956 = vadd.f32 %v800, %v942
      %v957 = vadd.f32 %v805, %v947
      %v958 = vld [vmem:[%s457] sm:$0xff]
      %v959 = vld [vmem:[%s457 + $0x10] sm:$0xff]
      %v960 = vld [vmem:[%s457 + $0x20] sm:$0xff]
      %v961 = vld [vmem:[%s457 + $0x30] sm:$0xff]
      %v962 = vld [vmem:[%s457 + $0x40] sm:$0xff]
      %v963 = vld [vmem:[%s457 + $0x50] sm:$0xff]
      %v964 = vld [vmem:[%s457 + $0x60] sm:$0xff]
      %v965 = vld [vmem:[%s457 + $0x70] sm:$0xff]
      %s966 = scalar_lea.vmem %s3, 12
      %v967 = vld [vmem:[%s966] sm:$0xf]
      %v969 = vsel %vm204, %v958, 0
      %v972 = vsel %vm204, %v959, 0
      %v975 = vsel %vm204, %v960, 0
      %v978 = vsel %vm204, %v961, 0
      %v981 = vsel %vm204, %v962, 0
      %v984 = vsel %vm204, %v963, 0
      %v987 = vsel %vm204, %v964, 0
      %v990 = vsel %vm204, %v965, 0
      %v993 = vsel %vm567, %v967, 0
      %995 = vmatprep.subr.mxu0 0.0
      %996 = vmatpush1.msra.mxu0 %v993
      %997 = vmatprep.subr.mxu0 0.0
      %998 = vmatpush1.msra.mxu0 0.0
      %999 = vmatprep.subr.mxu0 0.0
      %1000 = vmatpush1.msra.mxu0 0.0
      %1001 = vmatprep.subr.mxu0 0.0
      %1002 = vmatpush1.msra.mxu0 0.0
      %1003 = vmatprep.subr.mxu0 0.0
      %1004 = vmatpush1.msra.mxu0 0.0
      %1005 = vmatprep.subr.mxu0 0.0
      %1006 = vmatpush1.msra.mxu0 0.0
      %1007 = vmatprep.subr.mxu0 0.0
      %1008 = vmatpush1.msra.mxu0 0.0
      %1009 = vmatprep.subr.mxu0 0.0
      %1010 = vmatpush1.msra.mxu0 0.0
      %1011 = vmatprep.subr.mxu0 0.0
      %1012 = vmatpush1.msra.mxu0 0.0
      %1013 = vmatprep.subr.mxu0 0.0
      %1014 = vmatpush1.msra.mxu0 0.0
      %1015 = vmatprep.subr.mxu0 0.0
      %1016 = vmatpush1.msra.mxu0 0.0
      %1017 = vmatprep.subr.mxu0 0.0
      %1018 = vmatpush1.msra.mxu0 0.0
      %1019 = vmatprep.subr.mxu0 0.0
      %1020 = vmatpush1.msra.mxu0 0.0
      %1021 = vmatprep.subr.mxu0 0.0
      %1022 = vmatpush1.msra.mxu0 0.0
      %1023 = vmatprep.subr.mxu0 0.0
      %1024 = vmatpush1.msra.mxu0 0.0
      %1025 = vmatprep.subr.mxu0 0.0
      %1026 = vmatpush1.msra.mxu0 0.0
      %1027 = vmatprep.subr.mxu0 0.0
      %1028 = vmatpush1.msra.mxu0 0.0
      %1029 = vmatprep.subr.mxu0 0.0
      %1030 = vmatpush1.msra.mxu0 0.0
      %1031 = vmatprep.subr.mxu0 0.0
      %1032 = vmatpush1.msra.mxu0 0.0
      %1033 = vmatprep.subr.mxu0 0.0
      %1034 = vmatpush1.msra.mxu0 0.0
      %1035 = vmatprep.subr.mxu0 0.0
      %1036 = vmatpush1.msra.mxu0 0.0
      %1037 = vmatprep.subr.mxu0 0.0
      %1038 = vmatpush1.msra.mxu0 0.0
      %1039 = vmatprep.subr.mxu0 0.0
      %1040 = vmatpush1.msra.mxu0 0.0
      %1041 = vmatprep.subr.mxu0 0.0
      %1042 = vmatpush1.msra.mxu0 0.0
      %1043 = vmatprep.subr.mxu0 0.0
      %1044 = vmatpush1.msra.mxu0 0.0
      %1045 = vmatprep.subr.mxu0 0.0
      %1046 = vmatpush1.msra.mxu0 0.0
      %1047 = vmatprep.subr.mxu0 0.0
      %1048 = vmatpush1.msra.mxu0 0.0
      %1049 = vmatprep.subr.mxu0 0.0
      %1050 = vmatpush1.msra.mxu0 0.0
      %1051 = vmatprep.subr.mxu0 0.0
      %1052 = vmatpush1.msra.mxu0 0.0
      %1053 = vmatprep.subr.mxu0 0.0
      %1054 = vmatpush1.msra.mxu0 0.0
      %1055 = vmatprep.subr.mxu0 0.0
      %1056 = vmatpush1.msra.mxu0 0.0
      %1057 = vmatprep.subr.mxu0 0.0
      %1058 = vmatpush1.msra.mxu0 0.0
      %1059 = vmatprep.mubr.f32.mxu0 0.0
      %1060 = vmatmul.mubr.f32.gmra.mrb[0].mxu0 %v969
      %v1061 = vpop.f32.mrb[0].mxu0
      %v1062 = vadd.f32 0.0, %v1061
      %v1063 = vpop.f32.mrb[0].mxu0
      %1064 = vmatprep.mubr.f32.mxu0 0.0
      %1065 = vmatmul.mubr.f32.gmra.mrb[0].mxu0 %v972
      %v1066 = vpop.f32.mrb[0].mxu0
      %v1067 = vadd.f32 0.0, %v1066
      %v1068 = vpop.f32.mrb[0].mxu0
      %1069 = vmatprep.mubr.f32.mxu0 0.0
      %1070 = vmatmul.mubr.f32.gmra.mrb[0].mxu0 %v975
      %v1071 = vpop.f32.mrb[0].mxu0
      %v1072 = vadd.f32 0.0, %v1071
      %v1073 = vpop.f32.mrb[0].mxu0
      %1074 = vmatprep.mubr.f32.mxu0 0.0
      %1075 = vmatmul.mubr.f32.gmra.mrb[0].mxu0 %v978
      %v1076 = vpop.f32.mrb[0].mxu0
      %v1077 = vadd.f32 0.0, %v1076
      %v1078 = vpop.f32.mrb[0].mxu0
      %1079 = vmatprep.mubr.f32.mxu0 0.0
      %1080 = vmatmul.mubr.f32.gmra.mrb[0].mxu0 %v981
      %v1081 = vpop.f32.mrb[0].mxu0
      %v1082 = vadd.f32 0.0, %v1081
      %v1083 = vpop.f32.mrb[0].mxu0
      %1084 = vmatprep.mubr.f32.mxu0 0.0
      %1085 = vmatmul.mubr.f32.gmra.mrb[0].mxu0 %v984
      %v1086 = vpop.f32.mrb[0].mxu0
      %v1087 = vadd.f32 0.0, %v1086
      %v1088 = vpop.f32.mrb[0].mxu0
      %1089 = vmatprep.mubr.f32.mxu0 0.0
      %1090 = vmatmul.mubr.f32.gmra.mrb[0].mxu0 %v987
      %v1091 = vpop.f32.mrb[0].mxu0
      %v1092 = vadd.f32 0.0, %v1091
      %v1093 = vpop.f32.mrb[0].mxu0
      %1094 = vmatprep.mubr.f32.mxu0 0.0
      %1095 = vmatmul.mubr.f32.gmra.mrb[0].mxu0 %v990
      %v1096 = vpop.f32.mrb[0].mxu0
      %v1097 = vadd.f32 0.0, %v1096
      %v1098 = vpop.f32.mrb[0].mxu0
      %1099 = vdwg.mxu0
      %v1100 = vadd.f32 %v950, %v1062
      %v1101 = vadd.f32 %v951, %v1067
      %v1102 = vadd.f32 %v952, %v1072
      %v1103 = vadd.f32 %v953, %v1077
      %v1104 = vadd.f32 %v954, %v1082
      %v1105 = vadd.f32 %v955, %v1087
      %v1106 = vadd.f32 %v956, %v1092
      %v1107 = vadd.f32 %v957, %v1097
      %v1108 = vld [vmem:[%s514] sm:$0xff]
      %v1109 = vld [vmem:[%s514 + $0x10] sm:$0xff]
      %v1110 = vld [vmem:[%s514 + $0x20] sm:$0xff]
      %v1111 = vld [vmem:[%s514 + $0x30] sm:$0xff]
      %v1112 = vld [vmem:[%s514 + $0x40] sm:$0xff]
      %v1113 = vld [vmem:[%s514 + $0x50] sm:$0xff]
      %v1114 = vld [vmem:[%s514 + $0x60] sm:$0xff]
      %v1115 = vld [vmem:[%s514 + $0x70] sm:$0xff]
      %s1116 = scalar_lea.vmem %s3, 16
      %v1117 = vld [vmem:[%s1116] sm:$0xf]
      %v1119 = vsel %vm204, %v1108, 0
      %v1122 = vsel %vm204, %v1109, 0
      %v1125 = vsel %vm204, %v1110, 0
      %v1128 = vsel %vm204, %v1111, 0
      %v1131 = vsel %vm204, %v1112, 0
      %v1134 = vsel %vm204, %v1113, 0
      %v1137 = vsel %vm204, %v1114, 0
      %v1140 = vsel %vm204, %v1115, 0
      %v1143 = vsel %vm567, %v1117, 0
      %1145 = vmatprep.subr.mxu0 0.0
      %1146 = vmatpush1.msra.mxu0 %v1143
      %1147 = vmatprep.subr.mxu0 0.0
      %1148 = vmatpush1.msra.mxu0 0.0
      %1149 = vmatprep.subr.mxu0 0.0
      %1150 = vmatpush1.msra.mxu0 0.0
      %1151 = vmatprep.subr.mxu0 0.0
      %1152 = vmatpush1.msra.mxu0 0.0
      %1153 = vmatprep.subr.mxu0 0.0
      %1154 = vmatpush1.msra.mxu0 0.0
      %1155 = vmatprep.subr.mxu0 0.0
      %1156 = vmatpush1.msra.mxu0 0.0
      %1157 = vmatprep.subr.mxu0 0.0
      %1158 = vmatpush1.msra.mxu0 0.0
      %1159 = vmatprep.subr.mxu0 0.0
      %1160 = vmatpush1.msra.mxu0 0.0
      %1161 = vmatprep.subr.mxu0 0.0
      %1162 = vmatpush1.msra.mxu0 0.0
      %1163 = vmatprep.subr.mxu0 0.0
      %1164 = vmatpush1.msra.mxu0 0.0
      %1165 = vmatprep.subr.mxu0 0.0
      %1166 = vmatpush1.msra.mxu0 0.0
      %1167 = vmatprep.subr.mxu0 0.0
      %1168 = vmatpush1.msra.mxu0 0.0
      %1169 = vmatprep.subr.mxu0 0.0
      %1170 = vmatpush1.msra.mxu0 0.0
      %1171 = vmatprep.subr.mxu0 0.0
      %1172 = vmatpush1.msra.mxu0 0.0
      %1173 = vmatprep.subr.mxu0 0.0
      %1174 = vmatpush1.msra.mxu0 0.0
      %1175 = vmatprep.subr.mxu0 0.0
      %1176 = vmatpush1.msra.mxu0 0.0
      %1177 = vmatprep.subr.mxu0 0.0
      %1178 = vmatpush1.msra.mxu0 0.0
      %1179 = vmatprep.subr.mxu0 0.0
      %1180 = vmatpush1.msra.mxu0 0.0
      %1181 = vmatprep.subr.mxu0 0.0
      %1182 = vmatpush1.msra.mxu0 0.0
      %1183 = vmatprep.subr.mxu0 0.0
      %1184 = vmatpush1.msra.mxu0 0.0
      %1185 = vmatprep.subr.mxu0 0.0
      %1186 = vmatpush1.msra.mxu0 0.0
      %1187 = vmatprep.subr.mxu0 0.0
      %1188 = vmatpush1.msra.mxu0 0.0
      %1189 = vmatprep.subr.mxu0 0.0
      %1190 = vmatpush1.msra.mxu0 0.0
      %1191 = vmatprep.subr.mxu0 0.0
      %1192 = vmatpush1.msra.mxu0 0.0
      %1193 = vmatprep.subr.mxu0 0.0
      %1194 = vmatpush1.msra.mxu0 0.0
      %1195 = vmatprep.subr.mxu0 0.0
      %1196 = vmatpush1.msra.mxu0 0.0
      %1197 = vmatprep.subr.mxu0 0.0
      %1198 = vmatpush1.msra.mxu0 0.0
      %1199 = vmatprep.subr.mxu0 0.0
      %1200 = vmatpush1.msra.mxu0 0.0
      %1201 = vmatprep.subr.mxu0 0.0
      %1202 = vmatpush1.msra.mxu0 0.0
      %1203 = vmatprep.subr.mxu0 0.0
      %1204 = vmatpush1.msra.mxu0 0.0
      %1205 = vmatprep.subr.mxu0 0.0
      %1206 = vmatpush1.msra.mxu0 0.0
      %1207 = vmatprep.subr.mxu0 0.0
      %1208 = vmatpush1.msra.mxu0 0.0
      %1209 = vmatprep.mubr.f32.mxu0 0.0
      %1210 = vmatmul.mubr.f32.gmra.mrb[0].mxu0 %v1119
      %v1211 = vpop.f32.mrb[0].mxu0
      %v1212 = vadd.f32 0.0, %v1211
      %v1213 = vpop.f32.mrb[0].mxu0
      %1214 = vmatprep.mubr.f32.mxu0 0.0
      %1215 = vmatmul.mubr.f32.gmra.mrb[0].mxu0 %v1122
      %v1216 = vpop.f32.mrb[0].mxu0
      %v1217 = vadd.f32 0.0, %v1216
      %v1218 = vpop.f32.mrb[0].mxu0
      %1219 = vmatprep.mubr.f32.mxu0 0.0
      %1220 = vmatmul.mubr.f32.gmra.mrb[0].mxu0 %v1125
      %v1221 = vpop.f32.mrb[0].mxu0
      %v1222 = vadd.f32 0.0, %v1221
      %v1223 = vpop.f32.mrb[0].mxu0
      %1224 = vmatprep.mubr.f32.mxu0 0.0
      %1225 = vmatmul.mubr.f32.gmra.mrb[0].mxu0 %v1128
      %v1226 = vpop.f32.mrb[0].mxu0
      %v1227 = vadd.f32 0.0, %v1226
      %v1228 = vpop.f32.mrb[0].mxu0
      %1229 = vmatprep.mubr.f32.mxu0 0.0
      %1230 = vmatmul.mubr.f32.gmra.mrb[0].mxu0 %v1131
      %v1231 = vpop.f32.mrb[0].mxu0
      %v1232 = vadd.f32 0.0, %v1231
      %v1233 = vpop.f32.mrb[0].mxu0
      %1234 = vmatprep.mubr.f32.mxu0 0.0
      %1235 = vmatmul.mubr.f32.gmra.mrb[0].mxu0 %v1134
      %v1236 = vpop.f32.mrb[0].mxu0
      %v1237 = vadd.f32 0.0, %v1236
      %v1238 = vpop.f32.mrb[0].mxu0
      %1239 = vmatprep.mubr.f32.mxu0 0.0
      %1240 = vmatmul.mubr.f32.gmra.mrb[0].mxu0 %v1137
      %v1241 = vpop.f32.mrb[0].mxu0
      %v1242 = vadd.f32 0.0, %v1241
      %v1243 = vpop.f32.mrb[0].mxu0
      %1244 = vmatprep.mubr.f32.mxu0 0.0
      %1245 = vmatmul.mubr.f32.gmra.mrb[0].mxu0 %v1140
      %v1246 = vpop.f32.mrb[0].mxu0
      %v1247 = vadd.f32 0.0, %v1246
      %v1248 = vpop.f32.mrb[0].mxu0
      %1249 = vdwg.mxu0
      %v1250 = vadd.f32 %v1100, %v1212
      %v1251 = vadd.f32 %v1101, %v1217
      %v1252 = vadd.f32 %v1102, %v1222
      %v1253 = vadd.f32 %v1103, %v1227
      %v1254 = vadd.f32 %v1104, %v1232
      %v1255 = vadd.f32 %v1105, %v1237
      %v1256 = vadd.f32 %v1106, %v1242
      %v1257 = vadd.f32 %v1107, %v1247
      %v1258 = vld [vmem:[%s457 + $0x1] sm:$0xff]
      %v1259 = vld [vmem:[%s457 + $0x11] sm:$0xff]
      %v1260 = vld [vmem:[%s457 + $0x21] sm:$0xff]
      %v1261 = vld [vmem:[%s457 + $0x31] sm:$0xff]
      %v1262 = vld [vmem:[%s457 + $0x41] sm:$0xff]
      %v1263 = vld [vmem:[%s457 + $0x51] sm:$0xff]
      %v1264 = vld [vmem:[%s457 + $0x61] sm:$0xff]
      %v1265 = vld [vmem:[%s457 + $0x71] sm:$0xff]
      %s1266 = scalar_lea.vmem %s3, 20
      %v1267 = vld [vmem:[%s1266] sm:$0xf]
      %v1269 = vsel %vm204, %v1258, 0
      %v1272 = vsel %vm204, %v1259, 0
      %v1275 = vsel %vm204, %v1260, 0
      %v1278 = vsel %vm204, %v1261, 0
      %v1281 = vsel %vm204, %v1262, 0
      %v1284 = vsel %vm204, %v1263, 0
      %v1287 = vsel %vm204, %v1264, 0
      %v1290 = vsel %vm204, %v1265, 0
      %v1293 = vsel %vm567, %v1267, 0
      %1295 = vmatprep.subr.mxu0 0.0
      %1296 = vmatpush1.msra.mxu0 %v1293
      %1297 = vmatprep.subr.mxu0 0.0
      %1298 = vmatpush1.msra.mxu0 0.0
      %1299 = vmatprep.subr.mxu0 0.0
      %1300 = vmatpush1.msra.mxu0 0.0
      %1301 = vmatprep.subr.mxu0 0.0
      %1302 = vmatpush1.msra.mxu0 0.0
      %1303 = vmatprep.subr.mxu0 0.0
      %1304 = vmatpush1.msra.mxu0 0.0
      %1305 = vmatprep.subr.mxu0 0.0
      %1306 = vmatpush1.msra.mxu0 0.0
      %1307 = vmatprep.subr.mxu0 0.0
      %1308 = vmatpush1.msra.mxu0 0.0
      %1309 = vmatprep.subr.mxu0 0.0
      %1310 = vmatpush1.msra.mxu0 0.0
      %1311 = vmatprep.subr.mxu0 0.0
      %1312 = vmatpush1.msra.mxu0 0.0
      %1313 = vmatprep.subr.mxu0 0.0
      %1314 = vmatpush1.msra.mxu0 0.0
      %1315 = vmatprep.subr.mxu0 0.0
      %1316 = vmatpush1.msra.mxu0 0.0
      %1317 = vmatprep.subr.mxu0 0.0
      %1318 = vmatpush1.msra.mxu0 0.0
      %1319 = vmatprep.subr.mxu0 0.0
      %1320 = vmatpush1.msra.mxu0 0.0
      %1321 = vmatprep.subr.mxu0 0.0
      %1322 = vmatpush1.msra.mxu0 0.0
      %1323 = vmatprep.subr.mxu0 0.0
      %1324 = vmatpush1.msra.mxu0 0.0
      %1325 = vmatprep.subr.mxu0 0.0
      %1326 = vmatpush1.msra.mxu0 0.0
      %1327 = vmatprep.subr.mxu0 0.0
      %1328 = vmatpush1.msra.mxu0 0.0
      %1329 = vmatprep.subr.mxu0 0.0
      %1330 = vmatpush1.msra.mxu0 0.0
      %1331 = vmatprep.subr.mxu0 0.0
      %1332 = vmatpush1.msra.mxu0 0.0
      %1333 = vmatprep.subr.mxu0 0.0
      %1334 = vmatpush1.msra.mxu0 0.0
      %1335 = vmatprep.subr.mxu0 0.0
      %1336 = vmatpush1.msra.mxu0 0.0
      %1337 = vmatprep.subr.mxu0 0.0
      %1338 = vmatpush1.msra.mxu0 0.0
      %1339 = vmatprep.subr.mxu0 0.0
      %1340 = vmatpush1.msra.mxu0 0.0
      %1341 = vmatprep.subr.mxu0 0.0
      %1342 = vmatpush1.msra.mxu0 0.0
      %1343 = vmatprep.subr.mxu0 0.0
      %1344 = vmatpush1.msra.mxu0 0.0
      %1345 = vmatprep.subr.mxu0 0.0
      %1346 = vmatpush1.msra.mxu0 0.0
      %1347 = vmatprep.subr.mxu0 0.0
      %1348 = vmatpush1.msra.mxu0 0.0
      %1349 = vmatprep.subr.mxu0 0.0
      %1350 = vmatpush1.msra.mxu0 0.0
      %1351 = vmatprep.subr.mxu0 0.0
      %1352 = vmatpush1.msra.mxu0 0.0
      %1353 = vmatprep.subr.mxu0 0.0
      %1354 = vmatpush1.msra.mxu0 0.0
      %1355 = vmatprep.subr.mxu0 0.0
      %1356 = vmatpush1.msra.mxu0 0.0
      %1357 = vmatprep.subr.mxu0 0.0
      %1358 = vmatpush1.msra.mxu0 0.0
      %1359 = vmatprep.mubr.f32.mxu0 0.0
      %1360 = vmatmul.mubr.f32.gmra.mrb[0].mxu0 %v1269
      %v1361 = vpop.f32.mrb[0].mxu0
      %v1362 = vadd.f32 0.0, %v1361
      %v1363 = vpop.f32.mrb[0].mxu0
      %1364 = vmatprep.mubr.f32.mxu0 0.0
      %1365 = vmatmul.mubr.f32.gmra.mrb[0].mxu0 %v1272
      %v1366 = vpop.f32.mrb[0].mxu0
      %v1367 = vadd.f32 0.0, %v1366
      %v1368 = vpop.f32.mrb[0].mxu0
      %1369 = vmatprep.mubr.f32.mxu0 0.0
      %1370 = vmatmul.mubr.f32.gmra.mrb[0].mxu0 %v1275
      %v1371 = vpop.f32.mrb[0].mxu0
      %v1372 = vadd.f32 0.0, %v1371
      %v1373 = vpop.f32.mrb[0].mxu0
      %1374 = vmatprep.mubr.f32.mxu0 0.0
      %1375 = vmatmul.mubr.f32.gmra.mrb[0].mxu0 %v1278
      %v1376 = vpop.f32.mrb[0].mxu0
      %v1377 = vadd.f32 0.0, %v1376
      %v1378 = vpop.f32.mrb[0].mxu0
      %1379 = vmatprep.mubr.f32.mxu0 0.0
      %1380 = vmatmul.mubr.f32.gmra.mrb[0].mxu0 %v1281
      %v1381 = vpop.f32.mrb[0].mxu0
      %v1382 = vadd.f32 0.0, %v1381
      %v1383 = vpop.f32.mrb[0].mxu0
      %1384 = vmatprep.mubr.f32.mxu0 0.0
      %1385 = vmatmul.mubr.f32.gmra.mrb[0].mxu0 %v1284
      %v1386 = vpop.f32.mrb[0].mxu0
      %v1387 = vadd.f32 0.0, %v1386
      %v1388 = vpop.f32.mrb[0].mxu0
      %1389 = vmatprep.mubr.f32.mxu0 0.0
      %1390 = vmatmul.mubr.f32.gmra.mrb[0].mxu0 %v1287
      %v1391 = vpop.f32.mrb[0].mxu0
      %v1392 = vadd.f32 0.0, %v1391
      %v1393 = vpop.f32.mrb[0].mxu0
      %1394 = vmatprep.mubr.f32.mxu0 0.0
      %1395 = vmatmul.mubr.f32.gmra.mrb[0].mxu0 %v1290
      %v1396 = vpop.f32.mrb[0].mxu0
      %v1397 = vadd.f32 0.0, %v1396
      %v1398 = vpop.f32.mrb[0].mxu0
      %1399 = vdwg.mxu0
      %v1400 = vadd.f32 %v1250, %v1362
      %v1401 = vadd.f32 %v1251, %v1367
      %v1402 = vadd.f32 %v1252, %v1372
      %v1403 = vadd.f32 %v1253, %v1377
      %v1404 = vadd.f32 %v1254, %v1382
      %v1405 = vadd.f32 %v1255, %v1387
      %v1406 = vadd.f32 %v1256, %v1392
      %v1407 = vadd.f32 %v1257, %v1397
      %v1408 = vld [vmem:[%s341] sm:$0xff]
      %v1409 = vld [vmem:[%s341 + $0x10] sm:$0xff]
      %v1410 = vld [vmem:[%s341 + $0x20] sm:$0xff]
      %v1411 = vld [vmem:[%s341 + $0x30] sm:$0xff]
      %v1412 = vld [vmem:[%s341 + $0x40] sm:$0xff]
      %v1413 = vld [vmem:[%s341 + $0x50] sm:$0xff]
      %v1414 = vld [vmem:[%s341 + $0x60] sm:$0xff]
      %v1415 = vld [vmem:[%s341 + $0x70] sm:$0xff]
      %s1416 = scalar_lea.vmem %s3, 24
      %v1417 = vld [vmem:[%s1416] sm:$0xf]
      %v1419 = vsel %vm204, %v1408, 0
      %v1422 = vsel %vm204, %v1409, 0
      %v1425 = vsel %vm204, %v1410, 0
      %v1428 = vsel %vm204, %v1411, 0
      %v1431 = vsel %vm204, %v1412, 0
      %v1434 = vsel %vm204, %v1413, 0
      %v1437 = vsel %vm204, %v1414, 0
      %v1440 = vsel %vm204, %v1415, 0
      %v1443 = vsel %vm567, %v1417, 0
      %1445 = vmatprep.subr.mxu0 0.0
      %1446 = vmatpush1.msra.mxu0 %v1443
      %1447 = vmatprep.subr.mxu0 0.0
      %1448 = vmatpush1.msra.mxu0 0.0
      %1449 = vmatprep.subr.mxu0 0.0
      %1450 = vmatpush1.msra.mxu0 0.0
      %1451 = vmatprep.subr.mxu0 0.0
      %1452 = vmatpush1.msra.mxu0 0.0
      %1453 = vmatprep.subr.mxu0 0.0
      %1454 = vmatpush1.msra.mxu0 0.0
      %1455 = vmatprep.subr.mxu0 0.0
      %1456 = vmatpush1.msra.mxu0 0.0
      %1457 = vmatprep.subr.mxu0 0.0
      %1458 = vmatpush1.msra.mxu0 0.0
      %1459 = vmatprep.subr.mxu0 0.0
      %1460 = vmatpush1.msra.mxu0 0.0
      %1461 = vmatprep.subr.mxu0 0.0
      %1462 = vmatpush1.msra.mxu0 0.0
      %1463 = vmatprep.subr.mxu0 0.0
      %1464 = vmatpush1.msra.mxu0 0.0
      %1465 = vmatprep.subr.mxu0 0.0
      %1466 = vmatpush1.msra.mxu0 0.0
      %1467 = vmatprep.subr.mxu0 0.0
      %1468 = vmatpush1.msra.mxu0 0.0
      %1469 = vmatprep.subr.mxu0 0.0
      %1470 = vmatpush1.msra.mxu0 0.0
      %1471 = vmatprep.subr.mxu0 0.0
      %1472 = vmatpush1.msra.mxu0 0.0
      %1473 = vmatprep.subr.mxu0 0.0
      %1474 = vmatpush1.msra.mxu0 0.0
      %1475 = vmatprep.subr.mxu0 0.0
      %1476 = vmatpush1.msra.mxu0 0.0
      %1477 = vmatprep.subr.mxu0 0.0
      %1478 = vmatpush1.msra.mxu0 0.0
      %1479 = vmatprep.subr.mxu0 0.0
      %1480 = vmatpush1.msra.mxu0 0.0
      %1481 = vmatprep.subr.mxu0 0.0
      %1482 = vmatpush1.msra.mxu0 0.0
      %1483 = vmatprep.subr.mxu0 0.0
      %1484 = vmatpush1.msra.mxu0 0.0
      %1485 = vmatprep.subr.mxu0 0.0
      %1486 = vmatpush1.msra.mxu0 0.0
      %1487 = vmatprep.subr.mxu0 0.0
      %1488 = vmatpush1.msra.mxu0 0.0
      %1489 = vmatprep.subr.mxu0 0.0
      %1490 = vmatpush1.msra.mxu0 0.0
      %1491 = vmatprep.subr.mxu0 0.0
      %1492 = vmatpush1.msra.mxu0 0.0
      %1493 = vmatprep.subr.mxu0 0.0
      %1494 = vmatpush1.msra.mxu0 0.0
      %1495 = vmatprep.subr.mxu0 0.0
      %1496 = vmatpush1.msra.mxu0 0.0
      %1497 = vmatprep.subr.mxu0 0.0
      %1498 = vmatpush1.msra.mxu0 0.0
      %1499 = vmatprep.subr.mxu0 0.0
      %1500 = vmatpush1.msra.mxu0 0.0
      %1501 = vmatprep.subr.mxu0 0.0
      %1502 = vmatpush1.msra.mxu0 0.0
      %1503 = vmatprep.subr.mxu0 0.0
      %1504 = vmatpush1.msra.mxu0 0.0
      %1505 = vmatprep.subr.mxu0 0.0
      %1506 = vmatpush1.msra.mxu0 0.0
      %1507 = vmatprep.subr.mxu0 0.0
      %1508 = vmatpush1.msra.mxu0 0.0
      %1509 = vmatprep.mubr.f32.mxu0 0.0
      %1510 = vmatmul.mubr.f32.gmra.mrb[0].mxu0 %v1419
      %v1511 = vpop.f32.mrb[0].mxu0
      %v1512 = vadd.f32 0.0, %v1511
      %v1513 = vpop.f32.mrb[0].mxu0
      %1514 = vmatprep.mubr.f32.mxu0 0.0
      %1515 = vmatmul.mubr.f32.gmra.mrb[0].mxu0 %v1422
      %v1516 = vpop.f32.mrb[0].mxu0
      %v1517 = vadd.f32 0.0, %v1516
      %v1518 = vpop.f32.mrb[0].mxu0
      %1519 = vmatprep.mubr.f32.mxu0 0.0
      %1520 = vmatmul.mubr.f32.gmra.mrb[0].mxu0 %v1425
      %v1521 = vpop.f32.mrb[0].mxu0
      %v1522 = vadd.f32 0.0, %v1521
      %v1523 = vpop.f32.mrb[0].mxu0
      %1524 = vmatprep.mubr.f32.mxu0 0.0
      %1525 = vmatmul.mubr.f32.gmra.mrb[0].mxu0 %v1428
      %v1526 = vpop.f32.mrb[0].mxu0
      %v1527 = vadd.f32 0.0, %v1526
      %v1528 = vpop.f32.mrb[0].mxu0
      %1529 = vmatprep.mubr.f32.mxu0 0.0
      %1530 = vmatmul.mubr.f32.gmra.mrb[0].mxu0 %v1431
      %v1531 = vpop.f32.mrb[0].mxu0
      %v1532 = vadd.f32 0.0, %v1531
      %v1533 = vpop.f32.mrb[0].mxu0
      %1534 = vmatprep.mubr.f32.mxu0 0.0
      %1535 = vmatmul.mubr.f32.gmra.mrb[0].mxu0 %v1434
      %v1536 = vpop.f32.mrb[0].mxu0
      %v1537 = vadd.f32 0.0, %v1536
      %v1538 = vpop.f32.mrb[0].mxu0
      %1539 = vmatprep.mubr.f32.mxu0 0.0
      %1540 = vmatmul.mubr.f32.gmra.mrb[0].mxu0 %v1437
      %v1541 = vpop.f32.mrb[0].mxu0
      %v1542 = vadd.f32 0.0, %v1541
      %v1543 = vpop.f32.mrb[0].mxu0
      %1544 = vmatprep.mubr.f32.mxu0 0.0
      %1545 = vmatmul.mubr.f32.gmra.mrb[0].mxu0 %v1440
      %v1546 = vpop.f32.mrb[0].mxu0
      %v1547 = vadd.f32 0.0, %v1546
      %v1548 = vpop.f32.mrb[0].mxu0
      %1549 = vdwg.mxu0
      %v1550 = vadd.f32 %v1400, %v1512
      %v1551 = vadd.f32 %v1401, %v1517
      %v1552 = vadd.f32 %v1402, %v1522
      %v1553 = vadd.f32 %v1403, %v1527
      %v1554 = vadd.f32 %v1404, %v1532
      %v1555 = vadd.f32 %v1405, %v1537
      %v1556 = vadd.f32 %v1406, %v1542
      %v1557 = vadd.f32 %v1407, %v1547
      %v1558 = vld [vmem:[%s399] sm:$0xff]
      %v1559 = vld [vmem:[%s399 + $0x10] sm:$0xff]
      %v1560 = vld [vmem:[%s399 + $0x20] sm:$0xff]
      %v1561 = vld [vmem:[%s399 + $0x30] sm:$0xff]
      %v1562 = vld [vmem:[%s399 + $0x40] sm:$0xff]
      %v1563 = vld [vmem:[%s399 + $0x50] sm:$0xff]
      %v1564 = vld [vmem:[%s399 + $0x60] sm:$0xff]
      %v1565 = vld [vmem:[%s399 + $0x70] sm:$0xff]
      %s1566 = scalar_lea.vmem %s3, 28
      %v1567 = vld [vmem:[%s1566] sm:$0xf]
      %v1569 = vsel %vm204, %v1558, 0
      %v1572 = vsel %vm204, %v1559, 0
      %v1575 = vsel %vm204, %v1560, 0
      %v1578 = vsel %vm204, %v1561, 0
      %v1581 = vsel %vm204, %v1562, 0
      %v1584 = vsel %vm204, %v1563, 0
      %v1587 = vsel %vm204, %v1564, 0
      %v1590 = vsel %vm204, %v1565, 0
      %v1593 = vsel %vm567, %v1567, 0
      %1595 = vmatprep.subr.mxu0 0.0
      %1596 = vmatpush1.msra.mxu0 %v1593
      %1597 = vmatprep.subr.mxu0 0.0
      %1598 = vmatpush1.msra.mxu0 0.0
      %1599 = vmatprep.subr.mxu0 0.0
      %1600 = vmatpush1.msra.mxu0 0.0
      %1601 = vmatprep.subr.mxu0 0.0
      %1602 = vmatpush1.msra.mxu0 0.0
      %1603 = vmatprep.subr.mxu0 0.0
      %1604 = vmatpush1.msra.mxu0 0.0
      %1605 = vmatprep.subr.mxu0 0.0
      %1606 = vmatpush1.msra.mxu0 0.0
      %1607 = vmatprep.subr.mxu0 0.0
      %1608 = vmatpush1.msra.mxu0 0.0
      %1609 = vmatprep.subr.mxu0 0.0
      %1610 = vmatpush1.msra.mxu0 0.0
      %1611 = vmatprep.subr.mxu0 0.0
      %1612 = vmatpush1.msra.mxu0 0.0
      %1613 = vmatprep.subr.mxu0 0.0
      %1614 = vmatpush1.msra.mxu0 0.0
      %1615 = vmatprep.subr.mxu0 0.0
      %1616 = vmatpush1.msra.mxu0 0.0
      %1617 = vmatprep.subr.mxu0 0.0
      %1618 = vmatpush1.msra.mxu0 0.0
      %1619 = vmatprep.subr.mxu0 0.0
      %1620 = vmatpush1.msra.mxu0 0.0
      %1621 = vmatprep.subr.mxu0 0.0
      %1622 = vmatpush1.msra.mxu0 0.0
      %1623 = vmatprep.subr.mxu0 0.0
      %1624 = vmatpush1.msra.mxu0 0.0
      %1625 = vmatprep.subr.mxu0 0.0
      %1626 = vmatpush1.msra.mxu0 0.0
      %1627 = vmatprep.subr.mxu0 0.0
      %1628 = vmatpush1.msra.mxu0 0.0
      %1629 = vmatprep.subr.mxu0 0.0
      %1630 = vmatpush1.msra.mxu0 0.0
      %1631 = vmatprep.subr.mxu0 0.0
      %1632 = vmatpush1.msra.mxu0 0.0
      %1633 = vmatprep.subr.mxu0 0.0
      %1634 = vmatpush1.msra.mxu0 0.0
      %1635 = vmatprep.subr.mxu0 0.0
      %1636 = vmatpush1.msra.mxu0 0.0
      %1637 = vmatprep.subr.mxu0 0.0
      %1638 = vmatpush1.msra.mxu0 0.0
      %1639 = vmatprep.subr.mxu0 0.0
      %1640 = vmatpush1.msra.mxu0 0.0
      %1641 = vmatprep.subr.mxu0 0.0
      %1642 = vmatpush1.msra.mxu0 0.0
      %1643 = vmatprep.subr.mxu0 0.0
      %1644 = vmatpush1.msra.mxu0 0.0
      %1645 = vmatprep.subr.mxu0 0.0
      %1646 = vmatpush1.msra.mxu0 0.0
      %1647 = vmatprep.subr.mxu0 0.0
      %1648 = vmatpush1.msra.mxu0 0.0
      %1649 = vmatprep.subr.mxu0 0.0
      %1650 = vmatpush1.msra.mxu0 0.0
      %1651 = vmatprep.subr.mxu0 0.0
      %1652 = vmatpush1.msra.mxu0 0.0
      %1653 = vmatprep.subr.mxu0 0.0
      %1654 = vmatpush1.msra.mxu0 0.0
      %1655 = vmatprep.subr.mxu0 0.0
      %1656 = vmatpush1.msra.mxu0 0.0
      %1657 = vmatprep.subr.mxu0 0.0
      %1658 = vmatpush1.msra.mxu0 0.0
      %1659 = vmatprep.mubr.f32.mxu0 0.0
      %1660 = vmatmul.mubr.f32.gmra.mrb[0].mxu0 %v1569
      %v1661 = vpop.f32.mrb[0].mxu0
      %v1662 = vadd.f32 0.0, %v1661
      %v1663 = vpop.f32.mrb[0].mxu0
      %1664 = vmatprep.mubr.f32.mxu0 0.0
      %1665 = vmatmul.mubr.f32.gmra.mrb[0].mxu0 %v1572
      %v1666 = vpop.f32.mrb[0].mxu0
      %v1667 = vadd.f32 0.0, %v1666
      %v1668 = vpop.f32.mrb[0].mxu0
      %1669 = vmatprep.mubr.f32.mxu0 0.0
      %1670 = vmatmul.mubr.f32.gmra.mrb[0].mxu0 %v1575
      %v1671 = vpop.f32.mrb[0].mxu0
      %v1672 = vadd.f32 0.0, %v1671
      %v1673 = vpop.f32.mrb[0].mxu0
      %1674 = vmatprep.mubr.f32.mxu0 0.0
      %1675 = vmatmul.mubr.f32.gmra.mrb[0].mxu0 %v1578
      %v1676 = vpop.f32.mrb[0].mxu0
      %v1677 = vadd.f32 0.0, %v1676
      %v1678 = vpop.f32.mrb[0].mxu0
      %1679 = vmatprep.mubr.f32.mxu0 0.0
      %1680 = vmatmul.mubr.f32.gmra.mrb[0].mxu0 %v1581
      %v1681 = vpop.f32.mrb[0].mxu0
      %v1682 = vadd.f32 0.0, %v1681
      %v1683 = vpop.f32.mrb[0].mxu0
      %1684 = vmatprep.mubr.f32.mxu0 0.0
      %1685 = vmatmul.mubr.f32.gmra.mrb[0].mxu0 %v1584
      %v1686 = vpop.f32.mrb[0].mxu0
      %v1687 = vadd.f32 0.0, %v1686
      %v1688 = vpop.f32.mrb[0].mxu0
      %1689 = vmatprep.mubr.f32.mxu0 0.0
      %1690 = vmatmul.mubr.f32.gmra.mrb[0].mxu0 %v1587
      %v1691 = vpop.f32.mrb[0].mxu0
      %v1692 = vadd.f32 0.0, %v1691
      %v1693 = vpop.f32.mrb[0].mxu0
      %1694 = vmatprep.mubr.f32.mxu0 0.0
      %1695 = vmatmul.mubr.f32.gmra.mrb[0].mxu0 %v1590
      %v1696 = vpop.f32.mrb[0].mxu0
      %v1697 = vadd.f32 0.0, %v1696
      %v1698 = vpop.f32.mrb[0].mxu0
      %1699 = vdwg.mxu0
      %v1700 = vadd.f32 %v1550, %v1662
      %v1701 = vadd.f32 %v1551, %v1667
      %v1702 = vadd.f32 %v1552, %v1672
      %v1703 = vadd.f32 %v1553, %v1677
      %v1704 = vadd.f32 %v1554, %v1682
      %v1705 = vadd.f32 %v1555, %v1687
      %v1706 = vadd.f32 %v1556, %v1692
      %v1707 = vadd.f32 %v1557, %v1697
      %v1708 = vld [vmem:[%s341 + $0x1] sm:$0xff]
      %v1709 = vld [vmem:[%s341 + $0x11] sm:$0xff]
      %v1710 = vld [vmem:[%s341 + $0x21] sm:$0xff]
      %v1711 = vld [vmem:[%s341 + $0x31] sm:$0xff]
      %v1712 = vld [vmem:[%s341 + $0x41] sm:$0xff]
      %v1713 = vld [vmem:[%s341 + $0x51] sm:$0xff]
      %v1714 = vld [vmem:[%s341 + $0x61] sm:$0xff]
      %v1715 = vld [vmem:[%s341 + $0x71] sm:$0xff]
      %s1716 = scalar_lea.vmem %s3, 32
      %v1717 = vld [vmem:[%s1716] sm:$0xf]
      %v1719 = vsel %vm204, %v1708, 0
      %v1722 = vsel %vm204, %v1709, 0
      %v1725 = vsel %vm204, %v1710, 0
      %v1728 = vsel %vm204, %v1711, 0
      %v1731 = vsel %vm204, %v1712, 0
      %v1734 = vsel %vm204, %v1713, 0
      %v1737 = vsel %vm204, %v1714, 0
      %v1740 = vsel %vm204, %v1715, 0
      %v1743 = vsel %vm567, %v1717, 0
      %1745 = vmatprep.subr.mxu0 0.0
      %1746 = vmatpush1.msra.mxu0 %v1743
      %1747 = vmatprep.subr.mxu0 0.0
      %1748 = vmatpush1.msra.mxu0 0.0
      %1749 = vmatprep.subr.mxu0 0.0
      %1750 = vmatpush1.msra.mxu0 0.0
      %1751 = vmatprep.subr.mxu0 0.0
      %1752 = vmatpush1.msra.mxu0 0.0
      %1753 = vmatprep.subr.mxu0 0.0
      %1754 = vmatpush1.msra.mxu0 0.0
      %1755 = vmatprep.subr.mxu0 0.0
      %1756 = vmatpush1.msra.mxu0 0.0
      %1757 = vmatprep.subr.mxu0 0.0
      %1758 = vmatpush1.msra.mxu0 0.0
      %1759 = vmatprep.subr.mxu0 0.0
      %1760 = vmatpush1.msra.mxu0 0.0
      %1761 = vmatprep.subr.mxu0 0.0
      %1762 = vmatpush1.msra.mxu0 0.0
      %1763 = vmatprep.subr.mxu0 0.0
      %1764 = vmatpush1.msra.mxu0 0.0
      %1765 = vmatprep.subr.mxu0 0.0
      %1766 = vmatpush1.msra.mxu0 0.0
      %1767 = vmatprep.subr.mxu0 0.0
      %1768 = vmatpush1.msra.mxu0 0.0
      %1769 = vmatprep.subr.mxu0 0.0
      %1770 = vmatpush1.msra.mxu0 0.0
      %1771 = vmatprep.subr.mxu0 0.0
      %1772 = vmatpush1.msra.mxu0 0.0
      %1773 = vmatprep.subr.mxu0 0.0
      %1774 = vmatpush1.msra.mxu0 0.0
      %1775 = vmatprep.subr.mxu0 0.0
      %1776 = vmatpush1.msra.mxu0 0.0
      %1777 = vmatprep.subr.mxu0 0.0
      %1778 = vmatpush1.msra.mxu0 0.0
      %1779 = vmatprep.subr.mxu0 0.0
      %1780 = vmatpush1.msra.mxu0 0.0
      %1781 = vmatprep.subr.mxu0 0.0
      %1782 = vmatpush1.msra.mxu0 0.0
      %1783 = vmatprep.subr.mxu0 0.0
      %1784 = vmatpush1.msra.mxu0 0.0
      %1785 = vmatprep.subr.mxu0 0.0
      %1786 = vmatpush1.msra.mxu0 0.0
      %1787 = vmatprep.subr.mxu0 0.0
      %1788 = vmatpush1.msra.mxu0 0.0
      %1789 = vmatprep.subr.mxu0 0.0
      %1790 = vmatpush1.msra.mxu0 0.0
      %1791 = vmatprep.subr.mxu0 0.0
      %1792 = vmatpush1.msra.mxu0 0.0
      %1793 = vmatprep.subr.mxu0 0.0
      %1794 = vmatpush1.msra.mxu0 0.0
      %1795 = vmatprep.subr.mxu0 0.0
      %1796 = vmatpush1.msra.mxu0 0.0
      %1797 = vmatprep.subr.mxu0 0.0
      %1798 = vmatpush1.msra.mxu0 0.0
      %1799 = vmatprep.subr.mxu0 0.0
      %1800 = vmatpush1.msra.mxu0 0.0
      %1801 = vmatprep.subr.mxu0 0.0
      %1802 = vmatpush1.msra.mxu0 0.0
      %1803 = vmatprep.subr.mxu0 0.0
      %1804 = vmatpush1.msra.mxu0 0.0
      %1805 = vmatprep.subr.mxu0 0.0
      %1806 = vmatpush1.msra.mxu0 0.0
      %1807 = vmatprep.subr.mxu0 0.0
      %1808 = vmatpush1.msra.mxu0 0.0
      %1809 = vmatprep.mubr.f32.mxu0 0.0
      %1810 = vmatmul.mubr.f32.gmra.mrb[0].mxu0 %v1719
      %v1811 = vpop.f32.mrb[0].mxu0
      %v1812 = vadd.f32 0.0, %v1811
      %v1813 = vpop.f32.mrb[0].mxu0
      %1814 = vmatprep.mubr.f32.mxu0 0.0
      %1815 = vmatmul.mubr.f32.gmra.mrb[0].mxu0 %v1722
      %v1816 = vpop.f32.mrb[0].mxu0
      %v1817 = vadd.f32 0.0, %v1816
      %v1818 = vpop.f32.mrb[0].mxu0
      %1819 = vmatprep.mubr.f32.mxu0 0.0
      %1820 = vmatmul.mubr.f32.gmra.mrb[0].mxu0 %v1725
      %v1821 = vpop.f32.mrb[0].mxu0
      %v1822 = vadd.f32 0.0, %v1821
      %v1823 = vpop.f32.mrb[0].mxu0
      %1824 = vmatprep.mubr.f32.mxu0 0.0
      %1825 = vmatmul.mubr.f32.gmra.mrb[0].mxu0 %v1728
      %v1826 = vpop.f32.mrb[0].mxu0
      %v1827 = vadd.f32 0.0, %v1826
      %v1828 = vpop.f32.mrb[0].mxu0
      %1829 = vmatprep.mubr.f32.mxu0 0.0
      %1830 = vmatmul.mubr.f32.gmra.mrb[0].mxu0 %v1731
      %v1831 = vpop.f32.mrb[0].mxu0
      %v1832 = vadd.f32 0.0, %v1831
      %v1833 = vpop.f32.mrb[0].mxu0
      %1834 = vmatprep.mubr.f32.mxu0 0.0
      %1835 = vmatmul.mubr.f32.gmra.mrb[0].mxu0 %v1734
      %v1836 = vpop.f32.mrb[0].mxu0
      %v1837 = vadd.f32 0.0, %v1836
      %v1838 = vpop.f32.mrb[0].mxu0
      %1839 = vmatprep.mubr.f32.mxu0 0.0
      %1840 = vmatmul.mubr.f32.gmra.mrb[0].mxu0 %v1737
      %v1841 = vpop.f32.mrb[0].mxu0
      %v1842 = vadd.f32 0.0, %v1841
      %v1843 = vpop.f32.mrb[0].mxu0
      %1844 = vmatprep.mubr.f32.mxu0 0.0
      %1845 = vmatmul.mubr.f32.gmra.mrb[0].mxu0 %v1740
      %v1846 = vpop.f32.mrb[0].mxu0
      %v1847 = vadd.f32 0.0, %v1846
      %v1848 = vpop.f32.mrb[0].mxu0
      %1849 = vdwg.mxu0
      %v1850 = vadd.f32 %v1700, %v1812
      %v1851 = vadd.f32 %v1701, %v1817
      %v1852 = vadd.f32 %v1702, %v1822
      %v1853 = vadd.f32 %v1703, %v1827
      %v1854 = vadd.f32 %v1704, %v1832
      %v1855 = vadd.f32 %v1705, %v1837
      %v1856 = vadd.f32 %v1706, %v1842
      %v1857 = vadd.f32 %v1707, %v1847
      %vm1858 = vcmask 64512
      %1859 = vst.msk [vmem:[%s202] sm:$0xff] %vm1858, %v1850
      %1860 = vst.msk [vmem:[%s202 + $0x8] sm:$0xff] %vm1858, %v1851
      %1861 = vst.msk [vmem:[%s202 + $0x10] sm:$0xff] %vm1858, %v1852
      %1862 = vst.msk [vmem:[%s202 + $0x18] sm:$0xff] %vm1858, %v1853
      %1863 = vst.msk [vmem:[%s202 + $0x20] sm:$0xff] %vm1858, %v1854
      %1864 = vst.msk [vmem:[%s202 + $0x28] sm:$0xff] %vm1858, %v1855
      %1865 = vst.msk [vmem:[%s202 + $0x30] sm:$0xff] %vm1858, %v1856
      %1866 = vst.msk [vmem:[%s202 + $0x38] sm:$0xff] %vm1858, %v1857
      %s1867 = smul.u32 8, %s15
      %p1868 = scmp.lt.s32.totalorder %s1867, 15
      %s1869 = scalar_select %p1868, %s1867, 15
      %s1870 = smul.addr %s1869, 8
      %s1871 = scalar_lea.vmem %s4, %s1870
      // Predicated region
      $region37: #{w_residual_forward.2} parent=35 // pred_check
        %p1872 = pneg %p122
      $region38: #{w_residual_forward.2} parent=35 // pred_check_branch
        %1874 = sbr.rel (%p1872) target = $region40
      $region39: #{w_residual_forward.2} parent=35 // pred_region
        %s1875 = smul.u32 8, %s15
      $region40: #{w_residual_forward.2} parent=35 // pred_fallthru
        _
    $region36: #{w_residual_forward.2} parent=5 // pred_fallthru
      _
    %p1876 = scmp.le.s32.totalorder 2, %s10
    // Predicated region
    $region41: #{w_residual_forward.2} parent=5 // pred_check
      %p1877 = pneg %p1876
    $region42: #{w_residual_forward.2} parent=5 // pred_check_branch
      %1879 = sbr.rel (%p1877) target = $region44
    $region43: #{w_residual_forward.2} parent=5 // pred_region
      %s1880 = ssub.s32 %s10, 2
      // Predicated region
      $region45: #{w_residual_forward.2} parent=43 // pred_check
        %p1881 = pneg %p128
      $region46: #{w_residual_forward.2} parent=43 // pred_check_branch
        %1883 = sbr.rel (%p1881) target = $region48
      $region47: #{w_residual_forward.2} parent=43 // pred_region
        %s1884 = smul.u32 8, %s16
        %p1885 = scmp.lt.s32.totalorder %s1884, 15
        %s1886 = scalar_select %p1885, %s1884, 15
        %s1887 = smul.addr %s1886, 8
        %s1888 = scalar_lea.vmem %s4, %s1887
      $region48: #{w_residual_forward.2} parent=43 // pred_fallthru
        _
    $region44: #{w_residual_forward.2} parent=5 // pred_fallthru
      _
  $region6: #{w_residual_forward.2} parent=0 // loop_footer
    %s14 = sadd.s32 1, %s10
  $region7: #{w_residual_forward.2} parent=0 // loop_footer_branch
    %9 = sbr.rel target = $region3
  $region8: #{w_residual_forward.2} parent=0 // loop_exit
    _

</llo_original>
